<compile_context>
chip_gen: v6e
topology: v6e:2x2x1
jax: 0.10.0
libtpu: 0.0.40
codegen_flags: <defaults>
</compile_context>

<pallas_src>
import math
from functools import partial

import jax
import jax.numpy as jnp
from jax.experimental import pallas as pl
from jax.experimental.pallas import tpu as pltpu

_VMEM_LIMIT = 32 * 1024 * 1024          # safe on v5e/v6e (128 MiB) and v7x (64 MiB)
_BLOCK_BUDGET = 2 * 1024 * 1024         # per-block budget (Pallas double-buffers)


# ---------------------------------------------------------------------------
# helpers
# ---------------------------------------------------------------------------
def _fold_bn(w, bias, gamma, beta, running_mean, running_var, eps=1e-5):
    # conv bias + BatchNorm2d (eval mode) folded into per-channel scale & shift:
    #   relu(((x@w + bias) - mean) * gamma/sqrt(var+eps) + beta)
    #   == relu((x@w) * scale + shift)
    # TODO(synk): training-mode batch statistics are not computed here.
    scale = gamma / jnp.sqrt(running_var + eps)
    shift = beta + scale * (bias - running_mean)
    return w, scale, shift


def _swap01(x):
    """Swap the two leading dims of a rank-3 tile (lane dim untouched -> XLU)."""
    if hasattr(pltpu, "einshape"):
        return pltpu.einshape("abc->bac", x)
    return jnp.swapaxes(x, 0, 1)        # fallback for older jax versions


def _pick_vertex_tile(N, T, lane_elems, itemsize, B, min_steps=4):
    """Multiple-of-8 divisor of N (or N itself) whose [n_blk, T, lane_elems] tile
    fits a ~2 MiB budget, preferring >= min_steps total grid steps so both v7x
    TensorCores get pipelined work."""
    if N % 8 != 0:
        return N                        # full-dim block satisfies the (8,128) rule
    cands = [nb for nb in range(8, N + 1, 8) if N % nb == 0]
    fits = [nb for nb in cands if nb * T * lane_elems * itemsize <= _BLOCK_BUDGET]
    if not fits:
        fits = [8]
    good = [nb for nb in fits if B * (N // nb) >= min_steps]
    return max(good) if good else max(fits)


# ---------------------------------------------------------------------------
# Kernel 1: fused q/k/v projection (two-input matmul) + folded BN + ReLU.
# Reads native time-major [T, nb, C] tiles, writes vertex-major [nb, T, 3D].
# ---------------------------------------------------------------------------
def _qkv_kernel(x_ref, ste_ref, wx_ref, ws_ref, sc_ref, sh_ref, o_ref):
    x = x_ref[0]                                       # [T, nb, D]
    ste = ste_ref[0]                                   # [T, nb, Ds]
    T, nb, Dx = x.shape
    y = jnp.dot(x.reshape(T * nb, Dx), wx_ref[...],
                preferred_element_type=jnp.float32)
    y = y + jnp.dot(ste.reshape(T * nb, ste.shape[-1]), ws_ref[...],
                    preferred_element_type=jnp.float32)
    y = jnp.maximum(y * sc_ref[...] + sh_ref[...], 0.0)     # folded BN + ReLU
    # T<->N swap on the tile so the qkv intermediate is stored vertex-major.
    o_ref[0] = _swap01(y.reshape(T, nb, -1)).astype(o_ref.dtype)


# ---------------------------------------------------------------------------
# Kernel 2: multi-head temporal attention + fused output projection epilogue.
# One (batch, vertex-tile) block per grid step; stores directly in [B,T,N,D].
# ---------------------------------------------------------------------------
def _attn_kernel(qkv_ref, mask_ref, wo_ref, so_ref, ho_ref, o_ref, *, K, d):
    D = K * d
    x = qkv_ref[0]                                     # [nb, T, 3D] (bf16 or f32)
    nb, T, _ = x.shape
    mask = mask_ref[...][None]                         # [1, T, T], 0/1

    acc = jnp.zeros((nb * T, D), jnp.float32)
    for h in range(K):                                 # static unroll over heads
        q = x[:, :, 0 * D + h * d: 0 * D + (h + 1) * d]    # pre-scaled by 1/sqrt(d)
        k = x[:, :, 1 * D + h * d: 1 * D + (h + 1) * d]
        v = x[:, :, 2 * D + h * d: 2 * D + (h + 1) * d]

        s = jnp.einsum('ntd,nsd->nts', q, k,
                       preferred_element_type=jnp.float32)  # [nb, T, T], f32
        # causal "mask": masked scores become 0.0 (PyTorch `-1 ** 15 + 1` == 0,
        # reproduced exactly — NOT -inf).
        s = s * mask

        m = jnp.max(s, axis=-1, keepdims=True)
        e = jnp.exp(s - m)
        p = e * pl.reciprocal(jnp.sum(e, axis=-1, keepdims=True), approx=True)

        o_h = jnp.einsum('nts,nsd->ntd', p.astype(x.dtype), v,
                         preferred_element_type=jnp.float32)  # [nb, T, d]
        # fused output projection: this head only touches rows h*d:(h+1)*d of
        # W_out, so accumulate directly — no K-way lane concatenate.
        acc = acc + jnp.dot(o_h.reshape(nb * T, d),
                            wo_ref[h * d:(h + 1) * d, :],
                            preferred_element_type=jnp.float32)

    y = jnp.maximum(acc * so_ref[...] + ho_ref[...], 0.0)    # folded BN + ReLU
    # store directly in the module's [B, T, N, D] layout (N<->T swap on the tile)
    o_ref[0] = _swap01(y.reshape(nb, T, D)).astype(o_ref.dtype)


# ---------------------------------------------------------------------------
# Full temporalAttention forward  (if_STE=True, mask=True)
# ---------------------------------------------------------------------------
def temporal_attention(X, STE, params, K, d, qkv_dtype=jnp.bfloat16):
    """X: [B,T,N,D], STE: [B,T,N,D+m]  ->  [B,T,N,D]"""
    B, T, N, Dx = X.shape
    D = K * d
    assert Dx == D, (Dx, D)
    Ds = STE.shape[-1]
    Cin = D + Ds

    # --- fold BN (eval mode) into scale/shift; build fused qkv weight -----------
    wq, sq, hq = _fold_bn(*params['q'])
    wk, sk, hk = _fold_bn(*params['k'])
    wv, sv, hv = _fold_bn(*params['v'])

    c = 1.0 / math.sqrt(d)               # 1/sqrt(d) folded into q (relu(cz)=c*relu(z))
    sq, hq = sq * c, hq * c

    w_qkv = jnp.concatenate([wq, wk, wv], axis=1)              # [Cin, 3D]
    w_x, w_ste = w_qkv[:D], w_qkv[D:]                          # row split X / STE
    s_qkv = jnp.concatenate([sq, sk, sv]).reshape(1, 3 * D)
    h_qkv = jnp.concatenate([hq, hk, hv]).reshape(1, 3 * D)

    wo, so, ho = _fold_bn(*params['out'])
    so, ho = so.reshape(1, D), ho.reshape(1, D)

    # --- block sizing ------------------------------------------------------------
    n_blk = _pick_vertex_tile(N, T, 3 * D, 4, B)
    grid = (B, N // n_blk)
    qkv_bytes = jnp.dtype(qkv_dtype).itemsize

    # --- kernel 1: fused q/k/v projection, vertex-major qkv intermediate ---------
    qkv_cost = pl.CostEstimate(
        flops=2 * B * T * N * Cin * 3 * D,
        transcendentals=0,
        bytes_accessed=4 * B * T * N * Cin + 4 * Cin * 3 * D
                       + qkv_bytes * B * T * N * 3 * D)

    qkv = pl.pallas_call(
        _qkv_kernel,
        out_shape=jax.ShapeDtypeStruct((B, N, T, 3 * D), qkv_dtype),
        grid=grid,
        in_specs=[
            pl.BlockSpec((1, T, n_blk, D), lambda b, j: (b, 0, j, 0)),
            pl.BlockSpec((1, T, n_blk, Ds), lambda b, j: (b, 0, j, 0)),
            pl.BlockSpec((D, 3 * D), lambda b, j: (0, 0)),       # resident weights
            pl.BlockSpec((Ds, 3 * D), lambda b, j: (0, 0)),
            pl.BlockSpec((1, 3 * D), lambda b, j: (0, 0)),       # resident scale
            pl.BlockSpec((1, 3 * D), lambda b, j: (0, 0)),       # resident shift
        ],
        out_specs=pl.BlockSpec((1, n_blk, T, 3 * D), lambda b, j: (b, j, 0, 0)),
        compiler_params=pltpu.CompilerParams(
            dimension_semantics=("parallel", "parallel"),
            vmem_limit_bytes=_VMEM_LIMIT),
        cost_estimate=qkv_cost,
    )(X, STE, w_x, w_ste, s_qkv, h_qkv)

    # --- kernel 2: attention + fused output projection ---------------------------
    mask = jnp.tril(jnp.ones((T, T), jnp.float32))    # grid-invariant 0/1 causal mask

    attn_cost = pl.CostEstimate(
        flops=4 * B * N * K * T * T * d + 2 * B * N * T * D * D,
        transcendentals=B * N * K * T * T,
        bytes_accessed=qkv_bytes * B * N * T * 3 * D + 4 * B * T * N * D
                       + 4 * D * D + 4 * T * T)

    out = pl.pallas_call(
        partial(_attn_kernel, K=K, d=d),
        out_shape=jax.ShapeDtypeStruct((B, T, N, D), jnp.float32),
        grid=grid,
        in_specs=[
            pl.BlockSpec((1, n_blk, T, 3 * D), lambda b, j: (b, j, 0, 0)),
            pl.BlockSpec((T, T), lambda b, j: (0, 0)),           # resident mask
            pl.BlockSpec((D, D), lambda b, j: (0, 0)),           # resident W_out
            pl.BlockSpec((1, D), lambda b, j: (0, 0)),           # resident scale
            pl.BlockSpec((1, D), lambda b, j: (0, 0)),           # resident shift
        ],
        out_specs=pl.BlockSpec((1, T, n_blk, D), lambda b, j: (b, 0, j, 0)),
        compiler_params=pltpu.CompilerParams(
            dimension_semantics=("parallel", "parallel"),
            vmem_limit_bytes=_VMEM_LIMIT),
        cost_estimate=attn_cost,
    )(qkv, mask, wo, so, ho)

    return out


# ---------------------------------------------------------------------------
# Deterministic parameter setup, pure-jnp reference, demo
# ---------------------------------------------------------------------------
def make_fc_params(key, cin, cout):
    # xavier_uniform_ on a [cout, cin, 1, 1] conv weight: bound = sqrt(6/(cin+cout))
    bound = math.sqrt(6.0 / (cin + cout))
    w = jax.random.uniform(key, (cin, cout), jnp.float32, -bound, bound)
    bias = jnp.zeros((cout,), jnp.float32)
    gamma = jnp.ones((cout,), jnp.float32)
    beta = jnp.zeros((cout,), jnp.float32)
    running_mean = jnp.zeros((cout,), jnp.float32)
    running_var = jnp.ones((cout,), jnp.float32)
    return (w, bias, gamma, beta, running_mean, running_var)


def _reference(X, STE, params, K, d, eps=1e-5):
    """Pure-jnp forward matching the PyTorch module (eval-mode BN)."""
    B, T, N, _ = X.shape
    D = K * d
    Xc = jnp.concatenate([X, STE], axis=-1)

    def fc(x, p):
        w, bias, gamma, beta, mean, var = p
        y = jnp.einsum('btnc,cf->btnf', x, w) + bias
        y = (y - mean) / jnp.sqrt(var + eps) * gamma + beta
        return jnp.maximum(y, 0.0)

    q, k, v = fc(Xc, params['q']), fc(Xc, params['k']), fc(Xc, params['v'])

    def split(t):   # [B,T,N,D] -> [K*B, N, T, d]
        t = t.reshape(B, T, N, K, d)
        return jnp.transpose(t, (3, 0, 2, 1, 4)).reshape(K * B, N, T, d)

    qh, kh, vh = split(q), split(k), split(v)
    s = jnp.einsum('hntd,hnsd->hnts', qh, kh) / math.sqrt(d)
    mask = jnp.tril(jnp.ones((T, T), bool))
    s = jnp.where(mask[None, None], s, 0.0)          # `-1 ** 15 + 1` == 0
    p = jax.nn.softmax(s, axis=-1)
    o = jnp.einsum('hnts,hnsd->hntd', p, vh)         # [K*B, N, T, d]
    o = o.reshape(K, B, N, T, d)
    o = jnp.transpose(o, (1, 3, 2, 0, 4)).reshape(B, T, N, D)
    return fc(o, params['out'])


if __name__ == "__main__":
    key = jax.random.PRNGKey(0)
    B, T, N = 2, 8, 16           # batch, num_step, num_vertex
    K_heads, d, m = 2, 8, 4      # heads, per-head dim, extra feature dim
    D = K_heads * d              # 16

    k0, k1, k2, k3, k4, k5 = jax.random.split(key, 6)
    X = jax.random.normal(k0, (B, T, N, D), jnp.float32)
    STE = jax.random.normal(k1, (B, T, N, D + m), jnp.float32)

    params = {
        'q':   make_fc_params(k2, 2 * D + m, D),
        'k':   make_fc_params(k3, 2 * D + m, D),
        'v':   make_fc_params(k4, 2 * D + m, D),
        'out': make_fc_params(k5, D, D),
    }

    ref = _reference(X, STE, params, K_heads, d)

    # strict check with an f32 qkv intermediate (validates kernel logic)
    fwd_f32 = jax.jit(partial(temporal_attention, qkv_dtype=jnp.float32),
                      static_argnums=(3, 4))
    out_f32 = jax.block_until_ready(fwd_f32(X, STE, params, K_heads, d))
    assert out_f32.shape == (B, T, N, D), out_f32.shape
    err32 = float(jnp.max(jnp.abs(out_f32 - ref)))
    assert err32 < 2e-2, f"f32 max abs err vs reference: {err32}"

    # default path (bf16 qkv intermediate — half the HBM bytes); looser tolerance
    # accounts for the intentional bf16 storage rounding of the intermediate.
    fwd = jax.jit(temporal_attention, static_argnums=(3, 4))
    out = jax.block_until_ready(fwd(X, STE, params, K_heads, d))
    assert out.shape == (B, T, N, D), out.shape
    assert bool(jnp.all(jnp.isfinite(out)))
    err16 = float(jnp.max(jnp.abs(out - ref)))
    assert err16 < 1.5e-1, f"bf16 max abs err vs reference: {err16}"

    print("KERNEL_OK")
</pallas_src>

<mosaic_0001>
module attributes {stable_mosaic.version = 11 : i64} {
  func.func @_attn_kernel(%arg0: i32, %arg1: i32, %arg2: memref<1x8x8x48xf32, #tpu.memory_space<vmem>>, %arg3: memref<8x8xf32, #tpu.memory_space<vmem>>, %arg4: memref<16x16xf32, #tpu.memory_space<vmem>>, %arg5: memref<1x16xf32, #tpu.memory_space<vmem>>, %arg6: memref<1x16xf32, #tpu.memory_space<vmem>>, %arg7: memref<1x8x8x16xf32, #tpu.memory_space<vmem>>) attributes {dimension_semantics = [#tpu.dimension_semantics<parallel>, #tpu.dimension_semantics<parallel>], iteration_bounds = array<i64: 2, 2>, scalar_prefetch = 0 : i64, scratch_operands = 0 : i64, tpu.core_type = #tpu.core_type<tc>, window_params = [{transform_indices = @transform_0, window_bounds = array<i64: 1, 8, 8, 48>}, {pipeline_mode = #tpu.pipeline_mode<synchronous>, transform_indices = @transform_1, window_bounds = array<i64: 8, 8>}, {pipeline_mode = #tpu.pipeline_mode<synchronous>, transform_indices = @transform_2, window_bounds = array<i64: 16, 16>}, {pipeline_mode = #tpu.pipeline_mode<synchronous>, transform_indices = @transform_3, window_bounds = array<i64: 1, 16>}, {pipeline_mode = #tpu.pipeline_mode<synchronous>, transform_indices = @transform_4, window_bounds = array<i64: 1, 16>}, {transform_indices = @transform_5, window_bounds = array<i64: 1, 8, 8, 16>}]} {
    %c0 = arith.constant 0 : index
    %c0_0 = arith.constant 0 : index
    %c0_1 = arith.constant 0 : index
    %c0_2 = arith.constant 0 : index
    %0 = vector.load %arg2[%c0, %c0_0, %c0_1, %c0_2] : memref<1x8x8x48xf32, #tpu.memory_space<vmem>>, vector<1x8x8x48xf32>
    %1 = vector.shape_cast %0 : vector<1x8x8x48xf32> to vector<8x8x48xf32>
    %c0_3 = arith.constant 0 : index
    %c0_4 = arith.constant 0 : index
    %2 = vector.load %arg3[%c0_3, %c0_4] : memref<8x8xf32, #tpu.memory_space<vmem>>, vector<8x8xf32>
    %3 = vector.shape_cast %2 : vector<8x8xf32> to vector<1x8x8xf32>
    %cst = arith.constant 0.000000e+00 : f32
    %4 = vector.broadcast %cst : f32 to vector<64x16xf32>
    %5 = vector.extract_strided_slice %1 {offsets = [0, 0, 0], sizes = [8, 8, 8], strides = [1, 1, 1]} : vector<8x8x48xf32> to vector<8x8x8xf32>
    %6 = vector.extract_strided_slice %1 {offsets = [0, 0, 16], sizes = [8, 8, 8], strides = [1, 1, 1]} : vector<8x8x48xf32> to vector<8x8x8xf32>
    %7 = vector.extract_strided_slice %1 {offsets = [0, 0, 32], sizes = [8, 8, 8], strides = [1, 1, 1]} : vector<8x8x48xf32> to vector<8x8x8xf32>
    "tpu.trace_start"() <{level = 10 : i32, message = "ntd,nsd->nts"}> : () -> ()
    %cst_5 = arith.constant dense<0.000000e+00> : vector<8x8x8xf32>
    %8 = tpu.matmul %5, %6, %cst_5 {dimension_numbers = #tpu.dot_dimension_numbers<[2], [2], [1], [1], [0, 0, 0, 1, 1, 1], [0], [0]>} : vector<8x8x8xf32>, vector<8x8x8xf32>, vector<8x8x8xf32> -> vector<8x8x8xf32>
    "tpu.trace_stop"() : () -> ()
    %9 = vector.broadcast %3 : vector<1x8x8xf32> to vector<8x8x8xf32>
    %10 = arith.mulf %8, %9 : vector<8x8x8xf32>
    %cst_6 = arith.constant dense<0xFF800000> : vector<8x8xf32>
    %11 = vector.multi_reduction <maximumf>, %10, %cst_6 [2] : vector<8x8x8xf32> to vector<8x8xf32>
    %12 = vector.shape_cast %11 : vector<8x8xf32> to vector<8x8x1xf32>
    %13 = vector.broadcast %12 : vector<8x8x1xf32> to vector<8x8x8xf32>
    %14 = arith.subf %10, %13 : vector<8x8x8xf32>
    %15 = math.exp %14 : vector<8x8x8xf32>
    %cst_7 = arith.constant dense<0.000000e+00> : vector<8x8xf32>
    %16 = vector.multi_reduction <add>, %15, %cst_7 [2] : vector<8x8x8xf32> to vector<8x8xf32>
    %17 = vector.shape_cast %16 : vector<8x8xf32> to vector<8x8x1xf32>
    %18 = tpu.reciprocal %17 {approx = true} : vector<8x8x1xf32> -> vector<8x8x1xf32>
    %19 = vector.broadcast %18 : vector<8x8x1xf32> to vector<8x8x8xf32>
    %20 = arith.mulf %15, %19 : vector<8x8x8xf32>
    "tpu.trace_start"() <{level = 10 : i32, message = "nts,nsd->ntd"}> : () -> ()
    %cst_8 = arith.constant dense<0.000000e+00> : vector<8x8x8xf32>
    %21 = tpu.matmul %20, %7, %cst_8 {dimension_numbers = #tpu.dot_dimension_numbers<[2], [1], [1], [2], [0, 0, 0, 1, 1, 2], [0], [0]>} : vector<8x8x8xf32>, vector<8x8x8xf32>, vector<8x8x8xf32> -> vector<8x8x8xf32>
    "tpu.trace_stop"() : () -> ()
    %22 = vector.shape_cast %21 : vector<8x8x8xf32> to vector<64x8xf32>
    %c0_9 = arith.constant 0 : index
    %c0_10 = arith.constant 0 : index
    %23 = vector.load %arg4[%c0_9, %c0_10] : memref<16x16xf32, #tpu.memory_space<vmem>>, vector<8x16xf32>
    %cst_11 = arith.constant dense<0.000000e+00> : vector<64x16xf32>
    %24 = tpu.matmul %22, %23, %cst_11 {dimension_numbers = #tpu.dot_dimension_numbers<[1], [0], [0], [1], [0, 0, 1, 1], [], []>} : vector<64x8xf32>, vector<8x16xf32>, vector<64x16xf32> -> vector<64x16xf32>
    %25 = arith.addf %4, %24 : vector<64x16xf32>
    %26 = vector.extract_strided_slice %1 {offsets = [0, 0, 8], sizes = [8, 8, 8], strides = [1, 1, 1]} : vector<8x8x48xf32> to vector<8x8x8xf32>
    %27 = vector.extract_strided_slice %1 {offsets = [0, 0, 24], sizes = [8, 8, 8], strides = [1, 1, 1]} : vector<8x8x48xf32> to vector<8x8x8xf32>
    %28 = vector.extract_strided_slice %1 {offsets = [0, 0, 40], sizes = [8, 8, 8], strides = [1, 1, 1]} : vector<8x8x48xf32> to vector<8x8x8xf32>
    "tpu.trace_start"() <{level = 10 : i32, message = "ntd,nsd->nts"}> : () -> ()
    %cst_12 = arith.constant dense<0.000000e+00> : vector<8x8x8xf32>
    %29 = tpu.matmul %26, %27, %cst_12 {dimension_numbers = #tpu.dot_dimension_numbers<[2], [2], [1], [1], [0, 0, 0, 1, 1, 1], [0], [0]>} : vector<8x8x8xf32>, vector<8x8x8xf32>, vector<8x8x8xf32> -> vector<8x8x8xf32>
    "tpu.trace_stop"() : () -> ()
    %30 = vector.broadcast %3 : vector<1x8x8xf32> to vector<8x8x8xf32>
    %31 = arith.mulf %29, %30 : vector<8x8x8xf32>
    %cst_13 = arith.constant dense<0xFF800000> : vector<8x8xf32>
    %32 = vector.multi_reduction <maximumf>, %31, %cst_13 [2] : vector<8x8x8xf32> to vector<8x8xf32>
    %33 = vector.shape_cast %32 : vector<8x8xf32> to vector<8x8x1xf32>
    %34 = vector.broadcast %33 : vector<8x8x1xf32> to vector<8x8x8xf32>
    %35 = arith.subf %31, %34 : vector<8x8x8xf32>
    %36 = math.exp %35 : vector<8x8x8xf32>
    %cst_14 = arith.constant dense<0.000000e+00> : vector<8x8xf32>
    %37 = vector.multi_reduction <add>, %36, %cst_14 [2] : vector<8x8x8xf32> to vector<8x8xf32>
    %38 = vector.shape_cast %37 : vector<8x8xf32> to vector<8x8x1xf32>
    %39 = tpu.reciprocal %38 {approx = true} : vector<8x8x1xf32> -> vector<8x8x1xf32>
    %40 = vector.broadcast %39 : vector<8x8x1xf32> to vector<8x8x8xf32>
    %41 = arith.mulf %36, %40 : vector<8x8x8xf32>
    "tpu.trace_start"() <{level = 10 : i32, message = "nts,nsd->ntd"}> : () -> ()
    %cst_15 = arith.constant dense<0.000000e+00> : vector<8x8x8xf32>
    %42 = tpu.matmul %41, %28, %cst_15 {dimension_numbers = #tpu.dot_dimension_numbers<[2], [1], [1], [2], [0, 0, 0, 1, 1, 2], [0], [0]>} : vector<8x8x8xf32>, vector<8x8x8xf32>, vector<8x8x8xf32> -> vector<8x8x8xf32>
    "tpu.trace_stop"() : () -> ()
    %43 = vector.shape_cast %42 : vector<8x8x8xf32> to vector<64x8xf32>
    %c8 = arith.constant 8 : index
    %c0_16 = arith.constant 0 : index
    %44 = vector.load %arg4[%c8, %c0_16] : memref<16x16xf32, #tpu.memory_space<vmem>>, vector<8x16xf32>
    %cst_17 = arith.constant dense<0.000000e+00> : vector<64x16xf32>
    %45 = tpu.matmul %43, %44, %cst_17 {dimension_numbers = #tpu.dot_dimension_numbers<[1], [0], [0], [1], [0, 0, 1, 1], [], []>} : vector<64x8xf32>, vector<8x16xf32>, vector<64x16xf32> -> vector<64x16xf32>
    %46 = arith.addf %25, %45 : vector<64x16xf32>
    %c0_18 = arith.constant 0 : index
    %c0_19 = arith.constant 0 : index
    %47 = vector.load %arg5[%c0_18, %c0_19] : memref<1x16xf32, #tpu.memory_space<vmem>>, vector<1x16xf32>
    %48 = vector.broadcast %47 : vector<1x16xf32> to vector<64x16xf32>
    %49 = arith.mulf %46, %48 : vector<64x16xf32>
    %c0_20 = arith.constant 0 : index
    %c0_21 = arith.constant 0 : index
    %50 = vector.load %arg6[%c0_20, %c0_21] : memref<1x16xf32, #tpu.memory_space<vmem>>, vector<1x16xf32>
    %51 = vector.broadcast %50 : vector<1x16xf32> to vector<64x16xf32>
    %52 = arith.addf %49, %51 : vector<64x16xf32>
    %cst_22 = arith.constant 0.000000e+00 : f32
    %53 = vector.broadcast %cst_22 : f32 to vector<64x16xf32>
    %54 = arith.maximumf %52, %53 : vector<64x16xf32>
    %55 = vector.shape_cast %54 : vector<64x16xf32> to vector<8x8x16xf32>
    %56 = tpu.transpose %55, [1, 0, 2] : vector<8x8x16xf32> -> vector<8x8x16xf32>
    %c0_23 = arith.constant 0 : index
    %c0_24 = arith.constant 0 : index
    %c0_25 = arith.constant 0 : index
    %c0_26 = arith.constant 0 : index
    %57 = vector.load %arg7[%c0_23, %c0_24, %c0_25, %c0_26] : memref<1x8x8x16xf32, #tpu.memory_space<vmem>>, vector<1x8x8x16xf32>
    %58 = vector.shape_cast %57 : vector<1x8x8x16xf32> to vector<8x8x16xf32>
    %59 = vector.shape_cast %56 : vector<8x8x16xf32> to vector<1x8x8x16xf32>
    tpu.vector_store %arg7[%c0_23, %c0_24, %c0_25, %c0_26], %59 {strides = array<i32>} : memref<1x8x8x16xf32, #tpu.memory_space<vmem>>, vector<1x8x8x16xf32>,
    return
  }
  func.func @transform_0(%arg0: i32, %arg1: i32) -> (i32, i32, i32, i32) {
    %c0_i32 = arith.constant 0 : i32
    %c0_i32_0 = arith.constant 0 : i32
    %c0_i32_1 = arith.constant 0 : i32
    return %arg0, %arg1, %c0_i32, %c0_i32_0 : i32, i32, i32, i32
  }
  func.func @transform_1(%arg0: i32, %arg1: i32) -> (i32, i32) {
    %c0_i32 = arith.constant 0 : i32
    %c0_i32_0 = arith.constant 0 : i32
    %c0_i32_1 = arith.constant 0 : i32
    return %c0_i32, %c0_i32_0 : i32, i32
  }
  func.func @transform_2(%arg0: i32, %arg1: i32) -> (i32, i32) {
    %c0_i32 = arith.constant 0 : i32
    %c0_i32_0 = arith.constant 0 : i32
    %c0_i32_1 = arith.constant 0 : i32
    return %c0_i32, %c0_i32_0 : i32, i32
  }
  func.func @transform_3(%arg0: i32, %arg1: i32) -> (i32, i32) {
    %c0_i32 = arith.constant 0 : i32
    %c0_i32_0 = arith.constant 0 : i32
    %c0_i32_1 = arith.constant 0 : i32
    return %c0_i32, %c0_i32_0 : i32, i32
  }
  func.func @transform_4(%arg0: i32, %arg1: i32) -> (i32, i32) {
    %c0_i32 = arith.constant 0 : i32
    %c0_i32_0 = arith.constant 0 : i32
    %c0_i32_1 = arith.constant 0 : i32
    return %c0_i32, %c0_i32_0 : i32, i32
  }
  func.func @transform_5(%arg0: i32, %arg1: i32) -> (i32, i32, i32, i32) {
    %c0_i32 = arith.constant 0 : i32
    %c0_i32_0 = arith.constant 0 : i32
    %c0_i32_1 = arith.constant 0 : i32
    return %arg0, %c0_i32, %arg1, %c0_i32_0 : i32, i32, i32, i32
  }
}

module attributes {stable_mosaic.version = 11 : i64} {
  func.func @_qkv_kernel(%arg0: i32, %arg1: i32, %arg2: memref<1x8x8x16xf32, #tpu.memory_space<vmem>>, %arg3: memref<1x8x8x20xf32, #tpu.memory_space<vmem>>, %arg4: memref<16x48xf32, #tpu.memory_space<vmem>>, %arg5: memref<20x48xf32, #tpu.memory_space<vmem>>, %arg6: memref<1x48xf32, #tpu.memory_space<vmem>>, %arg7: memref<1x48xf32, #tpu.memory_space<vmem>>, %arg8: memref<1x8x8x48xf32, #tpu.memory_space<vmem>>) attributes {dimension_semantics = [#tpu.dimension_semantics<parallel>, #tpu.dimension_semantics<parallel>], iteration_bounds = array<i64: 2, 2>, scalar_prefetch = 0 : i64, scratch_operands = 0 : i64, tpu.core_type = #tpu.core_type<tc>, window_params = [{transform_indices = @transform_0, window_bounds = array<i64: 1, 8, 8, 16>}, {transform_indices = @transform_1, window_bounds = array<i64: 1, 8, 8, 20>}, {pipeline_mode = #tpu.pipeline_mode<synchronous>, transform_indices = @transform_2, window_bounds = array<i64: 16, 48>}, {pipeline_mode = #tpu.pipeline_mode<synchronous>, transform_indices = @transform_3, window_bounds = array<i64: 20, 48>}, {pipeline_mode = #tpu.pipeline_mode<synchronous>, transform_indices = @transform_4, window_bounds = array<i64: 1, 48>}, {pipeline_mode = #tpu.pipeline_mode<synchronous>, transform_indices = @transform_5, window_bounds = array<i64: 1, 48>}, {transform_indices = @transform_6, window_bounds = array<i64: 1, 8, 8, 48>}]} {
    %c0 = arith.constant 0 : index
    %c0_0 = arith.constant 0 : index
    %c0_1 = arith.constant 0 : index
    %c0_2 = arith.constant 0 : index
    %0 = vector.load %arg2[%c0, %c0_0, %c0_1, %c0_2] : memref<1x8x8x16xf32, #tpu.memory_space<vmem>>, vector<1x8x8x16xf32>
    %1 = vector.shape_cast %0 : vector<1x8x8x16xf32> to vector<8x8x16xf32>
    %c0_3 = arith.constant 0 : index
    %c0_4 = arith.constant 0 : index
    %c0_5 = arith.constant 0 : index
    %c0_6 = arith.constant 0 : index
    %2 = vector.load %arg3[%c0_3, %c0_4, %c0_5, %c0_6] : memref<1x8x8x20xf32, #tpu.memory_space<vmem>>, vector<1x8x8x20xf32>
    %3 = vector.shape_cast %2 : vector<1x8x8x20xf32> to vector<8x8x20xf32>
    %4 = vector.shape_cast %1 : vector<8x8x16xf32> to vector<64x16xf32>
    %c0_7 = arith.constant 0 : index
    %c0_8 = arith.constant 0 : index
    %5 = vector.load %arg4[%c0_7, %c0_8] : memref<16x48xf32, #tpu.memory_space<vmem>>, vector<16x48xf32>
    %cst = arith.constant dense<0.000000e+00> : vector<64x48xf32>
    %6 = tpu.matmul %4, %5, %cst {dimension_numbers = #tpu.dot_dimension_numbers<[1], [0], [0], [1], [0, 0, 1, 1], [], []>} : vector<64x16xf32>, vector<16x48xf32>, vector<64x48xf32> -> vector<64x48xf32>
    %7 = vector.shape_cast %3 : vector<8x8x20xf32> to vector<64x20xf32>
    %c0_9 = arith.constant 0 : index
    %c0_10 = arith.constant 0 : index
    %8 = vector.load %arg5[%c0_9, %c0_10] : memref<20x48xf32, #tpu.memory_space<vmem>>, vector<20x48xf32>
    %cst_11 = arith.constant dense<0.000000e+00> : vector<64x48xf32>
    %9 = tpu.matmul %7, %8, %cst_11 {dimension_numbers = #tpu.dot_dimension_numbers<[1], [0], [0], [1], [0, 0, 1, 1], [], []>} : vector<64x20xf32>, vector<20x48xf32>, vector<64x48xf32> -> vector<64x48xf32>
    %10 = arith.addf %6, %9 : vector<64x48xf32>
    %c0_12 = arith.constant 0 : index
    %c0_13 = arith.constant 0 : index
    %11 = vector.load %arg6[%c0_12, %c0_13] : memref<1x48xf32, #tpu.memory_space<vmem>>, vector<1x48xf32>
    %12 = vector.broadcast %11 : vector<1x48xf32> to vector<64x48xf32>
    %13 = arith.mulf %10, %12 : vector<64x48xf32>
    %c0_14 = arith.constant 0 : index
    %c0_15 = arith.constant 0 : index
    %14 = vector.load %arg7[%c0_14, %c0_15] : memref<1x48xf32, #tpu.memory_space<vmem>>, vector<1x48xf32>
    %15 = vector.broadcast %14 : vector<1x48xf32> to vector<64x48xf32>
    %16 = arith.addf %13, %15 : vector<64x48xf32>
    %cst_16 = arith.constant 0.000000e+00 : f32
    %17 = vector.broadcast %cst_16 : f32 to vector<64x48xf32>
    %18 = arith.maximumf %16, %17 : vector<64x48xf32>
    %19 = vector.shape_cast %18 : vector<64x48xf32> to vector<8x8x48xf32>
    %20 = tpu.transpose %19, [1, 0, 2] : vector<8x8x48xf32> -> vector<8x8x48xf32>
    %c0_17 = arith.constant 0 : index
    %c0_18 = arith.constant 0 : index
    %c0_19 = arith.constant 0 : index
    %c0_20 = arith.constant 0 : index
    %21 = vector.load %arg8[%c0_17, %c0_18, %c0_19, %c0_20] : memref<1x8x8x48xf32, #tpu.memory_space<vmem>>, vector<1x8x8x48xf32>
    %22 = vector.shape_cast %21 : vector<1x8x8x48xf32> to vector<8x8x48xf32>
    %23 = vector.shape_cast %20 : vector<8x8x48xf32> to vector<1x8x8x48xf32>
    tpu.vector_store %arg8[%c0_17, %c0_18, %c0_19, %c0_20], %23 {strides = array<i32>} : memref<1x8x8x48xf32, #tpu.memory_space<vmem>>, vector<1x8x8x48xf32>,
    return
  }
  func.func @transform_0(%arg0: i32, %arg1: i32) -> (i32, i32, i32, i32) {
    %c0_i32 = arith.constant 0 : i32
    %c0_i32_0 = arith.constant 0 : i32
    %c0_i32_1 = arith.constant 0 : i32
    return %arg0, %c0_i32, %arg1, %c0_i32_0 : i32, i32, i32, i32
  }
  func.func @transform_1(%arg0: i32, %arg1: i32) -> (i32, i32, i32, i32) {
    %c0_i32 = arith.constant 0 : i32
    %c0_i32_0 = arith.constant 0 : i32
    %c0_i32_1 = arith.constant 0 : i32
    return %arg0, %c0_i32, %arg1, %c0_i32_0 : i32, i32, i32, i32
  }
  func.func @transform_2(%arg0: i32, %arg1: i32) -> (i32, i32) {
    %c0_i32 = arith.constant 0 : i32
    %c0_i32_0 = arith.constant 0 : i32
    %c0_i32_1 = arith.constant 0 : i32
    return %c0_i32, %c0_i32_0 : i32, i32
  }
  func.func @transform_3(%arg0: i32, %arg1: i32) -> (i32, i32) {
    %c0_i32 = arith.constant 0 : i32
    %c0_i32_0 = arith.constant 0 : i32
    %c0_i32_1 = arith.constant 0 : i32
    return %c0_i32, %c0_i32_0 : i32, i32
  }
  func.func @transform_4(%arg0: i32, %arg1: i32) -> (i32, i32) {
    %c0_i32 = arith.constant 0 : i32
    %c0_i32_0 = arith.constant 0 : i32
    %c0_i32_1 = arith.constant 0 : i32
    return %c0_i32, %c0_i32_0 : i32, i32
  }
  func.func @transform_5(%arg0: i32, %arg1: i32) -> (i32, i32) {
    %c0_i32 = arith.constant 0 : i32
    %c0_i32_0 = arith.constant 0 : i32
    %c0_i32_1 = arith.constant 0 : i32
    return %c0_i32, %c0_i32_0 : i32, i32
  }
  func.func @transform_6(%arg0: i32, %arg1: i32) -> (i32, i32, i32, i32) {
    %c0_i32 = arith.constant 0 : i32
    %c0_i32_0 = arith.constant 0 : i32
    %c0_i32_1 = arith.constant 0 : i32
    return %arg0, %arg1, %c0_i32, %c0_i32_0 : i32, i32, i32, i32
  }
}

</mosaic_0001>

<llo_original>
// kernel: temporal_attention.2
$region0: #{temporal_attention.2}
  #allocation0 [shape = 'u32[]', space=smem, size = 0x4, offset = 0x4, fixed_abs, tag = 'smem constant byte address 0x4 - core index']
  #allocation1 [shape = 'u32[144,128]{1,0:T(1,128)}', space=vmem, size = 0x12000, scoped, tag = 'internal scratch']
  %s0 = inlined_call_operand.vmem [shape: f32[2,8,16,16], index: 0, kind: input, shape index: {}]
  %s1 = inlined_call_operand.vmem [shape: f32[2,8,16,20], index: 1, kind: input, shape index: {}]
  %s2 = inlined_call_operand.vmem [shape: f32[16,48], index: 2, kind: input, shape index: {}]
  %s3 = inlined_call_operand.vmem [shape: f32[20,48], index: 3, kind: input, shape index: {}]
  %s4 = inlined_call_operand.vmem [shape: f32[1,48], index: 4, kind: input, shape index: {}]
  %s5 = inlined_call_operand.vmem [shape: f32[1,48], index: 5, kind: input, shape index: {}]
  %s6 = inlined_call_operand.vmem [shape: f32[2,16,8,48], index: 6, kind: output, shape index: {}]
  %s7 = sld [smem:[#allocation0]]
  $region133: #{temporal_attention.2} parent=0
    _
  %s9 = ssub.s32 1, %s7
  %s10 = scalar_select 0, %s9, %s7
  $region1: #{temporal_attention.2} parent=0
    #allocation2 [shape = 'u8[65536]{0}', space=vmem, size = 0x10000, scoped, tag = 'input window, operand 0']
    #allocation3 [shape = 'u8[65536]{0}', space=vmem, size = 0x10000, scoped, tag = 'input window, operand 1']
    loop: start=0, step=1, limit=6
    $region2: #{temporal_attention.2} parent=1 // loop_pre_header
      _
    $region3: #{temporal_attention.2} parent=1 // loop_header
      %s12 = sphi 0, %s16
      %p13 = scmp.ge.s32.totalorder %s12, 6
      %s19 = sphi 0, %s31
      %s20 = sphi 0, %s27
      %s21 = sphi 0, %s19
      %s22 = sphi 0, %s20
      %s23 = sphi 0, %s21
      %s24 = sphi 0, %s22
      %s36 = sphi 0, %s38
      %s39 = sphi 0, %s36
      %s40 = sphi 0, %s39
      %s56 = sphi 0, %s40
      %s64 = sphi 0, %s66
      %s67 = sphi 0, %s64
      %s68 = sphi 0, %s67
      %s84 = sphi 0, %s68
      %s88 = sphi 0, %s88
      %s90 = sphi 0, %s88
      %s91 = sphi 0, %s90
      %s105 = sphi 0, %s91
      %s109 = sphi 0, %s109
      %s111 = sphi 0, %s109
      %s112 = sphi 0, %s111
      %s126 = sphi 0, %s112
      %s130 = sphi 0, %s130
      %s132 = sphi 0, %s130
      %s133 = sphi 0, %s132
      %s147 = sphi 0, %s133
      %s151 = sphi 0, %s151
      %s153 = sphi 0, %s151
      %s154 = sphi 0, %s153
      %s168 = sphi 0, %s154
      %s176 = sphi 0, %s178
      %s179 = sphi 0, %s176
      %s180 = sphi 0, %s179
      %s196 = sphi 0, %s180
    $region4: #{temporal_attention.2} parent=1 // loop_header_branch
      %15 = sbr.rel (%p13) target = $region8
    $region5: #{temporal_attention.2} parent=1 // loop_body
      %s17 = ssub.s32 %s12, 1
      %s18 = ssub.s32 %s12, 2
      %s25 = sadd.s32 1, %s20
      %p26 = scmp.ge.s32.totalorder %s25, 2
      %s27 = scalar_select %p26, 0, %s25
      %s28 = sadd.s32 1, %s19
      %s29 = scalar_select %p26, %s28, %s19
      %p30 = scmp.ge.s32.totalorder %s29, 2
      %s31 = scalar_select %p30, 0, %s29
      %s32 = ssub.s32 %s19, %s31
      %s33 = ssub.s32 %s20, %s27
      %s34 = sor.u32 %s32, %s33
      %p35 = scmp.eq.s32.totalorder %s34, 0
      %s37 = sadd.s32 %s36, 1
      %s38 = scalar_select %p35, %s36, %s37
      %p41 = pneg %p35
      %p42 = scmp.eq.s32.totalorder %s12, 3
      %p43 = por %p41, %p42
      %p44 = scmp.ne.s32.totalorder %s36, %s39
      %p45 = scmp.eq.s32.totalorder %s12, 0
      %p46 = por %p44, %p45
      %p47 = scmp.ne.s32.totalorder %s36, %s39
      %p48 = scmp.eq.s32.totalorder %s17, 3
      %p49 = por %p47, %p48
      %p50 = scmp.ne.s32.totalorder %s39, %s40
      %p51 = scmp.eq.s32.totalorder %s17, 0
      %p52 = por %p50, %p51
      %p53 = scmp.ne.s32.totalorder %s39, %s40
      %p54 = scmp.eq.s32.totalorder %s18, 3
      %p55 = por %p53, %p54
      %p57 = scmp.ne.s32.totalorder %s40, %s56
      %p58 = scmp.eq.s32.totalorder %s18, 0
      %p59 = por %p57, %p58
      %s60 = ssub.s32 %s19, %s31
      %s61 = ssub.s32 %s20, %s27
      %s62 = sor.u32 %s60, %s61
      %p63 = scmp.eq.s32.totalorder %s62, 0
      %s65 = sadd.s32 %s64, 1
      %s66 = scalar_select %p63, %s64, %s65
      %p69 = pneg %p63
      %p70 = scmp.eq.s32.totalorder %s12, 3
      %p71 = por %p69, %p70
      %p72 = scmp.ne.s32.totalorder %s64, %s67
      %p73 = scmp.eq.s32.totalorder %s12, 0
      %p74 = por %p72, %p73
      %p75 = scmp.ne.s32.totalorder %s64, %s67
      %p76 = scmp.eq.s32.totalorder %s17, 3
      %p77 = por %p75, %p76
      %p78 = scmp.ne.s32.totalorder %s67, %s68
      %p79 = scmp.eq.s32.totalorder %s17, 0
      %p80 = por %p78, %p79
      %p81 = scmp.ne.s32.totalorder %s67, %s68
      %p82 = scmp.eq.s32.totalorder %s18, 3
      %p83 = por %p81, %p82
      %p85 = scmp.ne.s32.totalorder %s68, %s84
      %p86 = scmp.eq.s32.totalorder %s18, 0
      %p87 = por %p85, %p86
      %s89 = sadd.s32 %s88, 1
      %p92 = scmp.eq.s32.totalorder %s12, 3
      %p93 = scmp.ne.s32.totalorder %s88, %s90
      %p94 = scmp.eq.s32.totalorder %s12, 0
      %p95 = por %p93, %p94
      %p96 = scmp.ne.s32.totalorder %s88, %s90
      %p97 = scmp.eq.s32.totalorder %s17, 3
      %p98 = por %p96, %p97
      %p99 = scmp.ne.s32.totalorder %s90, %s91
      %p100 = scmp.eq.s32.totalorder %s17, 0
      %p101 = por %p99, %p100
      %p102 = scmp.ne.s32.totalorder %s90, %s91
      %p103 = scmp.eq.s32.totalorder %s18, 3
      %p104 = por %p102, %p103
      %p106 = scmp.ne.s32.totalorder %s91, %s105
      %p107 = scmp.eq.s32.totalorder %s18, 0
      %p108 = por %p106, %p107
      %s110 = sadd.s32 %s109, 1
      %p113 = scmp.eq.s32.totalorder %s12, 3
      %p114 = scmp.ne.s32.totalorder %s109, %s111
      %p115 = scmp.eq.s32.totalorder %s12, 0
      %p116 = por %p114, %p115
      %p117 = scmp.ne.s32.totalorder %s109, %s111
      %p118 = scmp.eq.s32.totalorder %s17, 3
      %p119 = por %p117, %p118
      %p120 = scmp.ne.s32.totalorder %s111, %s112
      %p121 = scmp.eq.s32.totalorder %s17, 0
      %p122 = por %p120, %p121
      %p123 = scmp.ne.s32.totalorder %s111, %s112
      %p124 = scmp.eq.s32.totalorder %s18, 3
      %p125 = por %p123, %p124
      %p127 = scmp.ne.s32.totalorder %s112, %s126
      %p128 = scmp.eq.s32.totalorder %s18, 0
      %p129 = por %p127, %p128
      %s131 = sadd.s32 %s130, 1
      %p134 = scmp.eq.s32.totalorder %s12, 3
      %p135 = scmp.ne.s32.totalorder %s130, %s132
      %p136 = scmp.eq.s32.totalorder %s12, 0
      %p137 = por %p135, %p136
      %p138 = scmp.ne.s32.totalorder %s130, %s132
      %p139 = scmp.eq.s32.totalorder %s17, 3
      %p140 = por %p138, %p139
      %p141 = scmp.ne.s32.totalorder %s132, %s133
      %p142 = scmp.eq.s32.totalorder %s17, 0
      %p143 = por %p141, %p142
      %p144 = scmp.ne.s32.totalorder %s132, %s133
      %p145 = scmp.eq.s32.totalorder %s18, 3
      %p146 = por %p144, %p145
      %p148 = scmp.ne.s32.totalorder %s133, %s147
      %p149 = scmp.eq.s32.totalorder %s18, 0
      %p150 = por %p148, %p149
      %s152 = sadd.s32 %s151, 1
      %p155 = scmp.eq.s32.totalorder %s12, 3
      %p156 = scmp.ne.s32.totalorder %s151, %s153
      %p157 = scmp.eq.s32.totalorder %s12, 0
      %p158 = por %p156, %p157
      %p159 = scmp.ne.s32.totalorder %s151, %s153
      %p160 = scmp.eq.s32.totalorder %s17, 3
      %p161 = por %p159, %p160
      %p162 = scmp.ne.s32.totalorder %s153, %s154
      %p163 = scmp.eq.s32.totalorder %s17, 0
      %p164 = por %p162, %p163
      %p165 = scmp.ne.s32.totalorder %s153, %s154
      %p166 = scmp.eq.s32.totalorder %s18, 3
      %p167 = por %p165, %p166
      %p169 = scmp.ne.s32.totalorder %s154, %s168
      %p170 = scmp.eq.s32.totalorder %s18, 0
      %p171 = por %p169, %p170
      %s172 = ssub.s32 %s19, %s31
      %s173 = ssub.s32 %s20, %s27
      %s174 = sor.u32 %s172, %s173
      %p175 = scmp.eq.s32.totalorder %s174, 0
      %s177 = sadd.s32 %s176, 1
      %s178 = scalar_select %p175, %s176, %s177
      %p181 = pneg %p175
      %p182 = scmp.eq.s32.totalorder %s12, 3
      %p183 = por %p181, %p182
      %p184 = scmp.ne.s32.totalorder %s176, %s179
      %p185 = scmp.eq.s32.totalorder %s12, 0
      %p186 = por %p184, %p185
      %p187 = scmp.ne.s32.totalorder %s176, %s179
      %p188 = scmp.eq.s32.totalorder %s17, 3
      %p189 = por %p187, %p188
      %p190 = scmp.ne.s32.totalorder %s179, %s180
      %p191 = scmp.eq.s32.totalorder %s17, 0
      %p192 = por %p190, %p191
      %p193 = scmp.ne.s32.totalorder %s179, %s180
      %p194 = scmp.eq.s32.totalorder %s18, 3
      %p195 = por %p193, %p194
      %p197 = scmp.ne.s32.totalorder %s180, %s196
      %p198 = scmp.eq.s32.totalorder %s18, 0
      %p199 = por %p197, %p198
      %p200 = scmp.le.s32.totalorder 1, %s12
      %p201 = scmp.lt.s32.totalorder %s12, 5
      %p202 = pnand %p200, %p201
      %p203 = pneg %p202
      // Predicated region
      $region9: #{temporal_attention.2} parent=5 // pred_check
        _
      $region10: #{temporal_attention.2} parent=5 // pred_check_branch
        %205 = sbr.rel (%p202) target = $region12
      $region11: #{temporal_attention.2} parent=5 // pred_region
        %s206 = ssub.s32 %s12, 1
        // Predicated region
        $region13: #{temporal_attention.2} parent=11 // pred_check
          %p207 = pneg %p101
        $region14: #{temporal_attention.2} parent=11 // pred_check_branch
          %209 = sbr.rel (%p207) target = $region16
        $region15: #{temporal_attention.2} parent=11 // pred_region
          _
        $region16: #{temporal_attention.2} parent=11 // pred_fallthru
          _
        // Predicated region
        $region17: #{temporal_attention.2} parent=11 // pred_check
          %p210 = pneg %p122
        $region18: #{temporal_attention.2} parent=11 // pred_check_branch
          %212 = sbr.rel (%p210) target = $region20
        $region19: #{temporal_attention.2} parent=11 // pred_region
          _
        $region20: #{temporal_attention.2} parent=11 // pred_fallthru
          _
        // Predicated region
        $region21: #{temporal_attention.2} parent=11 // pred_check
          %p213 = pneg %p143
        $region22: #{temporal_attention.2} parent=11 // pred_check_branch
          %215 = sbr.rel (%p213) target = $region24
        $region23: #{temporal_attention.2} parent=11 // pred_region
          _
        $region24: #{temporal_attention.2} parent=11 // pred_fallthru
          _
        // Predicated region
        $region25: #{temporal_attention.2} parent=11 // pred_check
          %p216 = pneg %p164
        $region26: #{temporal_attention.2} parent=11 // pred_check_branch
          %218 = sbr.rel (%p216) target = $region28
        $region27: #{temporal_attention.2} parent=11 // pred_region
          _
        $region28: #{temporal_attention.2} parent=11 // pred_fallthru
          _
      $region12: #{temporal_attention.2} parent=5 // pred_fallthru
        _
      %p219 = scmp.lt.s32.totalorder %s12, 4
      // Predicated region
      $region29: #{temporal_attention.2} parent=5 // pred_check
        %p220 = pneg %p219
      $region30: #{temporal_attention.2} parent=5 // pred_check_branch
        %222 = sbr.rel (%p220) target = $region32
      $region31: #{temporal_attention.2} parent=5 // pred_region
        // Predicated region
        $region33: #{temporal_attention.2} parent=31 // pred_check
          %p223 = pneg %p46
        $region34: #{temporal_attention.2} parent=31 // pred_check_branch
          %225 = sbr.rel (%p223) target = $region36
        $region35: #{temporal_attention.2} parent=31 // pred_region
          %s226 = sand.u32 %s36, 1
          %s227 = sand.u32 %s36, 1
          %s228 = smul.addr %s227, 64
          %s229 = scalar_lea.vmem [#allocation2], %s228
          %s230 = smul.addr %s19, 16
          %s231 = sadd.s32 %s20, %s230
          %s232 = smul.addr %s231, 8
          %s233 = scalar_lea.vmem %s0, %s232
          // Predicated region
          $region37: #{temporal_attention.2} parent=35 // pred_check
            _
          $region38: #{temporal_attention.2} parent=35 // pred_check_branch
            %235 = sbr.rel (0) target = $region40
          $region39: #{temporal_attention.2} parent=35 // pred_region
            // Predicated region
            $region41: #{temporal_attention.2} parent=39 // pred_check
              _
            $region42: #{temporal_attention.2} parent=39 // pred_check_branch
              %237 = sbr.rel (0) target = $region44
            $region43: #{temporal_attention.2} parent=39 // pred_region
              // Predicated region
              $region56: #{temporal_attention.2} parent=43 // pred_check
                _
              $region57: #{temporal_attention.2} parent=43 // pred_check_branch
                %267 = sbr.rel (0) target = $region59
              $region58: #{temporal_attention.2} parent=43 // pred_region
                loop: start=0, step=1, limit=1
                $region60: #{temporal_attention.2} parent=58 // loop_pre_header
                  _
                $region61: #{temporal_attention.2} parent=58 // loop_header
                  %s269 = sphi 0, %s273
                  %p270 = scmp.ge.s32.totalorder %s269, 1
                  %s274 = sphi %s233, %s233
                  %s275 = sphi %s229, %s229
                $region62: #{temporal_attention.2} parent=58 // loop_header_branch
                  %272 = sbr.rel (%p270) target = $region66
                $region63: #{temporal_attention.2} parent=58 // loop_body
                  %v276 = vld [vmem:[%s274] sm:$0xff]
                  %277 = vst [vmem:[%s275] sm:$0xff] %v276
                  %v278 = vld [vmem:[%s274 + $0x10] sm:$0xff]
                  %279 = vst [vmem:[%s275 + $0x8] sm:$0xff] %v278
                  %v280 = vld [vmem:[%s274 + $0x20] sm:$0xff]
                  %281 = vst [vmem:[%s275 + $0x10] sm:$0xff] %v280
                  %v282 = vld [vmem:[%s274 + $0x30] sm:$0xff]
                  %283 = vst [vmem:[%s275 + $0x18] sm:$0xff] %v282
                  %v284 = vld [vmem:[%s274 + $0x40] sm:$0xff]
                  %285 = vst [vmem:[%s275 + $0x20] sm:$0xff] %v284
                  %v286 = vld [vmem:[%s274 + $0x50] sm:$0xff]
                  %287 = vst [vmem:[%s275 + $0x28] sm:$0xff] %v286
                  %v288 = vld [vmem:[%s274 + $0x60] sm:$0xff]
                  %289 = vst [vmem:[%s275 + $0x30] sm:$0xff] %v288
                  %v290 = vld [vmem:[%s274 + $0x70] sm:$0xff]
                  %291 = vst [vmem:[%s275 + $0x38] sm:$0xff] %v290
                $region64: #{temporal_attention.2} parent=58 // loop_footer
                  %s273 = sadd.s32 1, %s269
                $region65: #{temporal_attention.2} parent=58 // loop_footer_branch
                  %268 = sbr.rel target = $region61
                $region66: #{temporal_attention.2} parent=58 // loop_exit
                  _
              $region59: #{temporal_attention.2} parent=43 // pred_fallthru
                _
              // Predicated region
              $region67: #{temporal_attention.2} parent=43 // pred_check
                _
              $region68: #{temporal_attention.2} parent=43 // pred_check_branch
                %293 = sbr.rel target = $region70
              $region69: #{temporal_attention.2} parent=43 // pred_region
                _
              $region70: #{temporal_attention.2} parent=43 // pred_fallthru
                _
            $region44: #{temporal_attention.2} parent=39 // pred_fallthru
              _
            // Predicated region
            $region45: #{temporal_attention.2} parent=39 // pred_check
              _
            $region46: #{temporal_attention.2} parent=39 // pred_check_branch
              %239 = sbr.rel target = $region48
            $region47: #{temporal_attention.2} parent=39 // pred_region
              %s241 = ssub.s32 256, 1
              loop: start=0, step=1, limit=1
              $region49: #{temporal_attention.2} parent=47 // loop_pre_header
                _
              $region50: #{temporal_attention.2} parent=47 // loop_header
                %s243 = sphi 0, %s247
                %p244 = scmp.ge.s32.totalorder %s243, 1
                %s248 = sphi %s233, %s233
                %s249 = sphi %s229, %s229
              $region51: #{temporal_attention.2} parent=47 // loop_header_branch
                %246 = sbr.rel (%p244) target = $region55
              $region52: #{temporal_attention.2} parent=47 // loop_body
                %v250 = vld [vmem:[%s248] sm:%s241]
                %251 = vst [vmem:[%s249] sm:%s241] %v250
                %v252 = vld [vmem:[%s248 + $0x10] sm:%s241]
                %253 = vst [vmem:[%s249 + $0x8] sm:%s241] %v252
                %v254 = vld [vmem:[%s248 + $0x20] sm:%s241]
                %255 = vst [vmem:[%s249 + $0x10] sm:%s241] %v254
                %v256 = vld [vmem:[%s248 + $0x30] sm:%s241]
                %257 = vst [vmem:[%s249 + $0x18] sm:%s241] %v256
                %v258 = vld [vmem:[%s248 + $0x40] sm:%s241]
                %259 = vst [vmem:[%s249 + $0x20] sm:%s241] %v258
                %v260 = vld [vmem:[%s248 + $0x50] sm:%s241]
                %261 = vst [vmem:[%s249 + $0x28] sm:%s241] %v260
                %v262 = vld [vmem:[%s248 + $0x60] sm:%s241]
                %263 = vst [vmem:[%s249 + $0x30] sm:%s241] %v262
                %v264 = vld [vmem:[%s248 + $0x70] sm:%s241]
                %265 = vst [vmem:[%s249 + $0x38] sm:%s241] %v264
              $region53: #{temporal_attention.2} parent=47 // loop_footer
                %s247 = sadd.s32 1, %s243
              $region54: #{temporal_attention.2} parent=47 // loop_footer_branch
                %242 = sbr.rel target = $region50
              $region55: #{temporal_attention.2} parent=47 // loop_exit
                _
            $region48: #{temporal_attention.2} parent=39 // pred_fallthru
              _
          $region40: #{temporal_attention.2} parent=35 // pred_fallthru
            _
          %294 = vnop
        $region36: #{temporal_attention.2} parent=31 // pred_fallthru
          _
        // Predicated region
        $region71: #{temporal_attention.2} parent=31 // pred_check
          %p295 = pneg %p74
        $region72: #{temporal_attention.2} parent=31 // pred_check_branch
          %297 = sbr.rel (%p295) target = $region74
        $region73: #{temporal_attention.2} parent=31 // pred_region
          %s298 = sand.u32 %s64, 1
          %s299 = sand.u32 %s64, 1
          %s300 = smul.addr %s299, 64
          %s301 = scalar_lea.vmem [#allocation3], %s300
          %s302 = smul.addr %s19, 16
          %s303 = sadd.s32 %s20, %s302
          %s304 = smul.addr %s303, 8
          %s305 = scalar_lea.vmem %s1, %s304
          // Predicated region
          $region75: #{temporal_attention.2} parent=73 // pred_check
            _
          $region76: #{temporal_attention.2} parent=73 // pred_check_branch
            %307 = sbr.rel (0) target = $region78
          $region77: #{temporal_attention.2} parent=73 // pred_region
            // Predicated region
            $region79: #{temporal_attention.2} parent=77 // pred_check
              _
            $region80: #{temporal_attention.2} parent=77 // pred_check_branch
              %309 = sbr.rel (0) target = $region82
            $region81: #{temporal_attention.2} parent=77 // pred_region
              // Predicated region
              $region94: #{temporal_attention.2} parent=81 // pred_check
                _
              $region95: #{temporal_attention.2} parent=81 // pred_check_branch
                %339 = sbr.rel (0) target = $region97
              $region96: #{temporal_attention.2} parent=81 // pred_region
                loop: start=0, step=1, limit=1
                $region98: #{temporal_attention.2} parent=96 // loop_pre_header
                  _
                $region99: #{temporal_attention.2} parent=96 // loop_header
                  %s341 = sphi 0, %s345
                  %p342 = scmp.ge.s32.totalorder %s341, 1
                  %s346 = sphi %s305, %s305
                  %s347 = sphi %s301, %s301
                $region100: #{temporal_attention.2} parent=96 // loop_header_branch
                  %344 = sbr.rel (%p342) target = $region104
                $region101: #{temporal_attention.2} parent=96 // loop_body
                  %v348 = vld [vmem:[%s346] sm:$0xff]
                  %349 = vst [vmem:[%s347] sm:$0xff] %v348
                  %v350 = vld [vmem:[%s346 + $0x10] sm:$0xff]
                  %351 = vst [vmem:[%s347 + $0x8] sm:$0xff] %v350
                  %v352 = vld [vmem:[%s346 + $0x20] sm:$0xff]
                  %353 = vst [vmem:[%s347 + $0x10] sm:$0xff] %v352
                  %v354 = vld [vmem:[%s346 + $0x30] sm:$0xff]
                  %355 = vst [vmem:[%s347 + $0x18] sm:$0xff] %v354
                  %v356 = vld [vmem:[%s346 + $0x40] sm:$0xff]
                  %357 = vst [vmem:[%s347 + $0x20] sm:$0xff] %v356
                  %v358 = vld [vmem:[%s346 + $0x50] sm:$0xff]
                  %359 = vst [vmem:[%s347 + $0x28] sm:$0xff] %v358
                  %v360 = vld [vmem:[%s346 + $0x60] sm:$0xff]
                  %361 = vst [vmem:[%s347 + $0x30] sm:$0xff] %v360
                  %v362 = vld [vmem:[%s346 + $0x70] sm:$0xff]
                  %363 = vst [vmem:[%s347 + $0x38] sm:$0xff] %v362
                $region102: #{temporal_attention.2} parent=96 // loop_footer
                  %s345 = sadd.s32 1, %s341
                $region103: #{temporal_attention.2} parent=96 // loop_footer_branch
                  %340 = sbr.rel target = $region99
                $region104: #{temporal_attention.2} parent=96 // loop_exit
                  _
              $region97: #{temporal_attention.2} parent=81 // pred_fallthru
                _
              // Predicated region
              $region105: #{temporal_attention.2} parent=81 // pred_check
                _
              $region106: #{temporal_attention.2} parent=81 // pred_check_branch
                %365 = sbr.rel target = $region108
              $region107: #{temporal_attention.2} parent=81 // pred_region
                _
              $region108: #{temporal_attention.2} parent=81 // pred_fallthru
                _
            $region82: #{temporal_attention.2} parent=77 // pred_fallthru
              _
            // Predicated region
            $region83: #{temporal_attention.2} parent=77 // pred_check
              _
            $region84: #{temporal_attention.2} parent=77 // pred_check_branch
              %311 = sbr.rel target = $region86
            $region85: #{temporal_attention.2} parent=77 // pred_region
              %s313 = ssub.s32 256, 1
              loop: start=0, step=1, limit=1
              $region87: #{temporal_attention.2} parent=85 // loop_pre_header
                _
              $region88: #{temporal_attention.2} parent=85 // loop_header
                %s315 = sphi 0, %s319
                %p316 = scmp.ge.s32.totalorder %s315, 1
                %s320 = sphi %s305, %s305
                %s321 = sphi %s301, %s301
              $region89: #{temporal_attention.2} parent=85 // loop_header_branch
                %318 = sbr.rel (%p316) target = $region93
              $region90: #{temporal_attention.2} parent=85 // loop_body
                %v322 = vld [vmem:[%s320] sm:%s313]
                %323 = vst [vmem:[%s321] sm:%s313] %v322
                %v324 = vld [vmem:[%s320 + $0x10] sm:%s313]
                %325 = vst [vmem:[%s321 + $0x8] sm:%s313] %v324
                %v326 = vld [vmem:[%s320 + $0x20] sm:%s313]
                %327 = vst [vmem:[%s321 + $0x10] sm:%s313] %v326
                %v328 = vld [vmem:[%s320 + $0x30] sm:%s313]
                %329 = vst [vmem:[%s321 + $0x18] sm:%s313] %v328
                %v330 = vld [vmem:[%s320 + $0x40] sm:%s313]
                %331 = vst [vmem:[%s321 + $0x20] sm:%s313] %v330
                %v332 = vld [vmem:[%s320 + $0x50] sm:%s313]
                %333 = vst [vmem:[%s321 + $0x28] sm:%s313] %v332
                %v334 = vld [vmem:[%s320 + $0x60] sm:%s313]
                %335 = vst [vmem:[%s321 + $0x30] sm:%s313] %v334
                %v336 = vld [vmem:[%s320 + $0x70] sm:%s313]
                %337 = vst [vmem:[%s321 + $0x38] sm:%s313] %v336
              $region91: #{temporal_attention.2} parent=85 // loop_footer
                %s319 = sadd.s32 1, %s315
              $region92: #{temporal_attention.2} parent=85 // loop_footer_branch
                %314 = sbr.rel target = $region88
              $region93: #{temporal_attention.2} parent=85 // loop_exit
                _
            $region86: #{temporal_attention.2} parent=77 // pred_fallthru
              _
          $region78: #{temporal_attention.2} parent=73 // pred_fallthru
            _
          %366 = vnop
        $region74: #{temporal_attention.2} parent=31 // pred_fallthru
          _
      $region32: #{temporal_attention.2} parent=5 // pred_fallthru
        _
      %p367 = scmp.le.s32.totalorder 1, %s12
      %p368 = scmp.lt.s32.totalorder %s12, 5
      %p369 = pnand %p367, %p368
      %p370 = pneg %p369
      // Predicated region
      $region109: #{temporal_attention.2} parent=5 // pred_check
        _
      $region110: #{temporal_attention.2} parent=5 // pred_check_branch
        %372 = sbr.rel (%p369) target = $region112
      $region111: #{temporal_attention.2} parent=5 // pred_region
        %s373 = ssub.s32 %s12, 1
        %s374 = sand.u32 %s39, 1
        %s375 = sand.u32 %s39, 1
        %s376 = smul.addr %s375, 64
        %s377 = scalar_lea.vmem [#allocation2], %s376
        // Predicated region
        $region113: #{temporal_attention.2} parent=111 // pred_check
          %p378 = pneg %p52
        $region114: #{temporal_attention.2} parent=111 // pred_check_branch
          %380 = sbr.rel (%p378) target = $region116
        $region115: #{temporal_attention.2} parent=111 // pred_region
          _
        $region116: #{temporal_attention.2} parent=111 // pred_fallthru
          _
        %s381 = sand.u32 %s67, 1
        %s382 = sand.u32 %s67, 1
        %s383 = smul.addr %s382, 64
        %s384 = scalar_lea.vmem [#allocation3], %s383
        // Predicated region
        $region117: #{temporal_attention.2} parent=111 // pred_check
          %p385 = pneg %p80
        $region118: #{temporal_attention.2} parent=111 // pred_check_branch
          %387 = sbr.rel (%p385) target = $region120
        $region119: #{temporal_attention.2} parent=111 // pred_region
          _
        $region120: #{temporal_attention.2} parent=111 // pred_fallthru
          _
        %s388 = sand.u32 %s39, 1
        %s389 = sand.u32 %s39, 1
        %s390 = smul.addr %s389, 64
        %s391 = scalar_lea.vmem [#allocation2], %s390
        %p392 = pneg %p52
        %p393 = pneg %p49
        %s394 = sand.u32 %s67, 1
        %s395 = sand.u32 %s67, 1
        %s396 = smul.addr %s395, 64
        %s397 = scalar_lea.vmem [#allocation3], %s396
        %p398 = pneg %p80
        %p399 = pneg %p77
        %p400 = pneg %p101
        %p401 = pneg %p98
        %p402 = pneg %p122
        %p403 = pneg %p119
        %p404 = pneg %p143
        %p405 = pneg %p140
        %p406 = pneg %p164
        %p407 = pneg %p161
        %p408 = pneg %p192
        %p409 = pneg %p189
        %s410 = smul.u32 8, %s22
        %p411 = scmp.lt.s32.totalorder %s21, 1
        %s412 = scalar_select %p411, %s21, 1
        %p413 = scmp.lt.s32.totalorder %s410, 15
        %s414 = scalar_select %p413, %s410, 15
        %s415 = smul.addr %s412, 16
        %s416 = sadd.s32 %s414, %s415
        %s417 = smul.addr %s416, 8
        %s418 = scalar_lea.vmem %s6, %s417
        %s419 = smul.u32 8, %s22
        %p420 = scmp.lt.s32.totalorder %s21, 1
        %s421 = scalar_select %p420, %s21, 1
        %p422 = scmp.lt.s32.totalorder %s419, 15
        %s423 = scalar_select %p422, %s419, 15
        %s424 = smul.addr %s421, 16
        %s425 = sadd.s32 %s423, %s424
        %s426 = smul.addr %s425, 8
        %s427 = scalar_lea.vmem %s6, %s426
        %s428 = smul.u32 8, %s22
        %v429 = vld [vmem:[%s377] sm:$0xff]
        %v430 = vld [vmem:[%s377 + $0x8] sm:$0xff]
        %v431 = vld [vmem:[%s377 + $0x10] sm:$0xff]
        %v432 = vld [vmem:[%s377 + $0x18] sm:$0xff]
        %v433 = vld [vmem:[%s377 + $0x20] sm:$0xff]
        %v434 = vld [vmem:[%s377 + $0x28] sm:$0xff]
        %v435 = vld [vmem:[%s377 + $0x30] sm:$0xff]
        %v436 = vld [vmem:[%s377 + $0x38] sm:$0xff]
        %v437 = vld [vmem:[%s384] sm:$0xff]
        %v438 = vld [vmem:[%s384 + $0x8] sm:$0xff]
        %v439 = vld [vmem:[%s384 + $0x10] sm:$0xff]
        %v440 = vld [vmem:[%s384 + $0x18] sm:$0xff]
        %v441 = vld [vmem:[%s384 + $0x20] sm:$0xff]
        %v442 = vld [vmem:[%s384 + $0x28] sm:$0xff]
        %v443 = vld [vmem:[%s384 + $0x30] sm:$0xff]
        %v444 = vld [vmem:[%s384 + $0x38] sm:$0xff]
        %v445 = vld [vmem:[%s2] sm:$0xff]
        %v446 = vld [vmem:[%s2 + $0x8] sm:$0xff]
        %v447 = vld [vmem:[%s3] sm:$0xff]
        %v448 = vld [vmem:[%s3 + $0x8] sm:$0xff]
        %v449 = vld [vmem:[%s3 + $0x10] sm:$0xf]
        %vm450 = vcmask 162816
        %v452 = vsel %vm450, %v437, 0
        %v455 = vsel %vm450, %v438, 0
        %v458 = vsel %vm450, %v439, 0
        %v461 = vsel %vm450, %v440, 0
        %v464 = vsel %vm450, %v441, 0
        %v467 = vsel %vm450, %v442, 0
        %v470 = vsel %vm450, %v443, 0
        %v473 = vsel %vm450, %v444, 0
        %vm475 = vcmask 1043456
        %v477 = vsel %vm475, %v449, 0
        %479 = vmatprep.subr.mxu0 0.0
        %480 = vmatpush1.msra.mxu0 0.0
        %481 = vmatprep.subr.mxu0 0.0
        %482 = vmatpush1.msra.mxu0 0.0
        %483 = vmatprep.subr.mxu0 0.0
        %484 = vmatpush1.msra.mxu0 0.0
        %485 = vmatprep.subr.mxu0 0.0
        %486 = vmatpush1.msra.mxu0 0.0
        %487 = vmatprep.subr.mxu0 0.0
        %488 = vmatpush1.msra.mxu0 0.0
        %489 = vmatprep.subr.mxu0 0.0
        %490 = vmatpush1.msra.mxu0 0.0
        %491 = vmatprep.subr.mxu0 0.0
        %492 = vmatpush1.msra.mxu0 0.0
        %493 = vmatprep.subr.mxu0 0.0
        %494 = vmatpush1.msra.mxu0 0.0
        %495 = vmatprep.subr.mxu0 0.0
        %496 = vmatpush1.msra.mxu0 0.0
        %497 = vmatprep.subr.mxu0 0.0
        %498 = vmatpush1.msra.mxu0 0.0
        %499 = vmatprep.subr.mxu0 0.0
        %500 = vmatpush1.msra.mxu0 0.0
        %501 = vmatprep.subr.mxu0 0.0
        %502 = vmatpush1.msra.mxu0 0.0
        %503 = vmatprep.subr.mxu0 0.0
        %504 = vmatpush1.msra.mxu0 0.0
        %505 = vmatprep.subr.mxu0 0.0
        %506 = vmatpush1.msra.mxu0 %v477
        %507 = vmatprep.subr.mxu0 0.0
        %508 = vmatpush1.msra.mxu0 %v448
        %509 = vmatprep.subr.mxu0 0.0
        %510 = vmatpush1.msra.mxu0 %v447
        %511 = vmatprep.subr.mxu0 0.0
        %512 = vmatpush2.msra.mxu0 0.0
        %513 = vmatprep.subr.mxu0 0.0
        %514 = vmatpush2.msra.mxu0 0.0
        %515 = vmatprep.subr.mxu0 0.0
        %516 = vmatpush2.msra.mxu0 0.0
        %517 = vmatprep.subr.mxu0 0.0
        %518 = vmatpush2.msra.mxu0 0.0
        %519 = vmatprep.subr.mxu0 0.0
        %520 = vmatpush2.msra.mxu0 0.0
        %521 = vmatprep.subr.mxu0 0.0
        %522 = vmatpush2.msra.mxu0 0.0
        %523 = vmatprep.subr.mxu0 0.0
        %524 = vmatpush2.msra.mxu0 0.0
        %525 = vmatprep.subr.mxu0 0.0
        %526 = vmatpush2.msra.mxu0 0.0
        %527 = vmatprep.subr.mxu0 0.0
        %528 = vmatpush2.msra.mxu0 0.0
        %529 = vmatprep.subr.mxu0 0.0
        %530 = vmatpush2.msra.mxu0 0.0
        %531 = vmatprep.subr.mxu0 0.0
        %532 = vmatpush2.msra.mxu0 0.0
        %533 = vmatprep.subr.mxu0 0.0
        %534 = vmatpush2.msra.mxu0 0.0
        %535 = vmatprep.subr.mxu0 0.0
        %536 = vmatpush2.msra.mxu0 0.0
        %537 = vmatprep.subr.mxu0 0.0
        %538 = vmatpush2.msra.mxu0 0.0
        %539 = vmatprep.subr.mxu0 0.0
        %540 = vmatpush2.msra.mxu0 0.0
        %541 = vmatprep.subr.mxu0 0.0
        %542 = vmatpush2.msra.mxu0 0.0
        %543 = vmatprep.mubr.f32.mxu0 0.0
        %544 = vmatmul.mubr.f32.gmra.mxu0 %v452
        %v545 = vpop.f32.mrf.mxu0
        %v546 = vadd.f32 0.0, %v545
        %v547 = vpop.f32.mrf.mxu0
        %548 = vmatprep.mubr.f32.mxu0 0.0
        %549 = vmatmul.mubr.f32.gmra.mxu0 %v455
        %v550 = vpop.f32.mrf.mxu0
        %v551 = vadd.f32 0.0, %v550
        %v552 = vpop.f32.mrf.mxu0
        %553 = vmatprep.mubr.f32.mxu0 0.0
        %554 = vmatmul.mubr.f32.gmra.mxu0 %v458
        %v555 = vpop.f32.mrf.mxu0
        %v556 = vadd.f32 0.0, %v555
        %v557 = vpop.f32.mrf.mxu0
        %558 = vmatprep.mubr.f32.mxu0 0.0
        %559 = vmatmul.mubr.f32.gmra.mxu0 %v461
        %v560 = vpop.f32.mrf.mxu0
        %v561 = vadd.f32 0.0, %v560
        %v562 = vpop.f32.mrf.mxu0
        %563 = vmatprep.mubr.f32.mxu0 0.0
        %564 = vmatmul.mubr.f32.gmra.mxu0 %v464
        %v565 = vpop.f32.mrf.mxu0
        %v566 = vadd.f32 0.0, %v565
        %v567 = vpop.f32.mrf.mxu0
        %568 = vmatprep.mubr.f32.mxu0 0.0
        %569 = vmatmul.mubr.f32.gmra.mxu0 %v467
        %v570 = vpop.f32.mrf.mxu0
        %v571 = vadd.f32 0.0, %v570
        %v572 = vpop.f32.mrf.mxu0
        %573 = vmatprep.mubr.f32.mxu0 0.0
        %574 = vmatmul.mubr.f32.gmra.mxu0 %v470
        %v575 = vpop.f32.mrf.mxu0
        %v576 = vadd.f32 0.0, %v575
        %v577 = vpop.f32.mrf.mxu0
        %578 = vmatprep.mubr.f32.mxu0 0.0
        %579 = vmatmul.mubr.f32.gmra.mxu0 %v473
        %v580 = vpop.f32.mrf.mxu0
        %v581 = vadd.f32 0.0, %v580
        %v582 = vpop.f32.mrf.mxu0
        %583 = vdwg.mxu0
        %vm584 = vcmask 130048
        %v586 = vsel %vm584, %v429, 0
        %v589 = vsel %vm584, %v430, 0
        %v592 = vsel %vm584, %v431, 0
        %v595 = vsel %vm584, %v432, 0
        %v598 = vsel %vm584, %v433, 0
        %v601 = vsel %vm584, %v434, 0
        %v604 = vsel %vm584, %v435, 0
        %v607 = vsel %vm584, %v436, 0
        %609 = vmatprep.subr.mxu0 0.0
        %610 = vmatpush1.msra.mxu0 0.0
        %611 = vmatprep.subr.mxu0 0.0
        %612 = vmatpush1.msra.mxu0 0.0
        %613 = vmatprep.subr.mxu0 0.0
        %614 = vmatpush1.msra.mxu0 0.0
        %615 = vmatprep.subr.mxu0 0.0
        %616 = vmatpush1.msra.mxu0 0.0
        %617 = vmatprep.subr.mxu0 0.0
        %618 = vmatpush1.msra.mxu0 0.0
        %619 = vmatprep.subr.mxu0 0.0
        %620 = vmatpush1.msra.mxu0 0.0
        %621 = vmatprep.subr.mxu0 0.0
        %622 = vmatpush1.msra.mxu0 0.0
        %623 = vmatprep.subr.mxu0 0.0
        %624 = vmatpush1.msra.mxu0 0.0
        %625 = vmatprep.subr.mxu0 0.0
        %626 = vmatpush1.msra.mxu0 0.0
        %627 = vmatprep.subr.mxu0 0.0
        %628 = vmatpush1.msra.mxu0 0.0
        %629 = vmatprep.subr.mxu0 0.0
        %630 = vmatpush1.msra.mxu0 0.0
        %631 = vmatprep.subr.mxu0 0.0
        %632 = vmatpush1.msra.mxu0 0.0
        %633 = vmatprep.subr.mxu0 0.0
        %634 = vmatpush1.msra.mxu0 0.0
        %635 = vmatprep.subr.mxu0 0.0
        %636 = vmatpush1.msra.mxu0 0.0
        %637 = vmatprep.subr.mxu0 0.0
        %638 = vmatpush1.msra.mxu0 %v446
        %639 = vmatprep.subr.mxu0 0.0
        %640 = vmatpush1.msra.mxu0 %v445
        %641 = vmatprep.subr.mxu0 0.0
        %642 = vmatpush2.msra.mxu0 0.0
        %643 = vmatprep.subr.mxu0 0.0
        %644 = vmatpush2.msra.mxu0 0.0
        %645 = vmatprep.subr.mxu0 0.0
        %646 = vmatpush2.msra.mxu0 0.0
        %647 = vmatprep.subr.mxu0 0.0
        %648 = vmatpush2.msra.mxu0 0.0
        %649 = vmatprep.subr.mxu0 0.0
        %650 = vmatpush2.msra.mxu0 0.0
        %651 = vmatprep.subr.mxu0 0.0
        %652 = vmatpush2.msra.mxu0 0.0
        %653 = vmatprep.subr.mxu0 0.0
        %654 = vmatpush2.msra.mxu0 0.0
        %655 = vmatprep.subr.mxu0 0.0
        %656 = vmatpush2.msra.mxu0 0.0
        %657 = vmatprep.subr.mxu0 0.0
        %658 = vmatpush2.msra.mxu0 0.0
        %659 = vmatprep.subr.mxu0 0.0
        %660 = vmatpush2.msra.mxu0 0.0
        %661 = vmatprep.subr.mxu0 0.0
        %662 = vmatpush2.msra.mxu0 0.0
        %663 = vmatprep.subr.mxu0 0.0
        %664 = vmatpush2.msra.mxu0 0.0
        %665 = vmatprep.subr.mxu0 0.0
        %666 = vmatpush2.msra.mxu0 0.0
        %667 = vmatprep.subr.mxu0 0.0
        %668 = vmatpush2.msra.mxu0 0.0
        %669 = vmatprep.subr.mxu0 0.0
        %670 = vmatpush2.msra.mxu0 0.0
        %671 = vmatprep.subr.mxu0 0.0
        %672 = vmatpush2.msra.mxu0 0.0
        %673 = vmatprep.mubr.f32.mxu0 0.0
        %674 = vmatmul.mubr.f32.gmra.mxu0 %v586
        %v675 = vpop.f32.mrf.mxu0
        %v676 = vadd.f32 %v546, %v675
        %v677 = vpop.f32.mrf.mxu0
        %678 = vmatprep.mubr.f32.mxu0 0.0
        %679 = vmatmul.mubr.f32.gmra.mxu0 %v589
        %v680 = vpop.f32.mrf.mxu0
        %v681 = vadd.f32 %v551, %v680
        %v682 = vpop.f32.mrf.mxu0
        %683 = vmatprep.mubr.f32.mxu0 0.0
        %684 = vmatmul.mubr.f32.gmra.mxu0 %v592
        %v685 = vpop.f32.mrf.mxu0
        %v686 = vadd.f32 %v556, %v685
        %v687 = vpop.f32.mrf.mxu0
        %688 = vmatprep.mubr.f32.mxu0 0.0
        %689 = vmatmul.mubr.f32.gmra.mxu0 %v595
        %v690 = vpop.f32.mrf.mxu0
        %v691 = vadd.f32 %v561, %v690
        %v692 = vpop.f32.mrf.mxu0
        %693 = vmatprep.mubr.f32.mxu0 0.0
        %694 = vmatmul.mubr.f32.gmra.mxu0 %v598
        %v695 = vpop.f32.mrf.mxu0
        %v696 = vadd.f32 %v566, %v695
        %v697 = vpop.f32.mrf.mxu0
        %698 = vmatprep.mubr.f32.mxu0 0.0
        %699 = vmatmul.mubr.f32.gmra.mxu0 %v601
        %v700 = vpop.f32.mrf.mxu0
        %v701 = vadd.f32 %v571, %v700
        %v702 = vpop.f32.mrf.mxu0
        %703 = vmatprep.mubr.f32.mxu0 0.0
        %704 = vmatmul.mubr.f32.gmra.mxu0 %v604
        %v705 = vpop.f32.mrf.mxu0
        %v706 = vadd.f32 %v576, %v705
        %v707 = vpop.f32.mrf.mxu0
        %708 = vmatprep.mubr.f32.mxu0 0.0
        %709 = vmatmul.mubr.f32.gmra.mxu0 %v607
        %v710 = vpop.f32.mrf.mxu0
        %v711 = vadd.f32 %v581, %v710
        %v712 = vpop.f32.mrf.mxu0
        %713 = vdwg.mxu0
        %v714 = vld [vmem:[%s4] sm:$0x1]
        %v716 = vlaneseq
        %v717 = vshrl.u32 %v716, 7
        %v718 = vsub.s32 0, %v717
        %v719 = vrot.slane %v714, %v718
        %v721 = vmul.f32 %v676, %v719
        %v722 = vmul.f32 %v681, %v719
        %v723 = vmul.f32 %v686, %v719
        %v724 = vmul.f32 %v691, %v719
        %v725 = vmul.f32 %v696, %v719
        %v726 = vmul.f32 %v701, %v719
        %v727 = vmul.f32 %v706, %v719
        %v728 = vmul.f32 %v711, %v719
        %v729 = vld [vmem:[%s5] sm:$0x1]
        %v731 = vlaneseq
        %v732 = vshrl.u32 %v731, 7
        %v733 = vsub.s32 0, %v732
        %v734 = vrot.slane %v729, %v733
        %v736 = vadd.f32 %v721, %v734
        %v737 = vadd.f32 %v722, %v734
        %v738 = vadd.f32 %v723, %v734
        %v739 = vadd.f32 %v724, %v734
        %v740 = vadd.f32 %v725, %v734
        %v741 = vadd.f32 %v726, %v734
        %v742 = vadd.f32 %v727, %v734
        %v743 = vadd.f32 %v728, %v734
        %v744 = vmax.f32 %v736, 0.0
        %v745 = vmax.f32 %v737, 0.0
        %v746 = vmax.f32 %v738, 0.0
        %v747 = vmax.f32 %v739, 0.0
        %v748 = vmax.f32 %v740, 0.0
        %v749 = vmax.f32 %v741, 0.0
        %v750 = vmax.f32 %v742, 0.0
        %v751 = vmax.f32 %v743, 0.0
        %v752 = vcombine.low %v744, %v746
        %v753 = vcombine.high %v744, %v746
        %v755 = vunpack.c.l.s4 1983009808
        %v756 = vunpack.c.0.s8 %v755
        %v757 = vlaneseq
        %v758 = vshrl.u32 %v757, 7
        %v759 = vsub.s32 %v756, %v758
        %v760 = vrot.slane %v752, %v759
        %v762 = vunpack.c.l.s4 1983009808
        %v763 = vunpack.c.0.s8 %v762
        %v764 = vlaneseq
        %v765 = vshrl.u32 %v764, 7
        %v766 = vsub.s32 %v763, %v765
        %v767 = vrot.slane %v753, %v766
        %v768 = vcombine.low %v745, %v747
        %v769 = vcombine.high %v745, %v747
        %v771 = vunpack.c.l.s4 1983009808
        %v772 = vunpack.c.0.s8 %v771
        %v773 = vlaneseq
        %v774 = vshrl.u32 %v773, 7
        %v775 = vsub.s32 %v772, %v774
        %v776 = vrot.slane %v768, %v775
        %v778 = vunpack.c.l.s4 1983009808
        %v779 = vunpack.c.0.s8 %v778
        %v780 = vlaneseq
        %v781 = vshrl.u32 %v780, 7
        %v782 = vsub.s32 %v779, %v781
        %v783 = vrot.slane %v769, %v782
        %v784 = vcombine.low %v748, %v750
        %v785 = vcombine.high %v748, %v750
        %v787 = vunpack.c.l.s4 1983009808
        %v788 = vunpack.c.0.s8 %v787
        %v789 = vlaneseq
        %v790 = vshrl.u32 %v789, 7
        %v791 = vsub.s32 %v788, %v790
        %v792 = vrot.slane %v784, %v791
        %v794 = vunpack.c.l.s4 1983009808
        %v795 = vunpack.c.0.s8 %v794
        %v796 = vlaneseq
        %v797 = vshrl.u32 %v796, 7
        %v798 = vsub.s32 %v795, %v797
        %v799 = vrot.slane %v785, %v798
        %v800 = vcombine.low %v749, %v751
        %v801 = vcombine.high %v749, %v751
        %v803 = vunpack.c.l.s4 1983009808
        %v804 = vunpack.c.0.s8 %v803
        %v805 = vlaneseq
        %v806 = vshrl.u32 %v805, 7
        %v807 = vsub.s32 %v804, %v806
        %v808 = vrot.slane %v800, %v807
        %v810 = vunpack.c.l.s4 1983009808
        %v811 = vunpack.c.0.s8 %v810
        %v812 = vlaneseq
        %v813 = vshrl.u32 %v812, 7
        %v814 = vsub.s32 %v811, %v813
        %v815 = vrot.slane %v801, %v814
        %v816 = vcombine.low %v760, %v776
        %v817 = vcombine.high %v760, %v776
        %v819 = vunpack.c.l.s4 1934713408
        %v820 = vunpack.c.0.s8 %v819
        %v821 = vlaneseq
        %v822 = vshrl.u32 %v821, 7
        %v823 = vsub.s32 %v820, %v822
        %v824 = vrot.slane %v816, %v823
        %v826 = vunpack.c.l.s4 1934713408
        %v827 = vunpack.c.0.s8 %v826
        %v828 = vlaneseq
        %v829 = vshrl.u32 %v828, 7
        %v830 = vsub.s32 %v827, %v829
        %v831 = vrot.slane %v817, %v830
        %v832 = vcombine.low %v767, %v783
        %v833 = vcombine.high %v767, %v783
        %v835 = vunpack.c.l.s4 1934713408
        %v836 = vunpack.c.0.s8 %v835
        %v837 = vlaneseq
        %v838 = vshrl.u32 %v837, 7
        %v839 = vsub.s32 %v836, %v838
        %v840 = vrot.slane %v832, %v839
        %v842 = vunpack.c.l.s4 1934713408
        %v843 = vunpack.c.0.s8 %v842
        %v844 = vlaneseq
        %v845 = vshrl.u32 %v844, 7
        %v846 = vsub.s32 %v843, %v845
        %v847 = vrot.slane %v833, %v846
        %v848 = vcombine.low %v792, %v808
        %v849 = vcombine.high %v792, %v808
        %v851 = vunpack.c.l.s4 1934713408
        %v852 = vunpack.c.0.s8 %v851
        %v853 = vlaneseq
        %v854 = vshrl.u32 %v853, 7
        %v855 = vsub.s32 %v852, %v854
        %v856 = vrot.slane %v848, %v855
        %v858 = vunpack.c.l.s4 1934713408
        %v859 = vunpack.c.0.s8 %v858
        %v860 = vlaneseq
        %v861 = vshrl.u32 %v860, 7
        %v862 = vsub.s32 %v859, %v861
        %v863 = vrot.slane %v849, %v862
        %v864 = vcombine.low %v799, %v815
        %v865 = vcombine.high %v799, %v815
        %v867 = vunpack.c.l.s4 1934713408
        %v868 = vunpack.c.0.s8 %v867
        %v869 = vlaneseq
        %v870 = vshrl.u32 %v869, 7
        %v871 = vsub.s32 %v868, %v870
        %v872 = vrot.slane %v864, %v871
        %v874 = vunpack.c.l.s4 1934713408
        %v875 = vunpack.c.0.s8 %v874
        %v876 = vlaneseq
        %v877 = vshrl.u32 %v876, 7
        %v878 = vsub.s32 %v875, %v877
        %v879 = vrot.slane %v865, %v878
        %v880 = vcombine.low %v824, %v856
        %v881 = vcombine.high %v824, %v856
        %v882 = vcombine.low %v831, %v863
        %v883 = vcombine.high %v831, %v863
        %v884 = vcombine.low %v840, %v872
        %v885 = vcombine.high %v840, %v872
        %v886 = vcombine.low %v847, %v879
        %v887 = vcombine.high %v847, %v879
        %vm888 = vcmask 392192
        %889 = vst.msk [vmem:[%s427] sm:$0xff] %vm888, %v880
        %890 = vst.msk [vmem:[%s427 + $0x8] sm:$0xff] %vm888, %v881
        %891 = vst.msk [vmem:[%s427 + $0x10] sm:$0xff] %vm888, %v882
        %892 = vst.msk [vmem:[%s427 + $0x18] sm:$0xff] %vm888, %v883
        %893 = vst.msk [vmem:[%s427 + $0x20] sm:$0xff] %vm888, %v884
        %894 = vst.msk [vmem:[%s427 + $0x28] sm:$0xff] %vm888, %v885
        %895 = vst.msk [vmem:[%s427 + $0x30] sm:$0xff] %vm888, %v886
        %896 = vst.msk [vmem:[%s427 + $0x38] sm:$0xff] %vm888, %v887
        %s897 = smul.u32 8, %s22
        %p898 = scmp.lt.s32.totalorder %s21, 1
        %s899 = scalar_select %p898, %s21, 1
        %p900 = scmp.lt.s32.totalorder %s897, 15
        %s901 = scalar_select %p900, %s897, 15
        %s902 = smul.addr %s899, 16
        %s903 = sadd.s32 %s901, %s902
        %s904 = smul.addr %s903, 8
        %s905 = scalar_lea.vmem %s6, %s904
        // Predicated region
        $region121: #{temporal_attention.2} parent=111 // pred_check
          %p906 = pneg %p189
        $region122: #{temporal_attention.2} parent=111 // pred_check_branch
          %908 = sbr.rel (%p906) target = $region124
        $region123: #{temporal_attention.2} parent=111 // pred_region
          %s909 = smul.u32 8, %s22
        $region124: #{temporal_attention.2} parent=111 // pred_fallthru
          _
      $region112: #{temporal_attention.2} parent=5 // pred_fallthru
        _
      %p910 = scmp.le.s32.totalorder 2, %s12
      // Predicated region
      $region125: #{temporal_attention.2} parent=5 // pred_check
        %p911 = pneg %p910
      $region126: #{temporal_attention.2} parent=5 // pred_check_branch
        %913 = sbr.rel (%p911) target = $region128
      $region127: #{temporal_attention.2} parent=5 // pred_region
        %s914 = ssub.s32 %s12, 2
        // Predicated region
        $region129: #{temporal_attention.2} parent=127 // pred_check
          %p915 = pneg %p195
        $region130: #{temporal_attention.2} parent=127 // pred_check_branch
          %917 = sbr.rel (%p915) target = $region132
        $region131: #{temporal_attention.2} parent=127 // pred_region
          %s918 = smul.u32 8, %s24
          %p919 = scmp.lt.s32.totalorder %s23, 1
          %s920 = scalar_select %p919, %s23, 1
          %p921 = scmp.lt.s32.totalorder %s918, 15
          %s922 = scalar_select %p921, %s918, 15
          %s923 = smul.addr %s920, 16
          %s924 = sadd.s32 %s922, %s923
          %s925 = smul.addr %s924, 8
          %s926 = scalar_lea.vmem %s6, %s925
        $region132: #{temporal_attention.2} parent=127 // pred_fallthru
          _
      $region128: #{temporal_attention.2} parent=5 // pred_fallthru
        _
    $region6: #{temporal_attention.2} parent=1 // loop_footer
      %s16 = sadd.s32 1, %s12
    $region7: #{temporal_attention.2} parent=1 // loop_footer_branch
      %11 = sbr.rel target = $region3
    $region8: #{temporal_attention.2} parent=1 // loop_exit
      _

// kernel: temporal_attention.3
$region0: #{temporal_attention.3}
  #allocation0 [shape = 'u32[]', space=smem, size = 0x4, offset = 0x4, fixed_abs, tag = 'smem constant byte address 0x4 - core index']
  #allocation1 [shape = 'u32[144,128]{1,0:T(1,128)}', space=vmem, size = 0x12000, scoped, tag = 'internal scratch']
  %s0 = inlined_call_operand.vmem [shape: f32[2,16,8,48], index: 0, kind: input, shape index: {}]
  %s1 = inlined_call_operand.vmem [shape: f32[8,8], index: 1, kind: input, shape index: {}]
  %s2 = inlined_call_operand.vmem [shape: f32[16,16], index: 2, kind: input, shape index: {}]
  %s3 = inlined_call_operand.vmem [shape: f32[1,16], index: 3, kind: input, shape index: {}]
  %s4 = inlined_call_operand.vmem [shape: f32[1,16], index: 4, kind: input, shape index: {}]
  %s5 = inlined_call_operand.hbm [shape: f32[2,8,16,16], index: 5, kind: output, shape index: {}]
  %s6 = sld [smem:[#allocation0]]
  $region53: #{temporal_attention.3} parent=0
    _
  %s8 = ssub.s32 1, %s6
  %s9 = scalar_select 0, %s8, %s6
  $region1: #{temporal_attention.3} parent=0
    #allocation2 [shape = 'u8[65536]{0}', space=vmem, size = 0x10000, scoped, tag = 'output window, operand 0']
    #allocation3 [shape = 's32[2]{0}', space=sflag, size = 0x8, scoped, tag = 'scoped memory for temporal_attention.3']
    %10 = vsyncpa [#allocation3], 0
    %s11 = scalar_lea.sflag [#allocation3], 1
    %12 = vsyncpa %s11, 0
    loop: start=0, step=1, limit=6
    $region2: #{temporal_attention.3} parent=1 // loop_pre_header
      _
    $region3: #{temporal_attention.3} parent=1 // loop_header
      %s14 = sphi 0, %s18
      %p15 = scmp.ge.s32.totalorder %s14, 6
      %s21 = sphi 0, %s33
      %s22 = sphi 0, %s29
      %s23 = sphi 0, %s21
      %s24 = sphi 0, %s22
      %s25 = sphi 0, %s23
      %s26 = sphi 0, %s24
      %s38 = sphi 0, %s40
      %s41 = sphi 0, %s38
      %s42 = sphi 0, %s41
      %s58 = sphi 0, %s42
      %s62 = sphi 0, %s62
      %s64 = sphi 0, %s62
      %s65 = sphi 0, %s64
      %s79 = sphi 0, %s65
      %s83 = sphi 0, %s83
      %s85 = sphi 0, %s83
      %s86 = sphi 0, %s85
      %s100 = sphi 0, %s86
      %s104 = sphi 0, %s104
      %s106 = sphi 0, %s104
      %s107 = sphi 0, %s106
      %s121 = sphi 0, %s107
      %s125 = sphi 0, %s125
      %s127 = sphi 0, %s125
      %s128 = sphi 0, %s127
      %s142 = sphi 0, %s128
      %s150 = sphi 0, %s152
      %s153 = sphi 0, %s150
      %s154 = sphi 0, %s153
      %s170 = sphi 0, %s154
    $region4: #{temporal_attention.3} parent=1 // loop_header_branch
      %17 = sbr.rel (%p15) target = $region8
    $region5: #{temporal_attention.3} parent=1 // loop_body
      %s19 = ssub.s32 %s14, 1
      %s20 = ssub.s32 %s14, 2
      %s27 = sadd.s32 1, %s22
      %p28 = scmp.ge.s32.totalorder %s27, 2
      %s29 = scalar_select %p28, 0, %s27
      %s30 = sadd.s32 1, %s21
      %s31 = scalar_select %p28, %s30, %s21
      %p32 = scmp.ge.s32.totalorder %s31, 2
      %s33 = scalar_select %p32, 0, %s31
      %s34 = ssub.s32 %s21, %s33
      %s35 = ssub.s32 %s22, %s29
      %s36 = sor.u32 %s34, %s35
      %p37 = scmp.eq.s32.totalorder %s36, 0
      %s39 = sadd.s32 %s38, 1
      %s40 = scalar_select %p37, %s38, %s39
      %p43 = pneg %p37
      %p44 = scmp.eq.s32.totalorder %s14, 3
      %p45 = por %p43, %p44
      %p46 = scmp.ne.s32.totalorder %s38, %s41
      %p47 = scmp.eq.s32.totalorder %s14, 0
      %p48 = por %p46, %p47
      %p49 = scmp.ne.s32.totalorder %s38, %s41
      %p50 = scmp.eq.s32.totalorder %s19, 3
      %p51 = por %p49, %p50
      %p52 = scmp.ne.s32.totalorder %s41, %s42
      %p53 = scmp.eq.s32.totalorder %s19, 0
      %p54 = por %p52, %p53
      %p55 = scmp.ne.s32.totalorder %s41, %s42
      %p56 = scmp.eq.s32.totalorder %s20, 3
      %p57 = por %p55, %p56
      %p59 = scmp.ne.s32.totalorder %s42, %s58
      %p60 = scmp.eq.s32.totalorder %s20, 0
      %p61 = por %p59, %p60
      %s63 = sadd.s32 %s62, 1
      %p66 = scmp.eq.s32.totalorder %s14, 3
      %p67 = scmp.ne.s32.totalorder %s62, %s64
      %p68 = scmp.eq.s32.totalorder %s14, 0
      %p69 = por %p67, %p68
      %p70 = scmp.ne.s32.totalorder %s62, %s64
      %p71 = scmp.eq.s32.totalorder %s19, 3
      %p72 = por %p70, %p71
      %p73 = scmp.ne.s32.totalorder %s64, %s65
      %p74 = scmp.eq.s32.totalorder %s19, 0
      %p75 = por %p73, %p74
      %p76 = scmp.ne.s32.totalorder %s64, %s65
      %p77 = scmp.eq.s32.totalorder %s20, 3
      %p78 = por %p76, %p77
      %p80 = scmp.ne.s32.totalorder %s65, %s79
      %p81 = scmp.eq.s32.totalorder %s20, 0
      %p82 = por %p80, %p81
      %s84 = sadd.s32 %s83, 1
      %p87 = scmp.eq.s32.totalorder %s14, 3
      %p88 = scmp.ne.s32.totalorder %s83, %s85
      %p89 = scmp.eq.s32.totalorder %s14, 0
      %p90 = por %p88, %p89
      %p91 = scmp.ne.s32.totalorder %s83, %s85
      %p92 = scmp.eq.s32.totalorder %s19, 3
      %p93 = por %p91, %p92
      %p94 = scmp.ne.s32.totalorder %s85, %s86
      %p95 = scmp.eq.s32.totalorder %s19, 0
      %p96 = por %p94, %p95
      %p97 = scmp.ne.s32.totalorder %s85, %s86
      %p98 = scmp.eq.s32.totalorder %s20, 3
      %p99 = por %p97, %p98
      %p101 = scmp.ne.s32.totalorder %s86, %s100
      %p102 = scmp.eq.s32.totalorder %s20, 0
      %p103 = por %p101, %p102
      %s105 = sadd.s32 %s104, 1
      %p108 = scmp.eq.s32.totalorder %s14, 3
      %p109 = scmp.ne.s32.totalorder %s104, %s106
      %p110 = scmp.eq.s32.totalorder %s14, 0
      %p111 = por %p109, %p110
      %p112 = scmp.ne.s32.totalorder %s104, %s106
      %p113 = scmp.eq.s32.totalorder %s19, 3
      %p114 = por %p112, %p113
      %p115 = scmp.ne.s32.totalorder %s106, %s107
      %p116 = scmp.eq.s32.totalorder %s19, 0
      %p117 = por %p115, %p116
      %p118 = scmp.ne.s32.totalorder %s106, %s107
      %p119 = scmp.eq.s32.totalorder %s20, 3
      %p120 = por %p118, %p119
      %p122 = scmp.ne.s32.totalorder %s107, %s121
      %p123 = scmp.eq.s32.totalorder %s20, 0
      %p124 = por %p122, %p123
      %s126 = sadd.s32 %s125, 1
      %p129 = scmp.eq.s32.totalorder %s14, 3
      %p130 = scmp.ne.s32.totalorder %s125, %s127
      %p131 = scmp.eq.s32.totalorder %s14, 0
      %p132 = por %p130, %p131
      %p133 = scmp.ne.s32.totalorder %s125, %s127
      %p134 = scmp.eq.s32.totalorder %s19, 3
      %p135 = por %p133, %p134
      %p136 = scmp.ne.s32.totalorder %s127, %s128
      %p137 = scmp.eq.s32.totalorder %s19, 0
      %p138 = por %p136, %p137
      %p139 = scmp.ne.s32.totalorder %s127, %s128
      %p140 = scmp.eq.s32.totalorder %s20, 3
      %p141 = por %p139, %p140
      %p143 = scmp.ne.s32.totalorder %s128, %s142
      %p144 = scmp.eq.s32.totalorder %s20, 0
      %p145 = por %p143, %p144
      %s146 = ssub.s32 %s21, %s33
      %s147 = ssub.s32 %s22, %s29
      %s148 = sor.u32 %s146, %s147
      %p149 = scmp.eq.s32.totalorder %s148, 0
      %s151 = sadd.s32 %s150, 1
      %s152 = scalar_select %p149, %s150, %s151
      %p155 = pneg %p149
      %p156 = scmp.eq.s32.totalorder %s14, 3
      %p157 = por %p155, %p156
      %p158 = scmp.ne.s32.totalorder %s150, %s153
      %p159 = scmp.eq.s32.totalorder %s14, 0
      %p160 = por %p158, %p159
      %p161 = scmp.ne.s32.totalorder %s150, %s153
      %p162 = scmp.eq.s32.totalorder %s19, 3
      %p163 = por %p161, %p162
      %p164 = scmp.ne.s32.totalorder %s153, %s154
      %p165 = scmp.eq.s32.totalorder %s19, 0
      %p166 = por %p164, %p165
      %p167 = scmp.ne.s32.totalorder %s153, %s154
      %p168 = scmp.eq.s32.totalorder %s20, 3
      %p169 = por %p167, %p168
      %p171 = scmp.ne.s32.totalorder %s154, %s170
      %p172 = scmp.eq.s32.totalorder %s20, 0
      %p173 = por %p171, %p172
      %p174 = scmp.le.s32.totalorder 1, %s14
      %p175 = scmp.lt.s32.totalorder %s14, 5
      %p176 = pnand %p174, %p175
      %p177 = pneg %p176
      // Predicated region
      $region9: #{temporal_attention.3} parent=5 // pred_check
        _
      $region10: #{temporal_attention.3} parent=5 // pred_check_branch
        %179 = sbr.rel (%p176) target = $region12
      $region11: #{temporal_attention.3} parent=5 // pred_region
        %s180 = ssub.s32 %s14, 1
        // Predicated region
        $region13: #{temporal_attention.3} parent=11 // pred_check
          %p181 = pneg %p75
        $region14: #{temporal_attention.3} parent=11 // pred_check_branch
          %183 = sbr.rel (%p181) target = $region16
        $region15: #{temporal_attention.3} parent=11 // pred_region
          _
        $region16: #{temporal_attention.3} parent=11 // pred_fallthru
          _
        // Predicated region
        $region17: #{temporal_attention.3} parent=11 // pred_check
          %p184 = pneg %p96
        $region18: #{temporal_attention.3} parent=11 // pred_check_branch
          %186 = sbr.rel (%p184) target = $region20
        $region19: #{temporal_attention.3} parent=11 // pred_region
          _
        $region20: #{temporal_attention.3} parent=11 // pred_fallthru
          _
        // Predicated region
        $region21: #{temporal_attention.3} parent=11 // pred_check
          %p187 = pneg %p117
        $region22: #{temporal_attention.3} parent=11 // pred_check_branch
          %189 = sbr.rel (%p187) target = $region24
        $region23: #{temporal_attention.3} parent=11 // pred_region
          _
        $region24: #{temporal_attention.3} parent=11 // pred_fallthru
          _
        // Predicated region
        $region25: #{temporal_attention.3} parent=11 // pred_check
          %p190 = pneg %p138
        $region26: #{temporal_attention.3} parent=11 // pred_check_branch
          %192 = sbr.rel (%p190) target = $region28
        $region27: #{temporal_attention.3} parent=11 // pred_region
          _
        $region28: #{temporal_attention.3} parent=11 // pred_fallthru
          _
      $region12: #{temporal_attention.3} parent=5 // pred_fallthru
        _
      %p193 = scmp.lt.s32.totalorder %s14, 4
      // Predicated region
      $region29: #{temporal_attention.3} parent=5 // pred_check
        %p194 = pneg %p193
      $region30: #{temporal_attention.3} parent=5 // pred_check_branch
        %196 = sbr.rel (%p194) target = $region32
      $region31: #{temporal_attention.3} parent=5 // pred_region
        // Predicated region
        $region33: #{temporal_attention.3} parent=31 // pred_check
          %p197 = pneg %p48
        $region34: #{temporal_attention.3} parent=31 // pred_check_branch
          %199 = sbr.rel (%p197) target = $region36
        $region35: #{temporal_attention.3} parent=31 // pred_region
          %s200 = smul.u32 8, %s22
          %p201 = scmp.lt.s32.totalorder %s21, 1
          %s202 = scalar_select %p201, %s21, 1
          %p203 = scmp.lt.s32.totalorder %s200, 15
          %s204 = scalar_select %p203, %s200, 15
          %s205 = smul.addr %s202, 16
          %s206 = sadd.s32 %s204, %s205
          %s207 = smul.addr %s206, 8
          %s208 = scalar_lea.vmem %s0, %s207
          %s209 = smul.u32 8, %s22
        $region36: #{temporal_attention.3} parent=31 // pred_fallthru
          _
      $region32: #{temporal_attention.3} parent=5 // pred_fallthru
        _
      %p210 = scmp.le.s32.totalorder 1, %s14
      %p211 = scmp.lt.s32.totalorder %s14, 5
      %p212 = pnand %p210, %p211
      %p213 = pneg %p212
      // Predicated region
      $region37: #{temporal_attention.3} parent=5 // pred_check
        _
      $region38: #{temporal_attention.3} parent=5 // pred_check_branch
        %215 = sbr.rel (%p212) target = $region40
      $region39: #{temporal_attention.3} parent=5 // pred_region
        %s216 = ssub.s32 %s14, 1
        %s217 = smul.u32 8, %s24
        %p218 = scmp.lt.s32.totalorder %s23, 1
        %s219 = scalar_select %p218, %s23, 1
        %p220 = scmp.lt.s32.totalorder %s217, 15
        %s221 = scalar_select %p220, %s217, 15
        %s222 = smul.addr %s219, 16
        %s223 = sadd.s32 %s221, %s222
        %s224 = smul.addr %s223, 8
        %s225 = scalar_lea.vmem %s0, %s224
        %p226 = pneg %p54
        %p227 = pneg %p51
        %p228 = pneg %p75
        %p229 = pneg %p72
        %p230 = pneg %p96
        %p231 = pneg %p93
        %p232 = pneg %p117
        %p233 = pneg %p114
        %p234 = pneg %p138
        %p235 = pneg %p135
        %p236 = pneg %p166
        %p237 = pneg %p163
        %s238 = sand.u32 %s153, 1
        %s239 = scalar_lea.sflag [#allocation3], %s238
        %s240 = sand.u32 %s153, 1
        %s241 = smul.addr %s240, 64
        %s242 = scalar_lea.vmem [#allocation2], %s241
        %s243 = smul.u32 8, %s24
        %p244 = scmp.lt.s32.totalorder %s23, 1
        %s245 = scalar_select %p244, %s23, 1
        %p246 = scmp.lt.s32.totalorder %s243, 15
        %s247 = scalar_select %p246, %s243, 15
        %s248 = smul.addr %s245, 16
        %s249 = sadd.s32 %s247, %s248
        %s250 = smul.addr %s249, 8
        %s251 = scalar_lea.vmem %s0, %s250
        %s252 = smul.u32 8, %s24
        %v253 = vld [vmem:[%s251] sm:$0xff]
        %v254 = vld [vmem:[%s251 + $0x8] sm:$0xff]
        %v255 = vld [vmem:[%s251 + $0x10] sm:$0xff]
        %v256 = vld [vmem:[%s251 + $0x18] sm:$0xff]
        %v257 = vld [vmem:[%s251 + $0x20] sm:$0xff]
        %v258 = vld [vmem:[%s251 + $0x28] sm:$0xff]
        %v259 = vld [vmem:[%s251 + $0x30] sm:$0xff]
        %v260 = vld [vmem:[%s251 + $0x38] sm:$0xff]
        %v261 = vld [vmem:[%s1] sm:$0xff]
        %263 = vrot.lane.b32.xlu0 %v253, 112
        %v264 = vpop.permute.xlu0 %263
        %vm265 = vcmask 64512
        %v266 = vsel %vm265, %v253, 0
        %v268 = vsel %vm265, %v264, 0
        %270 = vmatprep.subr.mxu0 0.0
        %271 = vmatpush1.xpose.msra.mxu0 0.0
        %272 = vmatprep.subr.mxu0 0.0
        %273 = vmatpush1.xpose.msra.mxu0 0.0
        %274 = vmatprep.subr.mxu0 0.0
        %275 = vmatpush1.xpose.msra.mxu0 0.0
        %276 = vmatprep.subr.mxu0 0.0
        %277 = vmatpush1.xpose.msra.mxu0 0.0
        %278 = vmatprep.subr.mxu0 0.0
        %279 = vmatpush1.xpose.msra.mxu0 0.0
        %280 = vmatprep.subr.mxu0 0.0
        %281 = vmatpush1.xpose.msra.mxu0 0.0
        %282 = vmatprep.subr.mxu0 0.0
        %283 = vmatpush1.xpose.msra.mxu0 0.0
        %284 = vmatprep.subr.mxu0 0.0
        %285 = vmatpush1.xpose.msra.mxu0 0.0
        %286 = vmatprep.subr.mxu0 0.0
        %287 = vmatpush1.xpose.msra.mxu0 0.0
        %288 = vmatprep.subr.mxu0 0.0
        %289 = vmatpush1.xpose.msra.mxu0 0.0
        %290 = vmatprep.subr.mxu0 0.0
        %291 = vmatpush1.xpose.msra.mxu0 0.0
        %292 = vmatprep.subr.mxu0 0.0
        %293 = vmatpush1.xpose.msra.mxu0 0.0
        %294 = vmatprep.subr.mxu0 0.0
        %295 = vmatpush1.xpose.msra.mxu0 0.0
        %296 = vmatprep.subr.mxu0 0.0
        %297 = vmatpush1.xpose.msra.mxu0 0.0
        %298 = vmatprep.subr.mxu0 0.0
        %299 = vmatpush1.xpose.msra.mxu0 0.0
        %300 = vmatprep.subr.mxu0 0.0
        %301 = vmatpush1.xpose.msra.mxu0 %v268
        %302 = vmatprep.subr.mxu0 0.0
        %303 = vmatpush2.xpose.msra.mxu0 0.0
        %304 = vmatprep.subr.mxu0 0.0
        %305 = vmatpush2.xpose.msra.mxu0 0.0
        %306 = vmatprep.subr.mxu0 0.0
        %307 = vmatpush2.xpose.msra.mxu0 0.0
        %308 = vmatprep.subr.mxu0 0.0
        %309 = vmatpush2.xpose.msra.mxu0 0.0
        %310 = vmatprep.subr.mxu0 0.0
        %311 = vmatpush2.xpose.msra.mxu0 0.0
        %312 = vmatprep.subr.mxu0 0.0
        %313 = vmatpush2.xpose.msra.mxu0 0.0
        %314 = vmatprep.subr.mxu0 0.0
        %315 = vmatpush2.xpose.msra.mxu0 0.0
        %316 = vmatprep.subr.mxu0 0.0
        %317 = vmatpush2.xpose.msra.mxu0 0.0
        %318 = vmatprep.subr.mxu0 0.0
        %319 = vmatpush2.xpose.msra.mxu0 0.0
        %320 = vmatprep.subr.mxu0 0.0
        %321 = vmatpush2.xpose.msra.mxu0 0.0
        %322 = vmatprep.subr.mxu0 0.0
        %323 = vmatpush2.xpose.msra.mxu0 0.0
        %324 = vmatprep.subr.mxu0 0.0
        %325 = vmatpush2.xpose.msra.mxu0 0.0
        %326 = vmatprep.subr.mxu0 0.0
        %327 = vmatpush2.xpose.msra.mxu0 0.0
        %328 = vmatprep.subr.mxu0 0.0
        %329 = vmatpush2.xpose.msra.mxu0 0.0
        %330 = vmatprep.subr.mxu0 0.0
        %331 = vmatpush2.xpose.msra.mxu0 0.0
        %332 = vmatprep.subr.mxu0 0.0
        %333 = vmatpush2.xpose.msra.mxu0 0.0
        %334 = vmatprep.mubr.f32.mxu0 0.0
        %335 = vmatmul.mubr.f32.gmra.mxu0 %v266
        %v336 = vpop.f32.mrf.mxu0
        %v337 = vadd.f32 0.0, %v336
        %v338 = vpop.f32.mrf.mxu0
        %339 = vdwg.mxu0
        %341 = vrot.lane.b32.xlu0 %v254, 112
        %v342 = vpop.permute.xlu0 %341
        %v343 = vsel %vm265, %v254, 0
        %v345 = vsel %vm265, %v342, 0
        %347 = vmatprep.subr.mxu0 0.0
        %348 = vmatpush1.xpose.msra.mxu0 0.0
        %349 = vmatprep.subr.mxu0 0.0
        %350 = vmatpush1.xpose.msra.mxu0 0.0
        %351 = vmatprep.subr.mxu0 0.0
        %352 = vmatpush1.xpose.msra.mxu0 0.0
        %353 = vmatprep.subr.mxu0 0.0
        %354 = vmatpush1.xpose.msra.mxu0 0.0
        %355 = vmatprep.subr.mxu0 0.0
        %356 = vmatpush1.xpose.msra.mxu0 0.0
        %357 = vmatprep.subr.mxu0 0.0
        %358 = vmatpush1.xpose.msra.mxu0 0.0
        %359 = vmatprep.subr.mxu0 0.0
        %360 = vmatpush1.xpose.msra.mxu0 0.0
        %361 = vmatprep.subr.mxu0 0.0
        %362 = vmatpush1.xpose.msra.mxu0 0.0
        %363 = vmatprep.subr.mxu0 0.0
        %364 = vmatpush1.xpose.msra.mxu0 0.0
        %365 = vmatprep.subr.mxu0 0.0
        %366 = vmatpush1.xpose.msra.mxu0 0.0
        %367 = vmatprep.subr.mxu0 0.0
        %368 = vmatpush1.xpose.msra.mxu0 0.0
        %369 = vmatprep.subr.mxu0 0.0
        %370 = vmatpush1.xpose.msra.mxu0 0.0
        %371 = vmatprep.subr.mxu0 0.0
        %372 = vmatpush1.xpose.msra.mxu0 0.0
        %373 = vmatprep.subr.mxu0 0.0
        %374 = vmatpush1.xpose.msra.mxu0 0.0
        %375 = vmatprep.subr.mxu0 0.0
        %376 = vmatpush1.xpose.msra.mxu0 0.0
        %377 = vmatprep.subr.mxu0 0.0
        %378 = vmatpush1.xpose.msra.mxu0 %v345
        %379 = vmatprep.subr.mxu0 0.0
        %380 = vmatpush2.xpose.msra.mxu0 0.0
        %381 = vmatprep.subr.mxu0 0.0
        %382 = vmatpush2.xpose.msra.mxu0 0.0
        %383 = vmatprep.subr.mxu0 0.0
        %384 = vmatpush2.xpose.msra.mxu0 0.0
        %385 = vmatprep.subr.mxu0 0.0
        %386 = vmatpush2.xpose.msra.mxu0 0.0
        %387 = vmatprep.subr.mxu0 0.0
        %388 = vmatpush2.xpose.msra.mxu0 0.0
        %389 = vmatprep.subr.mxu0 0.0
        %390 = vmatpush2.xpose.msra.mxu0 0.0
        %391 = vmatprep.subr.mxu0 0.0
        %392 = vmatpush2.xpose.msra.mxu0 0.0
        %393 = vmatprep.subr.mxu0 0.0
        %394 = vmatpush2.xpose.msra.mxu0 0.0
        %395 = vmatprep.subr.mxu0 0.0
        %396 = vmatpush2.xpose.msra.mxu0 0.0
        %397 = vmatprep.subr.mxu0 0.0
        %398 = vmatpush2.xpose.msra.mxu0 0.0
        %399 = vmatprep.subr.mxu0 0.0
        %400 = vmatpush2.xpose.msra.mxu0 0.0
        %401 = vmatprep.subr.mxu0 0.0
        %402 = vmatpush2.xpose.msra.mxu0 0.0
        %403 = vmatprep.subr.mxu0 0.0
        %404 = vmatpush2.xpose.msra.mxu0 0.0
        %405 = vmatprep.subr.mxu0 0.0
        %406 = vmatpush2.xpose.msra.mxu0 0.0
        %407 = vmatprep.subr.mxu0 0.0
        %408 = vmatpush2.xpose.msra.mxu0 0.0
        %409 = vmatprep.subr.mxu0 0.0
        %410 = vmatpush2.xpose.msra.mxu0 0.0
        %411 = vmatprep.mubr.f32.mxu0 0.0
        %412 = vmatmul.mubr.f32.gmra.mxu0 %v343
        %v413 = vpop.f32.mrf.mxu0
        %v414 = vadd.f32 0.0, %v413
        %v415 = vpop.f32.mrf.mxu0
        %416 = vdwg.mxu0
        %418 = vrot.lane.b32.xlu0 %v255, 112
        %v419 = vpop.permute.xlu0 %418
        %v420 = vsel %vm265, %v255, 0
        %v422 = vsel %vm265, %v419, 0
        %424 = vmatprep.subr.mxu0 0.0
        %425 = vmatpush1.xpose.msra.mxu0 0.0
        %426 = vmatprep.subr.mxu0 0.0
        %427 = vmatpush1.xpose.msra.mxu0 0.0
        %428 = vmatprep.subr.mxu0 0.0
        %429 = vmatpush1.xpose.msra.mxu0 0.0
        %430 = vmatprep.subr.mxu0 0.0
        %431 = vmatpush1.xpose.msra.mxu0 0.0
        %432 = vmatprep.subr.mxu0 0.0
        %433 = vmatpush1.xpose.msra.mxu0 0.0
        %434 = vmatprep.subr.mxu0 0.0
        %435 = vmatpush1.xpose.msra.mxu0 0.0
        %436 = vmatprep.subr.mxu0 0.0
        %437 = vmatpush1.xpose.msra.mxu0 0.0
        %438 = vmatprep.subr.mxu0 0.0
        %439 = vmatpush1.xpose.msra.mxu0 0.0
        %440 = vmatprep.subr.mxu0 0.0
        %441 = vmatpush1.xpose.msra.mxu0 0.0
        %442 = vmatprep.subr.mxu0 0.0
        %443 = vmatpush1.xpose.msra.mxu0 0.0
        %444 = vmatprep.subr.mxu0 0.0
        %445 = vmatpush1.xpose.msra.mxu0 0.0
        %446 = vmatprep.subr.mxu0 0.0
        %447 = vmatpush1.xpose.msra.mxu0 0.0
        %448 = vmatprep.subr.mxu0 0.0
        %449 = vmatpush1.xpose.msra.mxu0 0.0
        %450 = vmatprep.subr.mxu0 0.0
        %451 = vmatpush1.xpose.msra.mxu0 0.0
        %452 = vmatprep.subr.mxu0 0.0
        %453 = vmatpush1.xpose.msra.mxu0 0.0
        %454 = vmatprep.subr.mxu0 0.0
        %455 = vmatpush1.xpose.msra.mxu0 %v422
        %456 = vmatprep.subr.mxu0 0.0
        %457 = vmatpush2.xpose.msra.mxu0 0.0
        %458 = vmatprep.subr.mxu0 0.0
        %459 = vmatpush2.xpose.msra.mxu0 0.0
        %460 = vmatprep.subr.mxu0 0.0
        %461 = vmatpush2.xpose.msra.mxu0 0.0
        %462 = vmatprep.subr.mxu0 0.0
        %463 = vmatpush2.xpose.msra.mxu0 0.0
        %464 = vmatprep.subr.mxu0 0.0
        %465 = vmatpush2.xpose.msra.mxu0 0.0
        %466 = vmatprep.subr.mxu0 0.0
        %467 = vmatpush2.xpose.msra.mxu0 0.0
        %468 = vmatprep.subr.mxu0 0.0
        %469 = vmatpush2.xpose.msra.mxu0 0.0
        %470 = vmatprep.subr.mxu0 0.0
        %471 = vmatpush2.xpose.msra.mxu0 0.0
        %472 = vmatprep.subr.mxu0 0.0
        %473 = vmatpush2.xpose.msra.mxu0 0.0
        %474 = vmatprep.subr.mxu0 0.0
        %475 = vmatpush2.xpose.msra.mxu0 0.0
        %476 = vmatprep.subr.mxu0 0.0
        %477 = vmatpush2.xpose.msra.mxu0 0.0
        %478 = vmatprep.subr.mxu0 0.0
        %479 = vmatpush2.xpose.msra.mxu0 0.0
        %480 = vmatprep.subr.mxu0 0.0
        %481 = vmatpush2.xpose.msra.mxu0 0.0
        %482 = vmatprep.subr.mxu0 0.0
        %483 = vmatpush2.xpose.msra.mxu0 0.0
        %484 = vmatprep.subr.mxu0 0.0
        %485 = vmatpush2.xpose.msra.mxu0 0.0
        %486 = vmatprep.subr.mxu0 0.0
        %487 = vmatpush2.xpose.msra.mxu0 0.0
        %488 = vmatprep.mubr.f32.mxu0 0.0
        %489 = vmatmul.mubr.f32.gmra.mxu0 %v420
        %v490 = vpop.f32.mrf.mxu0
        %v491 = vadd.f32 0.0, %v490
        %v492 = vpop.f32.mrf.mxu0
        %493 = vdwg.mxu0
        %495 = vrot.lane.b32.xlu0 %v256, 112
        %v496 = vpop.permute.xlu0 %495
        %v497 = vsel %vm265, %v256, 0
        %v499 = vsel %vm265, %v496, 0
        %501 = vmatprep.subr.mxu0 0.0
        %502 = vmatpush1.xpose.msra.mxu0 0.0
        %503 = vmatprep.subr.mxu0 0.0
        %504 = vmatpush1.xpose.msra.mxu0 0.0
        %505 = vmatprep.subr.mxu0 0.0
        %506 = vmatpush1.xpose.msra.mxu0 0.0
        %507 = vmatprep.subr.mxu0 0.0
        %508 = vmatpush1.xpose.msra.mxu0 0.0
        %509 = vmatprep.subr.mxu0 0.0
        %510 = vmatpush1.xpose.msra.mxu0 0.0
        %511 = vmatprep.subr.mxu0 0.0
        %512 = vmatpush1.xpose.msra.mxu0 0.0
        %513 = vmatprep.subr.mxu0 0.0
        %514 = vmatpush1.xpose.msra.mxu0 0.0
        %515 = vmatprep.subr.mxu0 0.0
        %516 = vmatpush1.xpose.msra.mxu0 0.0
        %517 = vmatprep.subr.mxu0 0.0
        %518 = vmatpush1.xpose.msra.mxu0 0.0
        %519 = vmatprep.subr.mxu0 0.0
        %520 = vmatpush1.xpose.msra.mxu0 0.0
        %521 = vmatprep.subr.mxu0 0.0
        %522 = vmatpush1.xpose.msra.mxu0 0.0
        %523 = vmatprep.subr.mxu0 0.0
        %524 = vmatpush1.xpose.msra.mxu0 0.0
        %525 = vmatprep.subr.mxu0 0.0
        %526 = vmatpush1.xpose.msra.mxu0 0.0
        %527 = vmatprep.subr.mxu0 0.0
        %528 = vmatpush1.xpose.msra.mxu0 0.0
        %529 = vmatprep.subr.mxu0 0.0
        %530 = vmatpush1.xpose.msra.mxu0 0.0
        %531 = vmatprep.subr.mxu0 0.0
        %532 = vmatpush1.xpose.msra.mxu0 %v499
        %533 = vmatprep.subr.mxu0 0.0
        %534 = vmatpush2.xpose.msra.mxu0 0.0
        %535 = vmatprep.subr.mxu0 0.0
        %536 = vmatpush2.xpose.msra.mxu0 0.0
        %537 = vmatprep.subr.mxu0 0.0
        %538 = vmatpush2.xpose.msra.mxu0 0.0
        %539 = vmatprep.subr.mxu0 0.0
        %540 = vmatpush2.xpose.msra.mxu0 0.0
        %541 = vmatprep.subr.mxu0 0.0
        %542 = vmatpush2.xpose.msra.mxu0 0.0
        %543 = vmatprep.subr.mxu0 0.0
        %544 = vmatpush2.xpose.msra.mxu0 0.0
        %545 = vmatprep.subr.mxu0 0.0
        %546 = vmatpush2.xpose.msra.mxu0 0.0
        %547 = vmatprep.subr.mxu0 0.0
        %548 = vmatpush2.xpose.msra.mxu0 0.0
        %549 = vmatprep.subr.mxu0 0.0
        %550 = vmatpush2.xpose.msra.mxu0 0.0
        %551 = vmatprep.subr.mxu0 0.0
        %552 = vmatpush2.xpose.msra.mxu0 0.0
        %553 = vmatprep.subr.mxu0 0.0
        %554 = vmatpush2.xpose.msra.mxu0 0.0
        %555 = vmatprep.subr.mxu0 0.0
        %556 = vmatpush2.xpose.msra.mxu0 0.0
        %557 = vmatprep.subr.mxu0 0.0
        %558 = vmatpush2.xpose.msra.mxu0 0.0
        %559 = vmatprep.subr.mxu0 0.0
        %560 = vmatpush2.xpose.msra.mxu0 0.0
        %561 = vmatprep.subr.mxu0 0.0
        %562 = vmatpush2.xpose.msra.mxu0 0.0
        %563 = vmatprep.subr.mxu0 0.0
        %564 = vmatpush2.xpose.msra.mxu0 0.0
        %565 = vmatprep.mubr.f32.mxu0 0.0
        %566 = vmatmul.mubr.f32.gmra.mxu0 %v497
        %v567 = vpop.f32.mrf.mxu0
        %v568 = vadd.f32 0.0, %v567
        %v569 = vpop.f32.mrf.mxu0
        %570 = vdwg.mxu0
        %572 = vrot.lane.b32.xlu0 %v257, 112
        %v573 = vpop.permute.xlu0 %572
        %v574 = vsel %vm265, %v257, 0
        %v576 = vsel %vm265, %v573, 0
        %578 = vmatprep.subr.mxu0 0.0
        %579 = vmatpush1.xpose.msra.mxu0 0.0
        %580 = vmatprep.subr.mxu0 0.0
        %581 = vmatpush1.xpose.msra.mxu0 0.0
        %582 = vmatprep.subr.mxu0 0.0
        %583 = vmatpush1.xpose.msra.mxu0 0.0
        %584 = vmatprep.subr.mxu0 0.0
        %585 = vmatpush1.xpose.msra.mxu0 0.0
        %586 = vmatprep.subr.mxu0 0.0
        %587 = vmatpush1.xpose.msra.mxu0 0.0
        %588 = vmatprep.subr.mxu0 0.0
        %589 = vmatpush1.xpose.msra.mxu0 0.0
        %590 = vmatprep.subr.mxu0 0.0
        %591 = vmatpush1.xpose.msra.mxu0 0.0
        %592 = vmatprep.subr.mxu0 0.0
        %593 = vmatpush1.xpose.msra.mxu0 0.0
        %594 = vmatprep.subr.mxu0 0.0
        %595 = vmatpush1.xpose.msra.mxu0 0.0
        %596 = vmatprep.subr.mxu0 0.0
        %597 = vmatpush1.xpose.msra.mxu0 0.0
        %598 = vmatprep.subr.mxu0 0.0
        %599 = vmatpush1.xpose.msra.mxu0 0.0
        %600 = vmatprep.subr.mxu0 0.0
        %601 = vmatpush1.xpose.msra.mxu0 0.0
        %602 = vmatprep.subr.mxu0 0.0
        %603 = vmatpush1.xpose.msra.mxu0 0.0
        %604 = vmatprep.subr.mxu0 0.0
        %605 = vmatpush1.xpose.msra.mxu0 0.0
        %606 = vmatprep.subr.mxu0 0.0
        %607 = vmatpush1.xpose.msra.mxu0 0.0
        %608 = vmatprep.subr.mxu0 0.0
        %609 = vmatpush1.xpose.msra.mxu0 %v576
        %610 = vmatprep.subr.mxu0 0.0
        %611 = vmatpush2.xpose.msra.mxu0 0.0
        %612 = vmatprep.subr.mxu0 0.0
        %613 = vmatpush2.xpose.msra.mxu0 0.0
        %614 = vmatprep.subr.mxu0 0.0
        %615 = vmatpush2.xpose.msra.mxu0 0.0
        %616 = vmatprep.subr.mxu0 0.0
        %617 = vmatpush2.xpose.msra.mxu0 0.0
        %618 = vmatprep.subr.mxu0 0.0
        %619 = vmatpush2.xpose.msra.mxu0 0.0
        %620 = vmatprep.subr.mxu0 0.0
        %621 = vmatpush2.xpose.msra.mxu0 0.0
        %622 = vmatprep.subr.mxu0 0.0
        %623 = vmatpush2.xpose.msra.mxu0 0.0
        %624 = vmatprep.subr.mxu0 0.0
        %625 = vmatpush2.xpose.msra.mxu0 0.0
        %626 = vmatprep.subr.mxu0 0.0
        %627 = vmatpush2.xpose.msra.mxu0 0.0
        %628 = vmatprep.subr.mxu0 0.0
        %629 = vmatpush2.xpose.msra.mxu0 0.0
        %630 = vmatprep.subr.mxu0 0.0
        %631 = vmatpush2.xpose.msra.mxu0 0.0
        %632 = vmatprep.subr.mxu0 0.0
        %633 = vmatpush2.xpose.msra.mxu0 0.0
        %634 = vmatprep.subr.mxu0 0.0
        %635 = vmatpush2.xpose.msra.mxu0 0.0
        %636 = vmatprep.subr.mxu0 0.0
        %637 = vmatpush2.xpose.msra.mxu0 0.0
        %638 = vmatprep.subr.mxu0 0.0
        %639 = vmatpush2.xpose.msra.mxu0 0.0
        %640 = vmatprep.subr.mxu0 0.0
        %641 = vmatpush2.xpose.msra.mxu0 0.0
        %642 = vmatprep.mubr.f32.mxu0 0.0
        %643 = vmatmul.mubr.f32.gmra.mxu0 %v574
        %v644 = vpop.f32.mrf.mxu0
        %v645 = vadd.f32 0.0, %v644
        %v646 = vpop.f32.mrf.mxu0
        %647 = vdwg.mxu0
        %649 = vrot.lane.b32.xlu0 %v258, 112
        %v650 = vpop.permute.xlu0 %649
        %v651 = vsel %vm265, %v258, 0
        %v653 = vsel %vm265, %v650, 0
        %655 = vmatprep.subr.mxu0 0.0
        %656 = vmatpush1.xpose.msra.mxu0 0.0
        %657 = vmatprep.subr.mxu0 0.0
        %658 = vmatpush1.xpose.msra.mxu0 0.0
        %659 = vmatprep.subr.mxu0 0.0
        %660 = vmatpush1.xpose.msra.mxu0 0.0
        %661 = vmatprep.subr.mxu0 0.0
        %662 = vmatpush1.xpose.msra.mxu0 0.0
        %663 = vmatprep.subr.mxu0 0.0
        %664 = vmatpush1.xpose.msra.mxu0 0.0
        %665 = vmatprep.subr.mxu0 0.0
        %666 = vmatpush1.xpose.msra.mxu0 0.0
        %667 = vmatprep.subr.mxu0 0.0
        %668 = vmatpush1.xpose.msra.mxu0 0.0
        %669 = vmatprep.subr.mxu0 0.0
        %670 = vmatpush1.xpose.msra.mxu0 0.0
        %671 = vmatprep.subr.mxu0 0.0
        %672 = vmatpush1.xpose.msra.mxu0 0.0
        %673 = vmatprep.subr.mxu0 0.0
        %674 = vmatpush1.xpose.msra.mxu0 0.0
        %675 = vmatprep.subr.mxu0 0.0
        %676 = vmatpush1.xpose.msra.mxu0 0.0
        %677 = vmatprep.subr.mxu0 0.0
        %678 = vmatpush1.xpose.msra.mxu0 0.0
        %679 = vmatprep.subr.mxu0 0.0
        %680 = vmatpush1.xpose.msra.mxu0 0.0
        %681 = vmatprep.subr.mxu0 0.0
        %682 = vmatpush1.xpose.msra.mxu0 0.0
        %683 = vmatprep.subr.mxu0 0.0
        %684 = vmatpush1.xpose.msra.mxu0 0.0
        %685 = vmatprep.subr.mxu0 0.0
        %686 = vmatpush1.xpose.msra.mxu0 %v653
        %687 = vmatprep.subr.mxu0 0.0
        %688 = vmatpush2.xpose.msra.mxu0 0.0
        %689 = vmatprep.subr.mxu0 0.0
        %690 = vmatpush2.xpose.msra.mxu0 0.0
        %691 = vmatprep.subr.mxu0 0.0
        %692 = vmatpush2.xpose.msra.mxu0 0.0
        %693 = vmatprep.subr.mxu0 0.0
        %694 = vmatpush2.xpose.msra.mxu0 0.0
        %695 = vmatprep.subr.mxu0 0.0
        %696 = vmatpush2.xpose.msra.mxu0 0.0
        %697 = vmatprep.subr.mxu0 0.0
        %698 = vmatpush2.xpose.msra.mxu0 0.0
        %699 = vmatprep.subr.mxu0 0.0
        %700 = vmatpush2.xpose.msra.mxu0 0.0
        %701 = vmatprep.subr.mxu0 0.0
        %702 = vmatpush2.xpose.msra.mxu0 0.0
        %703 = vmatprep.subr.mxu0 0.0
        %704 = vmatpush2.xpose.msra.mxu0 0.0
        %705 = vmatprep.subr.mxu0 0.0
        %706 = vmatpush2.xpose.msra.mxu0 0.0
        %707 = vmatprep.subr.mxu0 0.0
        %708 = vmatpush2.xpose.msra.mxu0 0.0
        %709 = vmatprep.subr.mxu0 0.0
        %710 = vmatpush2.xpose.msra.mxu0 0.0
        %711 = vmatprep.subr.mxu0 0.0
        %712 = vmatpush2.xpose.msra.mxu0 0.0
        %713 = vmatprep.subr.mxu0 0.0
        %714 = vmatpush2.xpose.msra.mxu0 0.0
        %715 = vmatprep.subr.mxu0 0.0
        %716 = vmatpush2.xpose.msra.mxu0 0.0
        %717 = vmatprep.subr.mxu0 0.0
        %718 = vmatpush2.xpose.msra.mxu0 0.0
        %719 = vmatprep.mubr.f32.mxu0 0.0
        %720 = vmatmul.mubr.f32.gmra.mxu0 %v651
        %v721 = vpop.f32.mrf.mxu0
        %v722 = vadd.f32 0.0, %v721
        %v723 = vpop.f32.mrf.mxu0
        %724 = vdwg.mxu0
        %726 = vrot.lane.b32.xlu0 %v259, 112
        %v727 = vpop.permute.xlu0 %726
        %v728 = vsel %vm265, %v259, 0
        %v730 = vsel %vm265, %v727, 0
        %732 = vmatprep.subr.mxu0 0.0
        %733 = vmatpush1.xpose.msra.mxu0 0.0
        %734 = vmatprep.subr.mxu0 0.0
        %735 = vmatpush1.xpose.msra.mxu0 0.0
        %736 = vmatprep.subr.mxu0 0.0
        %737 = vmatpush1.xpose.msra.mxu0 0.0
        %738 = vmatprep.subr.mxu0 0.0
        %739 = vmatpush1.xpose.msra.mxu0 0.0
        %740 = vmatprep.subr.mxu0 0.0
        %741 = vmatpush1.xpose.msra.mxu0 0.0
        %742 = vmatprep.subr.mxu0 0.0
        %743 = vmatpush1.xpose.msra.mxu0 0.0
        %744 = vmatprep.subr.mxu0 0.0
        %745 = vmatpush1.xpose.msra.mxu0 0.0
        %746 = vmatprep.subr.mxu0 0.0
        %747 = vmatpush1.xpose.msra.mxu0 0.0
        %748 = vmatprep.subr.mxu0 0.0
        %749 = vmatpush1.xpose.msra.mxu0 0.0
        %750 = vmatprep.subr.mxu0 0.0
        %751 = vmatpush1.xpose.msra.mxu0 0.0
        %752 = vmatprep.subr.mxu0 0.0
        %753 = vmatpush1.xpose.msra.mxu0 0.0
        %754 = vmatprep.subr.mxu0 0.0
        %755 = vmatpush1.xpose.msra.mxu0 0.0
        %756 = vmatprep.subr.mxu0 0.0
        %757 = vmatpush1.xpose.msra.mxu0 0.0
        %758 = vmatprep.subr.mxu0 0.0
        %759 = vmatpush1.xpose.msra.mxu0 0.0
        %760 = vmatprep.subr.mxu0 0.0
        %761 = vmatpush1.xpose.msra.mxu0 0.0
        %762 = vmatprep.subr.mxu0 0.0
        %763 = vmatpush1.xpose.msra.mxu0 %v730
        %764 = vmatprep.subr.mxu0 0.0
        %765 = vmatpush2.xpose.msra.mxu0 0.0
        %766 = vmatprep.subr.mxu0 0.0
        %767 = vmatpush2.xpose.msra.mxu0 0.0
        %768 = vmatprep.subr.mxu0 0.0
        %769 = vmatpush2.xpose.msra.mxu0 0.0
        %770 = vmatprep.subr.mxu0 0.0
        %771 = vmatpush2.xpose.msra.mxu0 0.0
        %772 = vmatprep.subr.mxu0 0.0
        %773 = vmatpush2.xpose.msra.mxu0 0.0
        %774 = vmatprep.subr.mxu0 0.0
        %775 = vmatpush2.xpose.msra.mxu0 0.0
        %776 = vmatprep.subr.mxu0 0.0
        %777 = vmatpush2.xpose.msra.mxu0 0.0
        %778 = vmatprep.subr.mxu0 0.0
        %779 = vmatpush2.xpose.msra.mxu0 0.0
        %780 = vmatprep.subr.mxu0 0.0
        %781 = vmatpush2.xpose.msra.mxu0 0.0
        %782 = vmatprep.subr.mxu0 0.0
        %783 = vmatpush2.xpose.msra.mxu0 0.0
        %784 = vmatprep.subr.mxu0 0.0
        %785 = vmatpush2.xpose.msra.mxu0 0.0
        %786 = vmatprep.subr.mxu0 0.0
        %787 = vmatpush2.xpose.msra.mxu0 0.0
        %788 = vmatprep.subr.mxu0 0.0
        %789 = vmatpush2.xpose.msra.mxu0 0.0
        %790 = vmatprep.subr.mxu0 0.0
        %791 = vmatpush2.xpose.msra.mxu0 0.0
        %792 = vmatprep.subr.mxu0 0.0
        %793 = vmatpush2.xpose.msra.mxu0 0.0
        %794 = vmatprep.subr.mxu0 0.0
        %795 = vmatpush2.xpose.msra.mxu0 0.0
        %796 = vmatprep.mubr.f32.mxu0 0.0
        %797 = vmatmul.mubr.f32.gmra.mxu0 %v728
        %v798 = vpop.f32.mrf.mxu0
        %v799 = vadd.f32 0.0, %v798
        %v800 = vpop.f32.mrf.mxu0
        %801 = vdwg.mxu0
        %803 = vrot.lane.b32.xlu0 %v260, 112
        %v804 = vpop.permute.xlu0 %803
        %v805 = vsel %vm265, %v260, 0
        %v807 = vsel %vm265, %v804, 0
        %809 = vmatprep.subr.mxu0 0.0
        %810 = vmatpush1.xpose.msra.mxu0 0.0
        %811 = vmatprep.subr.mxu0 0.0
        %812 = vmatpush1.xpose.msra.mxu0 0.0
        %813 = vmatprep.subr.mxu0 0.0
        %814 = vmatpush1.xpose.msra.mxu0 0.0
        %815 = vmatprep.subr.mxu0 0.0
        %816 = vmatpush1.xpose.msra.mxu0 0.0
        %817 = vmatprep.subr.mxu0 0.0
        %818 = vmatpush1.xpose.msra.mxu0 0.0
        %819 = vmatprep.subr.mxu0 0.0
        %820 = vmatpush1.xpose.msra.mxu0 0.0
        %821 = vmatprep.subr.mxu0 0.0
        %822 = vmatpush1.xpose.msra.mxu0 0.0
        %823 = vmatprep.subr.mxu0 0.0
        %824 = vmatpush1.xpose.msra.mxu0 0.0
        %825 = vmatprep.subr.mxu0 0.0
        %826 = vmatpush1.xpose.msra.mxu0 0.0
        %827 = vmatprep.subr.mxu0 0.0
        %828 = vmatpush1.xpose.msra.mxu0 0.0
        %829 = vmatprep.subr.mxu0 0.0
        %830 = vmatpush1.xpose.msra.mxu0 0.0
        %831 = vmatprep.subr.mxu0 0.0
        %832 = vmatpush1.xpose.msra.mxu0 0.0
        %833 = vmatprep.subr.mxu0 0.0
        %834 = vmatpush1.xpose.msra.mxu0 0.0
        %835 = vmatprep.subr.mxu0 0.0
        %836 = vmatpush1.xpose.msra.mxu0 0.0
        %837 = vmatprep.subr.mxu0 0.0
        %838 = vmatpush1.xpose.msra.mxu0 0.0
        %839 = vmatprep.subr.mxu0 0.0
        %840 = vmatpush1.xpose.msra.mxu0 %v807
        %841 = vmatprep.subr.mxu0 0.0
        %842 = vmatpush2.xpose.msra.mxu0 0.0
        %843 = vmatprep.subr.mxu0 0.0
        %844 = vmatpush2.xpose.msra.mxu0 0.0
        %845 = vmatprep.subr.mxu0 0.0
        %846 = vmatpush2.xpose.msra.mxu0 0.0
        %847 = vmatprep.subr.mxu0 0.0
        %848 = vmatpush2.xpose.msra.mxu0 0.0
        %849 = vmatprep.subr.mxu0 0.0
        %850 = vmatpush2.xpose.msra.mxu0 0.0
        %851 = vmatprep.subr.mxu0 0.0
        %852 = vmatpush2.xpose.msra.mxu0 0.0
        %853 = vmatprep.subr.mxu0 0.0
        %854 = vmatpush2.xpose.msra.mxu0 0.0
        %855 = vmatprep.subr.mxu0 0.0
        %856 = vmatpush2.xpose.msra.mxu0 0.0
        %857 = vmatprep.subr.mxu0 0.0
        %858 = vmatpush2.xpose.msra.mxu0 0.0
        %859 = vmatprep.subr.mxu0 0.0
        %860 = vmatpush2.xpose.msra.mxu0 0.0
        %861 = vmatprep.subr.mxu0 0.0
        %862 = vmatpush2.xpose.msra.mxu0 0.0
        %863 = vmatprep.subr.mxu0 0.0
        %864 = vmatpush2.xpose.msra.mxu0 0.0
        %865 = vmatprep.subr.mxu0 0.0
        %866 = vmatpush2.xpose.msra.mxu0 0.0
        %867 = vmatprep.subr.mxu0 0.0
        %868 = vmatpush2.xpose.msra.mxu0 0.0
        %869 = vmatprep.subr.mxu0 0.0
        %870 = vmatpush2.xpose.msra.mxu0 0.0
        %871 = vmatprep.subr.mxu0 0.0
        %872 = vmatpush2.xpose.msra.mxu0 0.0
        %873 = vmatprep.mubr.f32.mxu0 0.0
        %874 = vmatmul.mubr.f32.gmra.mxu0 %v805
        %v875 = vpop.f32.mrf.mxu0
        %v876 = vadd.f32 0.0, %v875
        %v877 = vpop.f32.mrf.mxu0
        %878 = vdwg.mxu0
        %v879 = vmul.f32 %v337, %v261
        %v880 = vmul.f32 %v414, %v261
        %v881 = vmul.f32 %v491, %v261
        %v882 = vmul.f32 %v568, %v261
        %v883 = vmul.f32 %v645, %v261
        %v884 = vmul.f32 %v722, %v261
        %v885 = vmul.f32 %v799, %v261
        %v886 = vmul.f32 %v876, %v261
        %v887 = vsel %vm265, %v879, -inf
        %888 = vmax.xlane.f32.xlu0 %v887
        %v889 = vpop.xlane.xlu0 %888
        %v890 = vsel %vm265, %v880, -inf
        %891 = vmax.xlane.f32.xlu0 %v890
        %v892 = vpop.xlane.xlu0 %891
        %v893 = vsel %vm265, %v881, -inf
        %894 = vmax.xlane.f32.xlu0 %v893
        %v895 = vpop.xlane.xlu0 %894
        %v896 = vsel %vm265, %v882, -inf
        %897 = vmax.xlane.f32.xlu0 %v896
        %v898 = vpop.xlane.xlu0 %897
        %v899 = vsel %vm265, %v883, -inf
        %900 = vmax.xlane.f32.xlu0 %v899
        %v901 = vpop.xlane.xlu0 %900
        %v902 = vsel %vm265, %v884, -inf
        %903 = vmax.xlane.f32.xlu0 %v902
        %v904 = vpop.xlane.xlu0 %903
        %v905 = vsel %vm265, %v885, -inf
        %906 = vmax.xlane.f32.xlu0 %v905
        %v907 = vpop.xlane.xlu0 %906
        %v908 = vsel %vm265, %v886, -inf
        %909 = vmax.xlane.f32.xlu0 %v908
        %v910 = vpop.xlane.xlu0 %909
        %v911 = vsub.f32 %v879, %v889
        %v912 = vsub.f32 %v880, %v892
        %v913 = vsub.f32 %v881, %v895
        %v914 = vsub.f32 %v882, %v898
        %v915 = vsub.f32 %v883, %v901
        %v916 = vsub.f32 %v884, %v904
        %v917 = vsub.f32 %v885, %v907
        %v918 = vsub.f32 %v886, %v910
        %v919 = vmul.f32 %v911, 1.442695
        %v920 = vpow.pop %v919
        %v921 = vmul.f32 %v912, 1.442695
        %v922 = vpow.pop %v921
        %v923 = vmul.f32 %v913, 1.442695
        %v924 = vpow.pop %v923
        %v925 = vmul.f32 %v914, 1.442695
        %v926 = vpow.pop %v925
        %v927 = vmul.f32 %v915, 1.442695
        %v928 = vpow.pop %v927
        %v929 = vmul.f32 %v916, 1.442695
        %v930 = vpow.pop %v929
        %v931 = vmul.f32 %v917, 1.442695
        %v932 = vpow.pop %v931
        %v933 = vmul.f32 %v918, 1.442695
        %v934 = vpow.pop %v933
        %v935 = vsel %vm265, %v920, 0.0
        %936 = vadd.xlane.f32.xlu0 %v935
        %v937 = vpop.xlane.xlu0 %936
        %v938 = vsel %vm265, %v922, 0.0
        %939 = vadd.xlane.f32.xlu0 %v938
        %v940 = vpop.xlane.xlu0 %939
        %v941 = vsel %vm265, %v924, 0.0
        %942 = vadd.xlane.f32.xlu0 %v941
        %v943 = vpop.xlane.xlu0 %942
        %v944 = vsel %vm265, %v926, 0.0
        %945 = vadd.xlane.f32.xlu0 %v944
        %v946 = vpop.xlane.xlu0 %945
        %v947 = vsel %vm265, %v928, 0.0
        %948 = vadd.xlane.f32.xlu0 %v947
        %v949 = vpop.xlane.xlu0 %948
        %v950 = vsel %vm265, %v930, 0.0
        %951 = vadd.xlane.f32.xlu0 %v950
        %v952 = vpop.xlane.xlu0 %951
        %v953 = vsel %vm265, %v932, 0.0
        %954 = vadd.xlane.f32.xlu0 %v953
        %v955 = vpop.xlane.xlu0 %954
        %v956 = vsel %vm265, %v934, 0.0
        %957 = vadd.xlane.f32.xlu0 %v956
        %v958 = vpop.xlane.xlu0 %957
        %v959 = vrcp.pop %v937
        %v960 = vrcp.pop %v940
        %v961 = vrcp.pop %v943
        %v962 = vrcp.pop %v946
        %v963 = vrcp.pop %v949
        %v964 = vrcp.pop %v952
        %v965 = vrcp.pop %v955
        %v966 = vrcp.pop %v958
        %v967 = vmul.f32 %v920, %v959
        %v968 = vmul.f32 %v922, %v960
        %v969 = vmul.f32 %v924, %v961
        %v970 = vmul.f32 %v926, %v962
        %v971 = vmul.f32 %v928, %v963
        %v972 = vmul.f32 %v930, %v964
        %v973 = vmul.f32 %v932, %v965
        %v974 = vmul.f32 %v934, %v966
        %975 = vrot.lane.b32.xlu0 %v253, 96
        %v976 = vpop.permute.xlu0 %975
        %v979 = vsel %vm265, %v967, 0
        %981 = vmatprep.subr.mxu0 0.0
        %982 = vmatpush1.msra.mxu0 0.0
        %983 = vmatprep.subr.mxu0 0.0
        %984 = vmatpush1.msra.mxu0 0.0
        %985 = vmatprep.subr.mxu0 0.0
        %986 = vmatpush1.msra.mxu0 0.0
        %987 = vmatprep.subr.mxu0 0.0
        %988 = vmatpush1.msra.mxu0 0.0
        %989 = vmatprep.subr.mxu0 0.0
        %990 = vmatpush1.msra.mxu0 0.0
        %991 = vmatprep.subr.mxu0 0.0
        %992 = vmatpush1.msra.mxu0 0.0
        %993 = vmatprep.subr.mxu0 0.0
        %994 = vmatpush1.msra.mxu0 0.0
        %995 = vmatprep.subr.mxu0 0.0
        %996 = vmatpush1.msra.mxu0 0.0
        %997 = vmatprep.subr.mxu0 0.0
        %998 = vmatpush1.msra.mxu0 0.0
        %999 = vmatprep.subr.mxu0 0.0
        %1000 = vmatpush1.msra.mxu0 0.0
        %1001 = vmatprep.subr.mxu0 0.0
        %1002 = vmatpush1.msra.mxu0 0.0
        %1003 = vmatprep.subr.mxu0 0.0
        %1004 = vmatpush1.msra.mxu0 0.0
        %1005 = vmatprep.subr.mxu0 0.0
        %1006 = vmatpush1.msra.mxu0 0.0
        %1007 = vmatprep.subr.mxu0 0.0
        %1008 = vmatpush1.msra.mxu0 0.0
        %1009 = vmatprep.subr.mxu0 0.0
        %1010 = vmatpush1.msra.mxu0 0.0
        %1011 = vmatprep.subr.mxu0 0.0
        %1012 = vmatpush1.msra.mxu0 %v976
        %1013 = vmatprep.subr.mxu0 0.0
        %1014 = vmatpush2.msra.mxu0 0.0
        %1015 = vmatprep.subr.mxu0 0.0
        %1016 = vmatpush2.msra.mxu0 0.0
        %1017 = vmatprep.subr.mxu0 0.0
        %1018 = vmatpush2.msra.mxu0 0.0
        %1019 = vmatprep.subr.mxu0 0.0
        %1020 = vmatpush2.msra.mxu0 0.0
        %1021 = vmatprep.subr.mxu0 0.0
        %1022 = vmatpush2.msra.mxu0 0.0
        %1023 = vmatprep.subr.mxu0 0.0
        %1024 = vmatpush2.msra.mxu0 0.0
        %1025 = vmatprep.subr.mxu0 0.0
        %1026 = vmatpush2.msra.mxu0 0.0
        %1027 = vmatprep.subr.mxu0 0.0
        %1028 = vmatpush2.msra.mxu0 0.0
        %1029 = vmatprep.subr.mxu0 0.0
        %1030 = vmatpush2.msra.mxu0 0.0
        %1031 = vmatprep.subr.mxu0 0.0
        %1032 = vmatpush2.msra.mxu0 0.0
        %1033 = vmatprep.subr.mxu0 0.0
        %1034 = vmatpush2.msra.mxu0 0.0
        %1035 = vmatprep.subr.mxu0 0.0
        %1036 = vmatpush2.msra.mxu0 0.0
        %1037 = vmatprep.subr.mxu0 0.0
        %1038 = vmatpush2.msra.mxu0 0.0
        %1039 = vmatprep.subr.mxu0 0.0
        %1040 = vmatpush2.msra.mxu0 0.0
        %1041 = vmatprep.subr.mxu0 0.0
        %1042 = vmatpush2.msra.mxu0 0.0
        %1043 = vmatprep.subr.mxu0 0.0
        %1044 = vmatpush2.msra.mxu0 0.0
        %1045 = vmatprep.mubr.f32.mxu0 0.0
        %1046 = vmatmul.mubr.f32.gmra.mxu0 %v979
        %v1047 = vpop.f32.mrf.mxu0
        %v1048 = vadd.f32 0.0, %v1047
        %v1049 = vpop.f32.mrf.mxu0
        %1050 = vdwg.mxu0
        %1051 = vrot.lane.b32.xlu0 %v254, 96
        %v1052 = vpop.permute.xlu0 %1051
        %v1055 = vsel %vm265, %v968, 0
        %1057 = vmatprep.subr.mxu0 0.0
        %1058 = vmatpush1.msra.mxu0 0.0
        %1059 = vmatprep.subr.mxu0 0.0
        %1060 = vmatpush1.msra.mxu0 0.0
        %1061 = vmatprep.subr.mxu0 0.0
        %1062 = vmatpush1.msra.mxu0 0.0
        %1063 = vmatprep.subr.mxu0 0.0
        %1064 = vmatpush1.msra.mxu0 0.0
        %1065 = vmatprep.subr.mxu0 0.0
        %1066 = vmatpush1.msra.mxu0 0.0
        %1067 = vmatprep.subr.mxu0 0.0
        %1068 = vmatpush1.msra.mxu0 0.0
        %1069 = vmatprep.subr.mxu0 0.0
        %1070 = vmatpush1.msra.mxu0 0.0
        %1071 = vmatprep.subr.mxu0 0.0
        %1072 = vmatpush1.msra.mxu0 0.0
        %1073 = vmatprep.subr.mxu0 0.0
        %1074 = vmatpush1.msra.mxu0 0.0
        %1075 = vmatprep.subr.mxu0 0.0
        %1076 = vmatpush1.msra.mxu0 0.0
        %1077 = vmatprep.subr.mxu0 0.0
        %1078 = vmatpush1.msra.mxu0 0.0
        %1079 = vmatprep.subr.mxu0 0.0
        %1080 = vmatpush1.msra.mxu0 0.0
        %1081 = vmatprep.subr.mxu0 0.0
        %1082 = vmatpush1.msra.mxu0 0.0
        %1083 = vmatprep.subr.mxu0 0.0
        %1084 = vmatpush1.msra.mxu0 0.0
        %1085 = vmatprep.subr.mxu0 0.0
        %1086 = vmatpush1.msra.mxu0 0.0
        %1087 = vmatprep.subr.mxu0 0.0
        %1088 = vmatpush1.msra.mxu0 %v1052
        %1089 = vmatprep.subr.mxu0 0.0
        %1090 = vmatpush2.msra.mxu0 0.0
        %1091 = vmatprep.subr.mxu0 0.0
        %1092 = vmatpush2.msra.mxu0 0.0
        %1093 = vmatprep.subr.mxu0 0.0
        %1094 = vmatpush2.msra.mxu0 0.0
        %1095 = vmatprep.subr.mxu0 0.0
        %1096 = vmatpush2.msra.mxu0 0.0
        %1097 = vmatprep.subr.mxu0 0.0
        %1098 = vmatpush2.msra.mxu0 0.0
        %1099 = vmatprep.subr.mxu0 0.0
        %1100 = vmatpush2.msra.mxu0 0.0
        %1101 = vmatprep.subr.mxu0 0.0
        %1102 = vmatpush2.msra.mxu0 0.0
        %1103 = vmatprep.subr.mxu0 0.0
        %1104 = vmatpush2.msra.mxu0 0.0
        %1105 = vmatprep.subr.mxu0 0.0
        %1106 = vmatpush2.msra.mxu0 0.0
        %1107 = vmatprep.subr.mxu0 0.0
        %1108 = vmatpush2.msra.mxu0 0.0
        %1109 = vmatprep.subr.mxu0 0.0
        %1110 = vmatpush2.msra.mxu0 0.0
        %1111 = vmatprep.subr.mxu0 0.0
        %1112 = vmatpush2.msra.mxu0 0.0
        %1113 = vmatprep.subr.mxu0 0.0
        %1114 = vmatpush2.msra.mxu0 0.0
        %1115 = vmatprep.subr.mxu0 0.0
        %1116 = vmatpush2.msra.mxu0 0.0
        %1117 = vmatprep.subr.mxu0 0.0
        %1118 = vmatpush2.msra.mxu0 0.0
        %1119 = vmatprep.subr.mxu0 0.0
        %1120 = vmatpush2.msra.mxu0 0.0
        %1121 = vmatprep.mubr.f32.mxu0 0.0
        %1122 = vmatmul.mubr.f32.gmra.mxu0 %v1055
        %v1123 = vpop.f32.mrf.mxu0
        %v1124 = vadd.f32 0.0, %v1123
        %v1125 = vpop.f32.mrf.mxu0
        %1126 = vdwg.mxu0
        %1127 = vrot.lane.b32.xlu0 %v255, 96
        %v1128 = vpop.permute.xlu0 %1127
        %v1131 = vsel %vm265, %v969, 0
        %1133 = vmatprep.subr.mxu0 0.0
        %1134 = vmatpush1.msra.mxu0 0.0
        %1135 = vmatprep.subr.mxu0 0.0
        %1136 = vmatpush1.msra.mxu0 0.0
        %1137 = vmatprep.subr.mxu0 0.0
        %1138 = vmatpush1.msra.mxu0 0.0
        %1139 = vmatprep.subr.mxu0 0.0
        %1140 = vmatpush1.msra.mxu0 0.0
        %1141 = vmatprep.subr.mxu0 0.0
        %1142 = vmatpush1.msra.mxu0 0.0
        %1143 = vmatprep.subr.mxu0 0.0
        %1144 = vmatpush1.msra.mxu0 0.0
        %1145 = vmatprep.subr.mxu0 0.0
        %1146 = vmatpush1.msra.mxu0 0.0
        %1147 = vmatprep.subr.mxu0 0.0
        %1148 = vmatpush1.msra.mxu0 0.0
        %1149 = vmatprep.subr.mxu0 0.0
        %1150 = vmatpush1.msra.mxu0 0.0
        %1151 = vmatprep.subr.mxu0 0.0
        %1152 = vmatpush1.msra.mxu0 0.0
        %1153 = vmatprep.subr.mxu0 0.0
        %1154 = vmatpush1.msra.mxu0 0.0
        %1155 = vmatprep.subr.mxu0 0.0
        %1156 = vmatpush1.msra.mxu0 0.0
        %1157 = vmatprep.subr.mxu0 0.0
        %1158 = vmatpush1.msra.mxu0 0.0
        %1159 = vmatprep.subr.mxu0 0.0
        %1160 = vmatpush1.msra.mxu0 0.0
        %1161 = vmatprep.subr.mxu0 0.0
        %1162 = vmatpush1.msra.mxu0 0.0
        %1163 = vmatprep.subr.mxu0 0.0
        %1164 = vmatpush1.msra.mxu0 %v1128
        %1165 = vmatprep.subr.mxu0 0.0
        %1166 = vmatpush2.msra.mxu0 0.0
        %1167 = vmatprep.subr.mxu0 0.0
        %1168 = vmatpush2.msra.mxu0 0.0
        %1169 = vmatprep.subr.mxu0 0.0
        %1170 = vmatpush2.msra.mxu0 0.0
        %1171 = vmatprep.subr.mxu0 0.0
        %1172 = vmatpush2.msra.mxu0 0.0
        %1173 = vmatprep.subr.mxu0 0.0
        %1174 = vmatpush2.msra.mxu0 0.0
        %1175 = vmatprep.subr.mxu0 0.0
        %1176 = vmatpush2.msra.mxu0 0.0
        %1177 = vmatprep.subr.mxu0 0.0
        %1178 = vmatpush2.msra.mxu0 0.0
        %1179 = vmatprep.subr.mxu0 0.0
        %1180 = vmatpush2.msra.mxu0 0.0
        %1181 = vmatprep.subr.mxu0 0.0
        %1182 = vmatpush2.msra.mxu0 0.0
        %1183 = vmatprep.subr.mxu0 0.0
        %1184 = vmatpush2.msra.mxu0 0.0
        %1185 = vmatprep.subr.mxu0 0.0
        %1186 = vmatpush2.msra.mxu0 0.0
        %1187 = vmatprep.subr.mxu0 0.0
        %1188 = vmatpush2.msra.mxu0 0.0
        %1189 = vmatprep.subr.mxu0 0.0
        %1190 = vmatpush2.msra.mxu0 0.0
        %1191 = vmatprep.subr.mxu0 0.0
        %1192 = vmatpush2.msra.mxu0 0.0
        %1193 = vmatprep.subr.mxu0 0.0
        %1194 = vmatpush2.msra.mxu0 0.0
        %1195 = vmatprep.subr.mxu0 0.0
        %1196 = vmatpush2.msra.mxu0 0.0
        %1197 = vmatprep.mubr.f32.mxu0 0.0
        %1198 = vmatmul.mubr.f32.gmra.mxu0 %v1131
        %v1199 = vpop.f32.mrf.mxu0
        %v1200 = vadd.f32 0.0, %v1199
        %v1201 = vpop.f32.mrf.mxu0
        %1202 = vdwg.mxu0
        %1203 = vrot.lane.b32.xlu0 %v256, 96
        %v1204 = vpop.permute.xlu0 %1203
        %v1207 = vsel %vm265, %v970, 0
        %1209 = vmatprep.subr.mxu0 0.0
        %1210 = vmatpush1.msra.mxu0 0.0
        %1211 = vmatprep.subr.mxu0 0.0
        %1212 = vmatpush1.msra.mxu0 0.0
        %1213 = vmatprep.subr.mxu0 0.0
        %1214 = vmatpush1.msra.mxu0 0.0
        %1215 = vmatprep.subr.mxu0 0.0
        %1216 = vmatpush1.msra.mxu0 0.0
        %1217 = vmatprep.subr.mxu0 0.0
        %1218 = vmatpush1.msra.mxu0 0.0
        %1219 = vmatprep.subr.mxu0 0.0
        %1220 = vmatpush1.msra.mxu0 0.0
        %1221 = vmatprep.subr.mxu0 0.0
        %1222 = vmatpush1.msra.mxu0 0.0
        %1223 = vmatprep.subr.mxu0 0.0
        %1224 = vmatpush1.msra.mxu0 0.0
        %1225 = vmatprep.subr.mxu0 0.0
        %1226 = vmatpush1.msra.mxu0 0.0
        %1227 = vmatprep.subr.mxu0 0.0
        %1228 = vmatpush1.msra.mxu0 0.0
        %1229 = vmatprep.subr.mxu0 0.0
        %1230 = vmatpush1.msra.mxu0 0.0
        %1231 = vmatprep.subr.mxu0 0.0
        %1232 = vmatpush1.msra.mxu0 0.0
        %1233 = vmatprep.subr.mxu0 0.0
        %1234 = vmatpush1.msra.mxu0 0.0
        %1235 = vmatprep.subr.mxu0 0.0
        %1236 = vmatpush1.msra.mxu0 0.0
        %1237 = vmatprep.subr.mxu0 0.0
        %1238 = vmatpush1.msra.mxu0 0.0
        %1239 = vmatprep.subr.mxu0 0.0
        %1240 = vmatpush1.msra.mxu0 %v1204
        %1241 = vmatprep.subr.mxu0 0.0
        %1242 = vmatpush2.msra.mxu0 0.0
        %1243 = vmatprep.subr.mxu0 0.0
        %1244 = vmatpush2.msra.mxu0 0.0
        %1245 = vmatprep.subr.mxu0 0.0
        %1246 = vmatpush2.msra.mxu0 0.0
        %1247 = vmatprep.subr.mxu0 0.0
        %1248 = vmatpush2.msra.mxu0 0.0
        %1249 = vmatprep.subr.mxu0 0.0
        %1250 = vmatpush2.msra.mxu0 0.0
        %1251 = vmatprep.subr.mxu0 0.0
        %1252 = vmatpush2.msra.mxu0 0.0
        %1253 = vmatprep.subr.mxu0 0.0
        %1254 = vmatpush2.msra.mxu0 0.0
        %1255 = vmatprep.subr.mxu0 0.0
        %1256 = vmatpush2.msra.mxu0 0.0
        %1257 = vmatprep.subr.mxu0 0.0
        %1258 = vmatpush2.msra.mxu0 0.0
        %1259 = vmatprep.subr.mxu0 0.0
        %1260 = vmatpush2.msra.mxu0 0.0
        %1261 = vmatprep.subr.mxu0 0.0
        %1262 = vmatpush2.msra.mxu0 0.0
        %1263 = vmatprep.subr.mxu0 0.0
        %1264 = vmatpush2.msra.mxu0 0.0
        %1265 = vmatprep.subr.mxu0 0.0
        %1266 = vmatpush2.msra.mxu0 0.0
        %1267 = vmatprep.subr.mxu0 0.0
        %1268 = vmatpush2.msra.mxu0 0.0
        %1269 = vmatprep.subr.mxu0 0.0
        %1270 = vmatpush2.msra.mxu0 0.0
        %1271 = vmatprep.subr.mxu0 0.0
        %1272 = vmatpush2.msra.mxu0 0.0
        %1273 = vmatprep.mubr.f32.mxu0 0.0
        %1274 = vmatmul.mubr.f32.gmra.mxu0 %v1207
        %v1275 = vpop.f32.mrf.mxu0
        %v1276 = vadd.f32 0.0, %v1275
        %v1277 = vpop.f32.mrf.mxu0
        %1278 = vdwg.mxu0
        %1279 = vrot.lane.b32.xlu0 %v257, 96
        %v1280 = vpop.permute.xlu0 %1279
        %v1283 = vsel %vm265, %v971, 0
        %1285 = vmatprep.subr.mxu0 0.0
        %1286 = vmatpush1.msra.mxu0 0.0
        %1287 = vmatprep.subr.mxu0 0.0
        %1288 = vmatpush1.msra.mxu0 0.0
        %1289 = vmatprep.subr.mxu0 0.0
        %1290 = vmatpush1.msra.mxu0 0.0
        %1291 = vmatprep.subr.mxu0 0.0
        %1292 = vmatpush1.msra.mxu0 0.0
        %1293 = vmatprep.subr.mxu0 0.0
        %1294 = vmatpush1.msra.mxu0 0.0
        %1295 = vmatprep.subr.mxu0 0.0
        %1296 = vmatpush1.msra.mxu0 0.0
        %1297 = vmatprep.subr.mxu0 0.0
        %1298 = vmatpush1.msra.mxu0 0.0
        %1299 = vmatprep.subr.mxu0 0.0
        %1300 = vmatpush1.msra.mxu0 0.0
        %1301 = vmatprep.subr.mxu0 0.0
        %1302 = vmatpush1.msra.mxu0 0.0
        %1303 = vmatprep.subr.mxu0 0.0
        %1304 = vmatpush1.msra.mxu0 0.0
        %1305 = vmatprep.subr.mxu0 0.0
        %1306 = vmatpush1.msra.mxu0 0.0
        %1307 = vmatprep.subr.mxu0 0.0
        %1308 = vmatpush1.msra.mxu0 0.0
        %1309 = vmatprep.subr.mxu0 0.0
        %1310 = vmatpush1.msra.mxu0 0.0
        %1311 = vmatprep.subr.mxu0 0.0
        %1312 = vmatpush1.msra.mxu0 0.0
        %1313 = vmatprep.subr.mxu0 0.0
        %1314 = vmatpush1.msra.mxu0 0.0
        %1315 = vmatprep.subr.mxu0 0.0
        %1316 = vmatpush1.msra.mxu0 %v1280
        %1317 = vmatprep.subr.mxu0 0.0
        %1318 = vmatpush2.msra.mxu0 0.0
        %1319 = vmatprep.subr.mxu0 0.0
        %1320 = vmatpush2.msra.mxu0 0.0
        %1321 = vmatprep.subr.mxu0 0.0
        %1322 = vmatpush2.msra.mxu0 0.0
        %1323 = vmatprep.subr.mxu0 0.0
        %1324 = vmatpush2.msra.mxu0 0.0
        %1325 = vmatprep.subr.mxu0 0.0
        %1326 = vmatpush2.msra.mxu0 0.0
        %1327 = vmatprep.subr.mxu0 0.0
        %1328 = vmatpush2.msra.mxu0 0.0
        %1329 = vmatprep.subr.mxu0 0.0
        %1330 = vmatpush2.msra.mxu0 0.0
        %1331 = vmatprep.subr.mxu0 0.0
        %1332 = vmatpush2.msra.mxu0 0.0
        %1333 = vmatprep.subr.mxu0 0.0
        %1334 = vmatpush2.msra.mxu0 0.0
        %1335 = vmatprep.subr.mxu0 0.0
        %1336 = vmatpush2.msra.mxu0 0.0
        %1337 = vmatprep.subr.mxu0 0.0
        %1338 = vmatpush2.msra.mxu0 0.0
        %1339 = vmatprep.subr.mxu0 0.0
        %1340 = vmatpush2.msra.mxu0 0.0
        %1341 = vmatprep.subr.mxu0 0.0
        %1342 = vmatpush2.msra.mxu0 0.0
        %1343 = vmatprep.subr.mxu0 0.0
        %1344 = vmatpush2.msra.mxu0 0.0
        %1345 = vmatprep.subr.mxu0 0.0
        %1346 = vmatpush2.msra.mxu0 0.0
        %1347 = vmatprep.subr.mxu0 0.0
        %1348 = vmatpush2.msra.mxu0 0.0
        %1349 = vmatprep.mubr.f32.mxu0 0.0
        %1350 = vmatmul.mubr.f32.gmra.mxu0 %v1283
        %v1351 = vpop.f32.mrf.mxu0
        %v1352 = vadd.f32 0.0, %v1351
        %v1353 = vpop.f32.mrf.mxu0
        %1354 = vdwg.mxu0
        %1355 = vrot.lane.b32.xlu0 %v258, 96
        %v1356 = vpop.permute.xlu0 %1355
        %v1359 = vsel %vm265, %v972, 0
        %1361 = vmatprep.subr.mxu0 0.0
        %1362 = vmatpush1.msra.mxu0 0.0
        %1363 = vmatprep.subr.mxu0 0.0
        %1364 = vmatpush1.msra.mxu0 0.0
        %1365 = vmatprep.subr.mxu0 0.0
        %1366 = vmatpush1.msra.mxu0 0.0
        %1367 = vmatprep.subr.mxu0 0.0
        %1368 = vmatpush1.msra.mxu0 0.0
        %1369 = vmatprep.subr.mxu0 0.0
        %1370 = vmatpush1.msra.mxu0 0.0
        %1371 = vmatprep.subr.mxu0 0.0
        %1372 = vmatpush1.msra.mxu0 0.0
        %1373 = vmatprep.subr.mxu0 0.0
        %1374 = vmatpush1.msra.mxu0 0.0
        %1375 = vmatprep.subr.mxu0 0.0
        %1376 = vmatpush1.msra.mxu0 0.0
        %1377 = vmatprep.subr.mxu0 0.0
        %1378 = vmatpush1.msra.mxu0 0.0
        %1379 = vmatprep.subr.mxu0 0.0
        %1380 = vmatpush1.msra.mxu0 0.0
        %1381 = vmatprep.subr.mxu0 0.0
        %1382 = vmatpush1.msra.mxu0 0.0
        %1383 = vmatprep.subr.mxu0 0.0
        %1384 = vmatpush1.msra.mxu0 0.0
        %1385 = vmatprep.subr.mxu0 0.0
        %1386 = vmatpush1.msra.mxu0 0.0
        %1387 = vmatprep.subr.mxu0 0.0
        %1388 = vmatpush1.msra.mxu0 0.0
        %1389 = vmatprep.subr.mxu0 0.0
        %1390 = vmatpush1.msra.mxu0 0.0
        %1391 = vmatprep.subr.mxu0 0.0
        %1392 = vmatpush1.msra.mxu0 %v1356
        %1393 = vmatprep.subr.mxu0 0.0
        %1394 = vmatpush2.msra.mxu0 0.0
        %1395 = vmatprep.subr.mxu0 0.0
        %1396 = vmatpush2.msra.mxu0 0.0
        %1397 = vmatprep.subr.mxu0 0.0
        %1398 = vmatpush2.msra.mxu0 0.0
        %1399 = vmatprep.subr.mxu0 0.0
        %1400 = vmatpush2.msra.mxu0 0.0
        %1401 = vmatprep.subr.mxu0 0.0
        %1402 = vmatpush2.msra.mxu0 0.0
        %1403 = vmatprep.subr.mxu0 0.0
        %1404 = vmatpush2.msra.mxu0 0.0
        %1405 = vmatprep.subr.mxu0 0.0
        %1406 = vmatpush2.msra.mxu0 0.0
        %1407 = vmatprep.subr.mxu0 0.0
        %1408 = vmatpush2.msra.mxu0 0.0
        %1409 = vmatprep.subr.mxu0 0.0
        %1410 = vmatpush2.msra.mxu0 0.0
        %1411 = vmatprep.subr.mxu0 0.0
        %1412 = vmatpush2.msra.mxu0 0.0
        %1413 = vmatprep.subr.mxu0 0.0
        %1414 = vmatpush2.msra.mxu0 0.0
        %1415 = vmatprep.subr.mxu0 0.0
        %1416 = vmatpush2.msra.mxu0 0.0
        %1417 = vmatprep.subr.mxu0 0.0
        %1418 = vmatpush2.msra.mxu0 0.0
        %1419 = vmatprep.subr.mxu0 0.0
        %1420 = vmatpush2.msra.mxu0 0.0
        %1421 = vmatprep.subr.mxu0 0.0
        %1422 = vmatpush2.msra.mxu0 0.0
        %1423 = vmatprep.subr.mxu0 0.0
        %1424 = vmatpush2.msra.mxu0 0.0
        %1425 = vmatprep.mubr.f32.mxu0 0.0
        %1426 = vmatmul.mubr.f32.gmra.mxu0 %v1359
        %v1427 = vpop.f32.mrf.mxu0
        %v1428 = vadd.f32 0.0, %v1427
        %v1429 = vpop.f32.mrf.mxu0
        %1430 = vdwg.mxu0
        %1431 = vrot.lane.b32.xlu0 %v259, 96
        %v1432 = vpop.permute.xlu0 %1431
        %v1435 = vsel %vm265, %v973, 0
        %1437 = vmatprep.subr.mxu0 0.0
        %1438 = vmatpush1.msra.mxu0 0.0
        %1439 = vmatprep.subr.mxu0 0.0
        %1440 = vmatpush1.msra.mxu0 0.0
        %1441 = vmatprep.subr.mxu0 0.0
        %1442 = vmatpush1.msra.mxu0 0.0
        %1443 = vmatprep.subr.mxu0 0.0
        %1444 = vmatpush1.msra.mxu0 0.0
        %1445 = vmatprep.subr.mxu0 0.0
        %1446 = vmatpush1.msra.mxu0 0.0
        %1447 = vmatprep.subr.mxu0 0.0
        %1448 = vmatpush1.msra.mxu0 0.0
        %1449 = vmatprep.subr.mxu0 0.0
        %1450 = vmatpush1.msra.mxu0 0.0
        %1451 = vmatprep.subr.mxu0 0.0
        %1452 = vmatpush1.msra.mxu0 0.0
        %1453 = vmatprep.subr.mxu0 0.0
        %1454 = vmatpush1.msra.mxu0 0.0
        %1455 = vmatprep.subr.mxu0 0.0
        %1456 = vmatpush1.msra.mxu0 0.0
        %1457 = vmatprep.subr.mxu0 0.0
        %1458 = vmatpush1.msra.mxu0 0.0
        %1459 = vmatprep.subr.mxu0 0.0
        %1460 = vmatpush1.msra.mxu0 0.0
        %1461 = vmatprep.subr.mxu0 0.0
        %1462 = vmatpush1.msra.mxu0 0.0
        %1463 = vmatprep.subr.mxu0 0.0
        %1464 = vmatpush1.msra.mxu0 0.0
        %1465 = vmatprep.subr.mxu0 0.0
        %1466 = vmatpush1.msra.mxu0 0.0
        %1467 = vmatprep.subr.mxu0 0.0
        %1468 = vmatpush1.msra.mxu0 %v1432
        %1469 = vmatprep.subr.mxu0 0.0
        %1470 = vmatpush2.msra.mxu0 0.0
        %1471 = vmatprep.subr.mxu0 0.0
        %1472 = vmatpush2.msra.mxu0 0.0
        %1473 = vmatprep.subr.mxu0 0.0
        %1474 = vmatpush2.msra.mxu0 0.0
        %1475 = vmatprep.subr.mxu0 0.0
        %1476 = vmatpush2.msra.mxu0 0.0
        %1477 = vmatprep.subr.mxu0 0.0
        %1478 = vmatpush2.msra.mxu0 0.0
        %1479 = vmatprep.subr.mxu0 0.0
        %1480 = vmatpush2.msra.mxu0 0.0
        %1481 = vmatprep.subr.mxu0 0.0
        %1482 = vmatpush2.msra.mxu0 0.0
        %1483 = vmatprep.subr.mxu0 0.0
        %1484 = vmatpush2.msra.mxu0 0.0
        %1485 = vmatprep.subr.mxu0 0.0
        %1486 = vmatpush2.msra.mxu0 0.0
        %1487 = vmatprep.subr.mxu0 0.0
        %1488 = vmatpush2.msra.mxu0 0.0
        %1489 = vmatprep.subr.mxu0 0.0
        %1490 = vmatpush2.msra.mxu0 0.0
        %1491 = vmatprep.subr.mxu0 0.0
        %1492 = vmatpush2.msra.mxu0 0.0
        %1493 = vmatprep.subr.mxu0 0.0
        %1494 = vmatpush2.msra.mxu0 0.0
        %1495 = vmatprep.subr.mxu0 0.0
        %1496 = vmatpush2.msra.mxu0 0.0
        %1497 = vmatprep.subr.mxu0 0.0
        %1498 = vmatpush2.msra.mxu0 0.0
        %1499 = vmatprep.subr.mxu0 0.0
        %1500 = vmatpush2.msra.mxu0 0.0
        %1501 = vmatprep.mubr.f32.mxu0 0.0
        %1502 = vmatmul.mubr.f32.gmra.mxu0 %v1435
        %v1503 = vpop.f32.mrf.mxu0
        %v1504 = vadd.f32 0.0, %v1503
        %v1505 = vpop.f32.mrf.mxu0
        %1506 = vdwg.mxu0
        %1507 = vrot.lane.b32.xlu0 %v260, 96
        %v1508 = vpop.permute.xlu0 %1507
        %v1511 = vsel %vm265, %v974, 0
        %1513 = vmatprep.subr.mxu0 0.0
        %1514 = vmatpush1.msra.mxu0 0.0
        %1515 = vmatprep.subr.mxu0 0.0
        %1516 = vmatpush1.msra.mxu0 0.0
        %1517 = vmatprep.subr.mxu0 0.0
        %1518 = vmatpush1.msra.mxu0 0.0
        %1519 = vmatprep.subr.mxu0 0.0
        %1520 = vmatpush1.msra.mxu0 0.0
        %1521 = vmatprep.subr.mxu0 0.0
        %1522 = vmatpush1.msra.mxu0 0.0
        %1523 = vmatprep.subr.mxu0 0.0
        %1524 = vmatpush1.msra.mxu0 0.0
        %1525 = vmatprep.subr.mxu0 0.0
        %1526 = vmatpush1.msra.mxu0 0.0
        %1527 = vmatprep.subr.mxu0 0.0
        %1528 = vmatpush1.msra.mxu0 0.0
        %1529 = vmatprep.subr.mxu0 0.0
        %1530 = vmatpush1.msra.mxu0 0.0
        %1531 = vmatprep.subr.mxu0 0.0
        %1532 = vmatpush1.msra.mxu0 0.0
        %1533 = vmatprep.subr.mxu0 0.0
        %1534 = vmatpush1.msra.mxu0 0.0
        %1535 = vmatprep.subr.mxu0 0.0
        %1536 = vmatpush1.msra.mxu0 0.0
        %1537 = vmatprep.subr.mxu0 0.0
        %1538 = vmatpush1.msra.mxu0 0.0
        %1539 = vmatprep.subr.mxu0 0.0
        %1540 = vmatpush1.msra.mxu0 0.0
        %1541 = vmatprep.subr.mxu0 0.0
        %1542 = vmatpush1.msra.mxu0 0.0
        %1543 = vmatprep.subr.mxu0 0.0
        %1544 = vmatpush1.msra.mxu0 %v1508
        %1545 = vmatprep.subr.mxu0 0.0
        %1546 = vmatpush2.msra.mxu0 0.0
        %1547 = vmatprep.subr.mxu0 0.0
        %1548 = vmatpush2.msra.mxu0 0.0
        %1549 = vmatprep.subr.mxu0 0.0
        %1550 = vmatpush2.msra.mxu0 0.0
        %1551 = vmatprep.subr.mxu0 0.0
        %1552 = vmatpush2.msra.mxu0 0.0
        %1553 = vmatprep.subr.mxu0 0.0
        %1554 = vmatpush2.msra.mxu0 0.0
        %1555 = vmatprep.subr.mxu0 0.0
        %1556 = vmatpush2.msra.mxu0 0.0
        %1557 = vmatprep.subr.mxu0 0.0
        %1558 = vmatpush2.msra.mxu0 0.0
        %1559 = vmatprep.subr.mxu0 0.0
        %1560 = vmatpush2.msra.mxu0 0.0
        %1561 = vmatprep.subr.mxu0 0.0
        %1562 = vmatpush2.msra.mxu0 0.0
        %1563 = vmatprep.subr.mxu0 0.0
        %1564 = vmatpush2.msra.mxu0 0.0
        %1565 = vmatprep.subr.mxu0 0.0
        %1566 = vmatpush2.msra.mxu0 0.0
        %1567 = vmatprep.subr.mxu0 0.0
        %1568 = vmatpush2.msra.mxu0 0.0
        %1569 = vmatprep.subr.mxu0 0.0
        %1570 = vmatpush2.msra.mxu0 0.0
        %1571 = vmatprep.subr.mxu0 0.0
        %1572 = vmatpush2.msra.mxu0 0.0
        %1573 = vmatprep.subr.mxu0 0.0
        %1574 = vmatpush2.msra.mxu0 0.0
        %1575 = vmatprep.subr.mxu0 0.0
        %1576 = vmatpush2.msra.mxu0 0.0
        %1577 = vmatprep.mubr.f32.mxu0 0.0
        %1578 = vmatmul.mubr.f32.gmra.mxu0 %v1511
        %v1579 = vpop.f32.mrf.mxu0
        %v1580 = vadd.f32 0.0, %v1579
        %v1581 = vpop.f32.mrf.mxu0
        %1582 = vdwg.mxu0
        %v1583 = vld [vmem:[%s2] sm:$0xff]
        %1584 = vrot.lane.b32.xlu0 %v253, 120
        %v1585 = vpop.permute.xlu0 %1584
        %1586 = vrot.lane.b32.xlu0 %v253, 104
        %v1587 = vpop.permute.xlu0 %1586
        %v1588 = vsel %vm265, %v1585, 0
        %v1590 = vsel %vm265, %v1587, 0
        %1592 = vmatprep.subr.mxu0 0.0
        %1593 = vmatpush1.xpose.msra.mxu0 0.0
        %1594 = vmatprep.subr.mxu0 0.0
        %1595 = vmatpush1.xpose.msra.mxu0 0.0
        %1596 = vmatprep.subr.mxu0 0.0
        %1597 = vmatpush1.xpose.msra.mxu0 0.0
        %1598 = vmatprep.subr.mxu0 0.0
        %1599 = vmatpush1.xpose.msra.mxu0 0.0
        %1600 = vmatprep.subr.mxu0 0.0
        %1601 = vmatpush1.xpose.msra.mxu0 0.0
        %1602 = vmatprep.subr.mxu0 0.0
        %1603 = vmatpush1.xpose.msra.mxu0 0.0
        %1604 = vmatprep.subr.mxu0 0.0
        %1605 = vmatpush1.xpose.msra.mxu0 0.0
        %1606 = vmatprep.subr.mxu0 0.0
        %1607 = vmatpush1.xpose.msra.mxu0 0.0
        %1608 = vmatprep.subr.mxu0 0.0
        %1609 = vmatpush1.xpose.msra.mxu0 0.0
        %1610 = vmatprep.subr.mxu0 0.0
        %1611 = vmatpush1.xpose.msra.mxu0 0.0
        %1612 = vmatprep.subr.mxu0 0.0
        %1613 = vmatpush1.xpose.msra.mxu0 0.0
        %1614 = vmatprep.subr.mxu0 0.0
        %1615 = vmatpush1.xpose.msra.mxu0 0.0
        %1616 = vmatprep.subr.mxu0 0.0
        %1617 = vmatpush1.xpose.msra.mxu0 0.0
        %1618 = vmatprep.subr.mxu0 0.0
        %1619 = vmatpush1.xpose.msra.mxu0 0.0
        %1620 = vmatprep.subr.mxu0 0.0
        %1621 = vmatpush1.xpose.msra.mxu0 0.0
        %1622 = vmatprep.subr.mxu0 0.0
        %1623 = vmatpush1.xpose.msra.mxu0 %v1590
        %1624 = vmatprep.subr.mxu0 0.0
        %1625 = vmatpush2.xpose.msra.mxu0 0.0
        %1626 = vmatprep.subr.mxu0 0.0
        %1627 = vmatpush2.xpose.msra.mxu0 0.0
        %1628 = vmatprep.subr.mxu0 0.0
        %1629 = vmatpush2.xpose.msra.mxu0 0.0
        %1630 = vmatprep.subr.mxu0 0.0
        %1631 = vmatpush2.xpose.msra.mxu0 0.0
        %1632 = vmatprep.subr.mxu0 0.0
        %1633 = vmatpush2.xpose.msra.mxu0 0.0
        %1634 = vmatprep.subr.mxu0 0.0
        %1635 = vmatpush2.xpose.msra.mxu0 0.0
        %1636 = vmatprep.subr.mxu0 0.0
        %1637 = vmatpush2.xpose.msra.mxu0 0.0
        %1638 = vmatprep.subr.mxu0 0.0
        %1639 = vmatpush2.xpose.msra.mxu0 0.0
        %1640 = vmatprep.subr.mxu0 0.0
        %1641 = vmatpush2.xpose.msra.mxu0 0.0
        %1642 = vmatprep.subr.mxu0 0.0
        %1643 = vmatpush2.xpose.msra.mxu0 0.0
        %1644 = vmatprep.subr.mxu0 0.0
        %1645 = vmatpush2.xpose.msra.mxu0 0.0
        %1646 = vmatprep.subr.mxu0 0.0
        %1647 = vmatpush2.xpose.msra.mxu0 0.0
        %1648 = vmatprep.subr.mxu0 0.0
        %1649 = vmatpush2.xpose.msra.mxu0 0.0
        %1650 = vmatprep.subr.mxu0 0.0
        %1651 = vmatpush2.xpose.msra.mxu0 0.0
        %1652 = vmatprep.subr.mxu0 0.0
        %1653 = vmatpush2.xpose.msra.mxu0 0.0
        %1654 = vmatprep.subr.mxu0 0.0
        %1655 = vmatpush2.xpose.msra.mxu0 0.0
        %1656 = vmatprep.mubr.f32.mxu0 0.0
        %1657 = vmatmul.mubr.f32.gmra.mxu0 %v1588
        %v1658 = vpop.f32.mrf.mxu0
        %v1659 = vadd.f32 0.0, %v1658
        %v1660 = vpop.f32.mrf.mxu0
        %1661 = vdwg.mxu0
        %1662 = vrot.lane.b32.xlu0 %v254, 120
        %v1663 = vpop.permute.xlu0 %1662
        %1664 = vrot.lane.b32.xlu0 %v254, 104
        %v1665 = vpop.permute.xlu0 %1664
        %v1666 = vsel %vm265, %v1663, 0
        %v1668 = vsel %vm265, %v1665, 0
        %1670 = vmatprep.subr.mxu0 0.0
        %1671 = vmatpush1.xpose.msra.mxu0 0.0
        %1672 = vmatprep.subr.mxu0 0.0
        %1673 = vmatpush1.xpose.msra.mxu0 0.0
        %1674 = vmatprep.subr.mxu0 0.0
        %1675 = vmatpush1.xpose.msra.mxu0 0.0
        %1676 = vmatprep.subr.mxu0 0.0
        %1677 = vmatpush1.xpose.msra.mxu0 0.0
        %1678 = vmatprep.subr.mxu0 0.0
        %1679 = vmatpush1.xpose.msra.mxu0 0.0
        %1680 = vmatprep.subr.mxu0 0.0
        %1681 = vmatpush1.xpose.msra.mxu0 0.0
        %1682 = vmatprep.subr.mxu0 0.0
        %1683 = vmatpush1.xpose.msra.mxu0 0.0
        %1684 = vmatprep.subr.mxu0 0.0
        %1685 = vmatpush1.xpose.msra.mxu0 0.0
        %1686 = vmatprep.subr.mxu0 0.0
        %1687 = vmatpush1.xpose.msra.mxu0 0.0
        %1688 = vmatprep.subr.mxu0 0.0
        %1689 = vmatpush1.xpose.msra.mxu0 0.0
        %1690 = vmatprep.subr.mxu0 0.0
        %1691 = vmatpush1.xpose.msra.mxu0 0.0
        %1692 = vmatprep.subr.mxu0 0.0
        %1693 = vmatpush1.xpose.msra.mxu0 0.0
        %1694 = vmatprep.subr.mxu0 0.0
        %1695 = vmatpush1.xpose.msra.mxu0 0.0
        %1696 = vmatprep.subr.mxu0 0.0
        %1697 = vmatpush1.xpose.msra.mxu0 0.0
        %1698 = vmatprep.subr.mxu0 0.0
        %1699 = vmatpush1.xpose.msra.mxu0 0.0
        %1700 = vmatprep.subr.mxu0 0.0
        %1701 = vmatpush1.xpose.msra.mxu0 %v1668
        %1702 = vmatprep.subr.mxu0 0.0
        %1703 = vmatpush2.xpose.msra.mxu0 0.0
        %1704 = vmatprep.subr.mxu0 0.0
        %1705 = vmatpush2.xpose.msra.mxu0 0.0
        %1706 = vmatprep.subr.mxu0 0.0
        %1707 = vmatpush2.xpose.msra.mxu0 0.0
        %1708 = vmatprep.subr.mxu0 0.0
        %1709 = vmatpush2.xpose.msra.mxu0 0.0
        %1710 = vmatprep.subr.mxu0 0.0
        %1711 = vmatpush2.xpose.msra.mxu0 0.0
        %1712 = vmatprep.subr.mxu0 0.0
        %1713 = vmatpush2.xpose.msra.mxu0 0.0
        %1714 = vmatprep.subr.mxu0 0.0
        %1715 = vmatpush2.xpose.msra.mxu0 0.0
        %1716 = vmatprep.subr.mxu0 0.0
        %1717 = vmatpush2.xpose.msra.mxu0 0.0
        %1718 = vmatprep.subr.mxu0 0.0
        %1719 = vmatpush2.xpose.msra.mxu0 0.0
        %1720 = vmatprep.subr.mxu0 0.0
        %1721 = vmatpush2.xpose.msra.mxu0 0.0
        %1722 = vmatprep.subr.mxu0 0.0
        %1723 = vmatpush2.xpose.msra.mxu0 0.0
        %1724 = vmatprep.subr.mxu0 0.0
        %1725 = vmatpush2.xpose.msra.mxu0 0.0
        %1726 = vmatprep.subr.mxu0 0.0
        %1727 = vmatpush2.xpose.msra.mxu0 0.0
        %1728 = vmatprep.subr.mxu0 0.0
        %1729 = vmatpush2.xpose.msra.mxu0 0.0
        %1730 = vmatprep.subr.mxu0 0.0
        %1731 = vmatpush2.xpose.msra.mxu0 0.0
        %1732 = vmatprep.subr.mxu0 0.0
        %1733 = vmatpush2.xpose.msra.mxu0 0.0
        %1734 = vmatprep.mubr.f32.mxu0 0.0
        %1735 = vmatmul.mubr.f32.gmra.mxu0 %v1666
        %v1736 = vpop.f32.mrf.mxu0
        %v1737 = vadd.f32 0.0, %v1736
        %v1738 = vpop.f32.mrf.mxu0
        %1739 = vdwg.mxu0
        %1740 = vrot.lane.b32.xlu0 %v255, 120
        %v1741 = vpop.permute.xlu0 %1740
        %1742 = vrot.lane.b32.xlu0 %v255, 104
        %v1743 = vpop.permute.xlu0 %1742
        %v1744 = vsel %vm265, %v1741, 0
        %v1746 = vsel %vm265, %v1743, 0
        %1748 = vmatprep.subr.mxu0 0.0
        %1749 = vmatpush1.xpose.msra.mxu0 0.0
        %1750 = vmatprep.subr.mxu0 0.0
        %1751 = vmatpush1.xpose.msra.mxu0 0.0
        %1752 = vmatprep.subr.mxu0 0.0
        %1753 = vmatpush1.xpose.msra.mxu0 0.0
        %1754 = vmatprep.subr.mxu0 0.0
        %1755 = vmatpush1.xpose.msra.mxu0 0.0
        %1756 = vmatprep.subr.mxu0 0.0
        %1757 = vmatpush1.xpose.msra.mxu0 0.0
        %1758 = vmatprep.subr.mxu0 0.0
        %1759 = vmatpush1.xpose.msra.mxu0 0.0
        %1760 = vmatprep.subr.mxu0 0.0
        %1761 = vmatpush1.xpose.msra.mxu0 0.0
        %1762 = vmatprep.subr.mxu0 0.0
        %1763 = vmatpush1.xpose.msra.mxu0 0.0
        %1764 = vmatprep.subr.mxu0 0.0
        %1765 = vmatpush1.xpose.msra.mxu0 0.0
        %1766 = vmatprep.subr.mxu0 0.0
        %1767 = vmatpush1.xpose.msra.mxu0 0.0
        %1768 = vmatprep.subr.mxu0 0.0
        %1769 = vmatpush1.xpose.msra.mxu0 0.0
        %1770 = vmatprep.subr.mxu0 0.0
        %1771 = vmatpush1.xpose.msra.mxu0 0.0
        %1772 = vmatprep.subr.mxu0 0.0
        %1773 = vmatpush1.xpose.msra.mxu0 0.0
        %1774 = vmatprep.subr.mxu0 0.0
        %1775 = vmatpush1.xpose.msra.mxu0 0.0
        %1776 = vmatprep.subr.mxu0 0.0
        %1777 = vmatpush1.xpose.msra.mxu0 0.0
        %1778 = vmatprep.subr.mxu0 0.0
        %1779 = vmatpush1.xpose.msra.mxu0 %v1746
        %1780 = vmatprep.subr.mxu0 0.0
        %1781 = vmatpush2.xpose.msra.mxu0 0.0
        %1782 = vmatprep.subr.mxu0 0.0
        %1783 = vmatpush2.xpose.msra.mxu0 0.0
        %1784 = vmatprep.subr.mxu0 0.0
        %1785 = vmatpush2.xpose.msra.mxu0 0.0
        %1786 = vmatprep.subr.mxu0 0.0
        %1787 = vmatpush2.xpose.msra.mxu0 0.0
        %1788 = vmatprep.subr.mxu0 0.0
        %1789 = vmatpush2.xpose.msra.mxu0 0.0
        %1790 = vmatprep.subr.mxu0 0.0
        %1791 = vmatpush2.xpose.msra.mxu0 0.0
        %1792 = vmatprep.subr.mxu0 0.0
        %1793 = vmatpush2.xpose.msra.mxu0 0.0
        %1794 = vmatprep.subr.mxu0 0.0
        %1795 = vmatpush2.xpose.msra.mxu0 0.0
        %1796 = vmatprep.subr.mxu0 0.0
        %1797 = vmatpush2.xpose.msra.mxu0 0.0
        %1798 = vmatprep.subr.mxu0 0.0
        %1799 = vmatpush2.xpose.msra.mxu0 0.0
        %1800 = vmatprep.subr.mxu0 0.0
        %1801 = vmatpush2.xpose.msra.mxu0 0.0
        %1802 = vmatprep.subr.mxu0 0.0
        %1803 = vmatpush2.xpose.msra.mxu0 0.0
        %1804 = vmatprep.subr.mxu0 0.0
        %1805 = vmatpush2.xpose.msra.mxu0 0.0
        %1806 = vmatprep.subr.mxu0 0.0
        %1807 = vmatpush2.xpose.msra.mxu0 0.0
        %1808 = vmatprep.subr.mxu0 0.0
        %1809 = vmatpush2.xpose.msra.mxu0 0.0
        %1810 = vmatprep.subr.mxu0 0.0
        %1811 = vmatpush2.xpose.msra.mxu0 0.0
        %1812 = vmatprep.mubr.f32.mxu0 0.0
        %1813 = vmatmul.mubr.f32.gmra.mxu0 %v1744
        %v1814 = vpop.f32.mrf.mxu0
        %v1815 = vadd.f32 0.0, %v1814
        %v1816 = vpop.f32.mrf.mxu0
        %1817 = vdwg.mxu0
        %1818 = vrot.lane.b32.xlu0 %v256, 120
        %v1819 = vpop.permute.xlu0 %1818
        %1820 = vrot.lane.b32.xlu0 %v256, 104
        %v1821 = vpop.permute.xlu0 %1820
        %v1822 = vsel %vm265, %v1819, 0
        %v1824 = vsel %vm265, %v1821, 0
        %1826 = vmatprep.subr.mxu0 0.0
        %1827 = vmatpush1.xpose.msra.mxu0 0.0
        %1828 = vmatprep.subr.mxu0 0.0
        %1829 = vmatpush1.xpose.msra.mxu0 0.0
        %1830 = vmatprep.subr.mxu0 0.0
        %1831 = vmatpush1.xpose.msra.mxu0 0.0
        %1832 = vmatprep.subr.mxu0 0.0
        %1833 = vmatpush1.xpose.msra.mxu0 0.0
        %1834 = vmatprep.subr.mxu0 0.0
        %1835 = vmatpush1.xpose.msra.mxu0 0.0
        %1836 = vmatprep.subr.mxu0 0.0
        %1837 = vmatpush1.xpose.msra.mxu0 0.0
        %1838 = vmatprep.subr.mxu0 0.0
        %1839 = vmatpush1.xpose.msra.mxu0 0.0
        %1840 = vmatprep.subr.mxu0 0.0
        %1841 = vmatpush1.xpose.msra.mxu0 0.0
        %1842 = vmatprep.subr.mxu0 0.0
        %1843 = vmatpush1.xpose.msra.mxu0 0.0
        %1844 = vmatprep.subr.mxu0 0.0
        %1845 = vmatpush1.xpose.msra.mxu0 0.0
        %1846 = vmatprep.subr.mxu0 0.0
        %1847 = vmatpush1.xpose.msra.mxu0 0.0
        %1848 = vmatprep.subr.mxu0 0.0
        %1849 = vmatpush1.xpose.msra.mxu0 0.0
        %1850 = vmatprep.subr.mxu0 0.0
        %1851 = vmatpush1.xpose.msra.mxu0 0.0
        %1852 = vmatprep.subr.mxu0 0.0
        %1853 = vmatpush1.xpose.msra.mxu0 0.0
        %1854 = vmatprep.subr.mxu0 0.0
        %1855 = vmatpush1.xpose.msra.mxu0 0.0
        %1856 = vmatprep.subr.mxu0 0.0
        %1857 = vmatpush1.xpose.msra.mxu0 %v1824
        %1858 = vmatprep.subr.mxu0 0.0
        %1859 = vmatpush2.xpose.msra.mxu0 0.0
        %1860 = vmatprep.subr.mxu0 0.0
        %1861 = vmatpush2.xpose.msra.mxu0 0.0
        %1862 = vmatprep.subr.mxu0 0.0
        %1863 = vmatpush2.xpose.msra.mxu0 0.0
        %1864 = vmatprep.subr.mxu0 0.0
        %1865 = vmatpush2.xpose.msra.mxu0 0.0
        %1866 = vmatprep.subr.mxu0 0.0
        %1867 = vmatpush2.xpose.msra.mxu0 0.0
        %1868 = vmatprep.subr.mxu0 0.0
        %1869 = vmatpush2.xpose.msra.mxu0 0.0
        %1870 = vmatprep.subr.mxu0 0.0
        %1871 = vmatpush2.xpose.msra.mxu0 0.0
        %1872 = vmatprep.subr.mxu0 0.0
        %1873 = vmatpush2.xpose.msra.mxu0 0.0
        %1874 = vmatprep.subr.mxu0 0.0
        %1875 = vmatpush2.xpose.msra.mxu0 0.0
        %1876 = vmatprep.subr.mxu0 0.0
        %1877 = vmatpush2.xpose.msra.mxu0 0.0
        %1878 = vmatprep.subr.mxu0 0.0
        %1879 = vmatpush2.xpose.msra.mxu0 0.0
        %1880 = vmatprep.subr.mxu0 0.0
        %1881 = vmatpush2.xpose.msra.mxu0 0.0
        %1882 = vmatprep.subr.mxu0 0.0
        %1883 = vmatpush2.xpose.msra.mxu0 0.0
        %1884 = vmatprep.subr.mxu0 0.0
        %1885 = vmatpush2.xpose.msra.mxu0 0.0
        %1886 = vmatprep.subr.mxu0 0.0
        %1887 = vmatpush2.xpose.msra.mxu0 0.0
        %1888 = vmatprep.subr.mxu0 0.0
        %1889 = vmatpush2.xpose.msra.mxu0 0.0
        %1890 = vmatprep.mubr.f32.mxu0 0.0
        %1891 = vmatmul.mubr.f32.gmra.mxu0 %v1822
        %v1892 = vpop.f32.mrf.mxu0
        %v1893 = vadd.f32 0.0, %v1892
        %v1894 = vpop.f32.mrf.mxu0
        %1895 = vdwg.mxu0
        %1896 = vrot.lane.b32.xlu0 %v257, 120
        %v1897 = vpop.permute.xlu0 %1896
        %1898 = vrot.lane.b32.xlu0 %v257, 104
        %v1899 = vpop.permute.xlu0 %1898
        %v1900 = vsel %vm265, %v1897, 0
        %v1902 = vsel %vm265, %v1899, 0
        %1904 = vmatprep.subr.mxu0 0.0
        %1905 = vmatpush1.xpose.msra.mxu0 0.0
        %1906 = vmatprep.subr.mxu0 0.0
        %1907 = vmatpush1.xpose.msra.mxu0 0.0
        %1908 = vmatprep.subr.mxu0 0.0
        %1909 = vmatpush1.xpose.msra.mxu0 0.0
        %1910 = vmatprep.subr.mxu0 0.0
        %1911 = vmatpush1.xpose.msra.mxu0 0.0
        %1912 = vmatprep.subr.mxu0 0.0
        %1913 = vmatpush1.xpose.msra.mxu0 0.0
        %1914 = vmatprep.subr.mxu0 0.0
        %1915 = vmatpush1.xpose.msra.mxu0 0.0
        %1916 = vmatprep.subr.mxu0 0.0
        %1917 = vmatpush1.xpose.msra.mxu0 0.0
        %1918 = vmatprep.subr.mxu0 0.0
        %1919 = vmatpush1.xpose.msra.mxu0 0.0
        %1920 = vmatprep.subr.mxu0 0.0
        %1921 = vmatpush1.xpose.msra.mxu0 0.0
        %1922 = vmatprep.subr.mxu0 0.0
        %1923 = vmatpush1.xpose.msra.mxu0 0.0
        %1924 = vmatprep.subr.mxu0 0.0
        %1925 = vmatpush1.xpose.msra.mxu0 0.0
        %1926 = vmatprep.subr.mxu0 0.0
        %1927 = vmatpush1.xpose.msra.mxu0 0.0
        %1928 = vmatprep.subr.mxu0 0.0
        %1929 = vmatpush1.xpose.msra.mxu0 0.0
        %1930 = vmatprep.subr.mxu0 0.0
        %1931 = vmatpush1.xpose.msra.mxu0 0.0
        %1932 = vmatprep.subr.mxu0 0.0
        %1933 = vmatpush1.xpose.msra.mxu0 0.0
        %1934 = vmatprep.subr.mxu0 0.0
        %1935 = vmatpush1.xpose.msra.mxu0 %v1902
        %1936 = vmatprep.subr.mxu0 0.0
        %1937 = vmatpush2.xpose.msra.mxu0 0.0
        %1938 = vmatprep.subr.mxu0 0.0
        %1939 = vmatpush2.xpose.msra.mxu0 0.0
        %1940 = vmatprep.subr.mxu0 0.0
        %1941 = vmatpush2.xpose.msra.mxu0 0.0
        %1942 = vmatprep.subr.mxu0 0.0
        %1943 = vmatpush2.xpose.msra.mxu0 0.0
        %1944 = vmatprep.subr.mxu0 0.0
        %1945 = vmatpush2.xpose.msra.mxu0 0.0
        %1946 = vmatprep.subr.mxu0 0.0
        %1947 = vmatpush2.xpose.msra.mxu0 0.0
        %1948 = vmatprep.subr.mxu0 0.0
        %1949 = vmatpush2.xpose.msra.mxu0 0.0
        %1950 = vmatprep.subr.mxu0 0.0
        %1951 = vmatpush2.xpose.msra.mxu0 0.0
        %1952 = vmatprep.subr.mxu0 0.0
        %1953 = vmatpush2.xpose.msra.mxu0 0.0
        %1954 = vmatprep.subr.mxu0 0.0
        %1955 = vmatpush2.xpose.msra.mxu0 0.0
        %1956 = vmatprep.subr.mxu0 0.0
        %1957 = vmatpush2.xpose.msra.mxu0 0.0
        %1958 = vmatprep.subr.mxu0 0.0
        %1959 = vmatpush2.xpose.msra.mxu0 0.0
        %1960 = vmatprep.subr.mxu0 0.0
        %1961 = vmatpush2.xpose.msra.mxu0 0.0
        %1962 = vmatprep.subr.mxu0 0.0
        %1963 = vmatpush2.xpose.msra.mxu0 0.0
        %1964 = vmatprep.subr.mxu0 0.0
        %1965 = vmatpush2.xpose.msra.mxu0 0.0
        %1966 = vmatprep.subr.mxu0 0.0
        %1967 = vmatpush2.xpose.msra.mxu0 0.0
        %1968 = vmatprep.mubr.f32.mxu0 0.0
        %1969 = vmatmul.mubr.f32.gmra.mxu0 %v1900
        %v1970 = vpop.f32.mrf.mxu0
        %v1971 = vadd.f32 0.0, %v1970
        %v1972 = vpop.f32.mrf.mxu0
        %1973 = vdwg.mxu0
        %1974 = vrot.lane.b32.xlu0 %v258, 120
        %v1975 = vpop.permute.xlu0 %1974
        %1976 = vrot.lane.b32.xlu0 %v258, 104
        %v1977 = vpop.permute.xlu0 %1976
        %v1978 = vsel %vm265, %v1975, 0
        %v1980 = vsel %vm265, %v1977, 0
        %1982 = vmatprep.subr.mxu0 0.0
        %1983 = vmatpush1.xpose.msra.mxu0 0.0
        %1984 = vmatprep.subr.mxu0 0.0
        %1985 = vmatpush1.xpose.msra.mxu0 0.0
        %1986 = vmatprep.subr.mxu0 0.0
        %1987 = vmatpush1.xpose.msra.mxu0 0.0
        %1988 = vmatprep.subr.mxu0 0.0
        %1989 = vmatpush1.xpose.msra.mxu0 0.0
        %1990 = vmatprep.subr.mxu0 0.0
        %1991 = vmatpush1.xpose.msra.mxu0 0.0
        %1992 = vmatprep.subr.mxu0 0.0
        %1993 = vmatpush1.xpose.msra.mxu0 0.0
        %1994 = vmatprep.subr.mxu0 0.0
        %1995 = vmatpush1.xpose.msra.mxu0 0.0
        %1996 = vmatprep.subr.mxu0 0.0
        %1997 = vmatpush1.xpose.msra.mxu0 0.0
        %1998 = vmatprep.subr.mxu0 0.0
        %1999 = vmatpush1.xpose.msra.mxu0 0.0
        %2000 = vmatprep.subr.mxu0 0.0
        %2001 = vmatpush1.xpose.msra.mxu0 0.0
        %2002 = vmatprep.subr.mxu0 0.0
        %2003 = vmatpush1.xpose.msra.mxu0 0.0
        %2004 = vmatprep.subr.mxu0 0.0
        %2005 = vmatpush1.xpose.msra.mxu0 0.0
        %2006 = vmatprep.subr.mxu0 0.0
        %2007 = vmatpush1.xpose.msra.mxu0 0.0
        %2008 = vmatprep.subr.mxu0 0.0
        %2009 = vmatpush1.xpose.msra.mxu0 0.0
        %2010 = vmatprep.subr.mxu0 0.0
        %2011 = vmatpush1.xpose.msra.mxu0 0.0
        %2012 = vmatprep.subr.mxu0 0.0
        %2013 = vmatpush1.xpose.msra.mxu0 %v1980
        %2014 = vmatprep.subr.mxu0 0.0
        %2015 = vmatpush2.xpose.msra.mxu0 0.0
        %2016 = vmatprep.subr.mxu0 0.0
        %2017 = vmatpush2.xpose.msra.mxu0 0.0
        %2018 = vmatprep.subr.mxu0 0.0
        %2019 = vmatpush2.xpose.msra.mxu0 0.0
        %2020 = vmatprep.subr.mxu0 0.0
        %2021 = vmatpush2.xpose.msra.mxu0 0.0
        %2022 = vmatprep.subr.mxu0 0.0
        %2023 = vmatpush2.xpose.msra.mxu0 0.0
        %2024 = vmatprep.subr.mxu0 0.0
        %2025 = vmatpush2.xpose.msra.mxu0 0.0
        %2026 = vmatprep.subr.mxu0 0.0
        %2027 = vmatpush2.xpose.msra.mxu0 0.0
        %2028 = vmatprep.subr.mxu0 0.0
        %2029 = vmatpush2.xpose.msra.mxu0 0.0
        %2030 = vmatprep.subr.mxu0 0.0
        %2031 = vmatpush2.xpose.msra.mxu0 0.0
        %2032 = vmatprep.subr.mxu0 0.0
        %2033 = vmatpush2.xpose.msra.mxu0 0.0
        %2034 = vmatprep.subr.mxu0 0.0
        %2035 = vmatpush2.xpose.msra.mxu0 0.0
        %2036 = vmatprep.subr.mxu0 0.0
        %2037 = vmatpush2.xpose.msra.mxu0 0.0
        %2038 = vmatprep.subr.mxu0 0.0
        %2039 = vmatpush2.xpose.msra.mxu0 0.0
        %2040 = vmatprep.subr.mxu0 0.0
        %2041 = vmatpush2.xpose.msra.mxu0 0.0
        %2042 = vmatprep.subr.mxu0 0.0
        %2043 = vmatpush2.xpose.msra.mxu0 0.0
        %2044 = vmatprep.subr.mxu0 0.0
        %2045 = vmatpush2.xpose.msra.mxu0 0.0
        %2046 = vmatprep.mubr.f32.mxu0 0.0
        %2047 = vmatmul.mubr.f32.gmra.mxu0 %v1978
        %v2048 = vpop.f32.mrf.mxu0
        %v2049 = vadd.f32 0.0, %v2048
        %v2050 = vpop.f32.mrf.mxu0
        %2051 = vdwg.mxu0
        %2052 = vrot.lane.b32.xlu0 %v259, 120
        %v2053 = vpop.permute.xlu0 %2052
        %2054 = vrot.lane.b32.xlu0 %v259, 104
        %v2055 = vpop.permute.xlu0 %2054
        %v2056 = vsel %vm265, %v2053, 0
        %v2058 = vsel %vm265, %v2055, 0
        %2060 = vmatprep.subr.mxu0 0.0
        %2061 = vmatpush1.xpose.msra.mxu0 0.0
        %2062 = vmatprep.subr.mxu0 0.0
        %2063 = vmatpush1.xpose.msra.mxu0 0.0
        %2064 = vmatprep.subr.mxu0 0.0
        %2065 = vmatpush1.xpose.msra.mxu0 0.0
        %2066 = vmatprep.subr.mxu0 0.0
        %2067 = vmatpush1.xpose.msra.mxu0 0.0
        %2068 = vmatprep.subr.mxu0 0.0
        %2069 = vmatpush1.xpose.msra.mxu0 0.0
        %2070 = vmatprep.subr.mxu0 0.0
        %2071 = vmatpush1.xpose.msra.mxu0 0.0
        %2072 = vmatprep.subr.mxu0 0.0
        %2073 = vmatpush1.xpose.msra.mxu0 0.0
        %2074 = vmatprep.subr.mxu0 0.0
        %2075 = vmatpush1.xpose.msra.mxu0 0.0
        %2076 = vmatprep.subr.mxu0 0.0
        %2077 = vmatpush1.xpose.msra.mxu0 0.0
        %2078 = vmatprep.subr.mxu0 0.0
        %2079 = vmatpush1.xpose.msra.mxu0 0.0
        %2080 = vmatprep.subr.mxu0 0.0
        %2081 = vmatpush1.xpose.msra.mxu0 0.0
        %2082 = vmatprep.subr.mxu0 0.0
        %2083 = vmatpush1.xpose.msra.mxu0 0.0
        %2084 = vmatprep.subr.mxu0 0.0
        %2085 = vmatpush1.xpose.msra.mxu0 0.0
        %2086 = vmatprep.subr.mxu0 0.0
        %2087 = vmatpush1.xpose.msra.mxu0 0.0
        %2088 = vmatprep.subr.mxu0 0.0
        %2089 = vmatpush1.xpose.msra.mxu0 0.0
        %2090 = vmatprep.subr.mxu0 0.0
        %2091 = vmatpush1.xpose.msra.mxu0 %v2058
        %2092 = vmatprep.subr.mxu0 0.0
        %2093 = vmatpush2.xpose.msra.mxu0 0.0
        %2094 = vmatprep.subr.mxu0 0.0
        %2095 = vmatpush2.xpose.msra.mxu0 0.0
        %2096 = vmatprep.subr.mxu0 0.0
        %2097 = vmatpush2.xpose.msra.mxu0 0.0
        %2098 = vmatprep.subr.mxu0 0.0
        %2099 = vmatpush2.xpose.msra.mxu0 0.0
        %2100 = vmatprep.subr.mxu0 0.0
        %2101 = vmatpush2.xpose.msra.mxu0 0.0
        %2102 = vmatprep.subr.mxu0 0.0
        %2103 = vmatpush2.xpose.msra.mxu0 0.0
        %2104 = vmatprep.subr.mxu0 0.0
        %2105 = vmatpush2.xpose.msra.mxu0 0.0
        %2106 = vmatprep.subr.mxu0 0.0
        %2107 = vmatpush2.xpose.msra.mxu0 0.0
        %2108 = vmatprep.subr.mxu0 0.0
        %2109 = vmatpush2.xpose.msra.mxu0 0.0
        %2110 = vmatprep.subr.mxu0 0.0
        %2111 = vmatpush2.xpose.msra.mxu0 0.0
        %2112 = vmatprep.subr.mxu0 0.0
        %2113 = vmatpush2.xpose.msra.mxu0 0.0
        %2114 = vmatprep.subr.mxu0 0.0
        %2115 = vmatpush2.xpose.msra.mxu0 0.0
        %2116 = vmatprep.subr.mxu0 0.0
        %2117 = vmatpush2.xpose.msra.mxu0 0.0
        %2118 = vmatprep.subr.mxu0 0.0
        %2119 = vmatpush2.xpose.msra.mxu0 0.0
        %2120 = vmatprep.subr.mxu0 0.0
        %2121 = vmatpush2.xpose.msra.mxu0 0.0
        %2122 = vmatprep.subr.mxu0 0.0
        %2123 = vmatpush2.xpose.msra.mxu0 0.0
        %2124 = vmatprep.mubr.f32.mxu0 0.0
        %2125 = vmatmul.mubr.f32.gmra.mxu0 %v2056
        %v2126 = vpop.f32.mrf.mxu0
        %v2127 = vadd.f32 0.0, %v2126
        %v2128 = vpop.f32.mrf.mxu0
        %2129 = vdwg.mxu0
        %2130 = vrot.lane.b32.xlu0 %v260, 120
        %v2131 = vpop.permute.xlu0 %2130
        %2132 = vrot.lane.b32.xlu0 %v260, 104
        %v2133 = vpop.permute.xlu0 %2132
        %v2134 = vsel %vm265, %v2131, 0
        %v2136 = vsel %vm265, %v2133, 0
        %2138 = vmatprep.subr.mxu0 0.0
        %2139 = vmatpush1.xpose.msra.mxu0 0.0
        %2140 = vmatprep.subr.mxu0 0.0
        %2141 = vmatpush1.xpose.msra.mxu0 0.0
        %2142 = vmatprep.subr.mxu0 0.0
        %2143 = vmatpush1.xpose.msra.mxu0 0.0
        %2144 = vmatprep.subr.mxu0 0.0
        %2145 = vmatpush1.xpose.msra.mxu0 0.0
        %2146 = vmatprep.subr.mxu0 0.0
        %2147 = vmatpush1.xpose.msra.mxu0 0.0
        %2148 = vmatprep.subr.mxu0 0.0
        %2149 = vmatpush1.xpose.msra.mxu0 0.0
        %2150 = vmatprep.subr.mxu0 0.0
        %2151 = vmatpush1.xpose.msra.mxu0 0.0
        %2152 = vmatprep.subr.mxu0 0.0
        %2153 = vmatpush1.xpose.msra.mxu0 0.0
        %2154 = vmatprep.subr.mxu0 0.0
        %2155 = vmatpush1.xpose.msra.mxu0 0.0
        %2156 = vmatprep.subr.mxu0 0.0
        %2157 = vmatpush1.xpose.msra.mxu0 0.0
        %2158 = vmatprep.subr.mxu0 0.0
        %2159 = vmatpush1.xpose.msra.mxu0 0.0
        %2160 = vmatprep.subr.mxu0 0.0
        %2161 = vmatpush1.xpose.msra.mxu0 0.0
        %2162 = vmatprep.subr.mxu0 0.0
        %2163 = vmatpush1.xpose.msra.mxu0 0.0
        %2164 = vmatprep.subr.mxu0 0.0
        %2165 = vmatpush1.xpose.msra.mxu0 0.0
        %2166 = vmatprep.subr.mxu0 0.0
        %2167 = vmatpush1.xpose.msra.mxu0 0.0
        %2168 = vmatprep.subr.mxu0 0.0
        %2169 = vmatpush1.xpose.msra.mxu0 %v2136
        %2170 = vmatprep.subr.mxu0 0.0
        %2171 = vmatpush2.xpose.msra.mxu0 0.0
        %2172 = vmatprep.subr.mxu0 0.0
        %2173 = vmatpush2.xpose.msra.mxu0 0.0
        %2174 = vmatprep.subr.mxu0 0.0
        %2175 = vmatpush2.xpose.msra.mxu0 0.0
        %2176 = vmatprep.subr.mxu0 0.0
        %2177 = vmatpush2.xpose.msra.mxu0 0.0
        %2178 = vmatprep.subr.mxu0 0.0
        %2179 = vmatpush2.xpose.msra.mxu0 0.0
        %2180 = vmatprep.subr.mxu0 0.0
        %2181 = vmatpush2.xpose.msra.mxu0 0.0
        %2182 = vmatprep.subr.mxu0 0.0
        %2183 = vmatpush2.xpose.msra.mxu0 0.0
        %2184 = vmatprep.subr.mxu0 0.0
        %2185 = vmatpush2.xpose.msra.mxu0 0.0
        %2186 = vmatprep.subr.mxu0 0.0
        %2187 = vmatpush2.xpose.msra.mxu0 0.0
        %2188 = vmatprep.subr.mxu0 0.0
        %2189 = vmatpush2.xpose.msra.mxu0 0.0
        %2190 = vmatprep.subr.mxu0 0.0
        %2191 = vmatpush2.xpose.msra.mxu0 0.0
        %2192 = vmatprep.subr.mxu0 0.0
        %2193 = vmatpush2.xpose.msra.mxu0 0.0
        %2194 = vmatprep.subr.mxu0 0.0
        %2195 = vmatpush2.xpose.msra.mxu0 0.0
        %2196 = vmatprep.subr.mxu0 0.0
        %2197 = vmatpush2.xpose.msra.mxu0 0.0
        %2198 = vmatprep.subr.mxu0 0.0
        %2199 = vmatpush2.xpose.msra.mxu0 0.0
        %2200 = vmatprep.subr.mxu0 0.0
        %2201 = vmatpush2.xpose.msra.mxu0 0.0
        %2202 = vmatprep.mubr.f32.mxu0 0.0
        %2203 = vmatmul.mubr.f32.gmra.mxu0 %v2134
        %v2204 = vpop.f32.mrf.mxu0
        %v2205 = vadd.f32 0.0, %v2204
        %v2206 = vpop.f32.mrf.mxu0
        %2207 = vdwg.mxu0
        %v2208 = vmul.f32 %v1659, %v261
        %v2209 = vmul.f32 %v1737, %v261
        %v2210 = vmul.f32 %v1815, %v261
        %v2211 = vmul.f32 %v1893, %v261
        %v2212 = vmul.f32 %v1971, %v261
        %v2213 = vmul.f32 %v2049, %v261
        %v2214 = vmul.f32 %v2127, %v261
        %v2215 = vmul.f32 %v2205, %v261
        %v2216 = vsel %vm265, %v2208, -inf
        %2217 = vmax.xlane.f32.xlu0 %v2216
        %v2218 = vpop.xlane.xlu0 %2217
        %v2219 = vsel %vm265, %v2209, -inf
        %2220 = vmax.xlane.f32.xlu0 %v2219
        %v2221 = vpop.xlane.xlu0 %2220
        %v2222 = vsel %vm265, %v2210, -inf
        %2223 = vmax.xlane.f32.xlu0 %v2222
        %v2224 = vpop.xlane.xlu0 %2223
        %v2225 = vsel %vm265, %v2211, -inf
        %2226 = vmax.xlane.f32.xlu0 %v2225
        %v2227 = vpop.xlane.xlu0 %2226
        %v2228 = vsel %vm265, %v2212, -inf
        %2229 = vmax.xlane.f32.xlu0 %v2228
        %v2230 = vpop.xlane.xlu0 %2229
        %v2231 = vsel %vm265, %v2213, -inf
        %2232 = vmax.xlane.f32.xlu0 %v2231
        %v2233 = vpop.xlane.xlu0 %2232
        %v2234 = vsel %vm265, %v2214, -inf
        %2235 = vmax.xlane.f32.xlu0 %v2234
        %v2236 = vpop.xlane.xlu0 %2235
        %v2237 = vsel %vm265, %v2215, -inf
        %2238 = vmax.xlane.f32.xlu0 %v2237
        %v2239 = vpop.xlane.xlu0 %2238
        %v2240 = vsub.f32 %v2208, %v2218
        %v2241 = vsub.f32 %v2209, %v2221
        %v2242 = vsub.f32 %v2210, %v2224
        %v2243 = vsub.f32 %v2211, %v2227
        %v2244 = vsub.f32 %v2212, %v2230
        %v2245 = vsub.f32 %v2213, %v2233
        %v2246 = vsub.f32 %v2214, %v2236
        %v2247 = vsub.f32 %v2215, %v2239
        %v2248 = vmul.f32 %v2240, 1.442695
        %v2249 = vpow.pop %v2248
        %v2250 = vmul.f32 %v2241, 1.442695
        %v2251 = vpow.pop %v2250
        %v2252 = vmul.f32 %v2242, 1.442695
        %v2253 = vpow.pop %v2252
        %v2254 = vmul.f32 %v2243, 1.442695
        %v2255 = vpow.pop %v2254
        %v2256 = vmul.f32 %v2244, 1.442695
        %v2257 = vpow.pop %v2256
        %v2258 = vmul.f32 %v2245, 1.442695
        %v2259 = vpow.pop %v2258
        %v2260 = vmul.f32 %v2246, 1.442695
        %v2261 = vpow.pop %v2260
        %v2262 = vmul.f32 %v2247, 1.442695
        %v2263 = vpow.pop %v2262
        %v2264 = vsel %vm265, %v2249, 0.0
        %2265 = vadd.xlane.f32.xlu0 %v2264
        %v2266 = vpop.xlane.xlu0 %2265
        %v2267 = vsel %vm265, %v2251, 0.0
        %2268 = vadd.xlane.f32.xlu0 %v2267
        %v2269 = vpop.xlane.xlu0 %2268
        %v2270 = vsel %vm265, %v2253, 0.0
        %2271 = vadd.xlane.f32.xlu0 %v2270
        %v2272 = vpop.xlane.xlu0 %2271
        %v2273 = vsel %vm265, %v2255, 0.0
        %2274 = vadd.xlane.f32.xlu0 %v2273
        %v2275 = vpop.xlane.xlu0 %2274
        %v2276 = vsel %vm265, %v2257, 0.0
        %2277 = vadd.xlane.f32.xlu0 %v2276
        %v2278 = vpop.xlane.xlu0 %2277
        %v2279 = vsel %vm265, %v2259, 0.0
        %2280 = vadd.xlane.f32.xlu0 %v2279
        %v2281 = vpop.xlane.xlu0 %2280
        %v2282 = vsel %vm265, %v2261, 0.0
        %2283 = vadd.xlane.f32.xlu0 %v2282
        %v2284 = vpop.xlane.xlu0 %2283
        %v2285 = vsel %vm265, %v2263, 0.0
        %2286 = vadd.xlane.f32.xlu0 %v2285
        %v2287 = vpop.xlane.xlu0 %2286
        %v2288 = vrcp.pop %v2266
        %v2289 = vrcp.pop %v2269
        %v2290 = vrcp.pop %v2272
        %v2291 = vrcp.pop %v2275
        %v2292 = vrcp.pop %v2278
        %v2293 = vrcp.pop %v2281
        %v2294 = vrcp.pop %v2284
        %v2295 = vrcp.pop %v2287
        %v2296 = vmul.f32 %v2249, %v2288
        %v2297 = vmul.f32 %v2251, %v2289
        %v2298 = vmul.f32 %v2253, %v2290
        %v2299 = vmul.f32 %v2255, %v2291
        %v2300 = vmul.f32 %v2257, %v2292
        %v2301 = vmul.f32 %v2259, %v2293
        %v2302 = vmul.f32 %v2261, %v2294
        %v2303 = vmul.f32 %v2263, %v2295
        %2304 = vrot.lane.b32.xlu0 %v253, 88
        %v2305 = vpop.permute.xlu0 %2304
        %v2308 = vsel %vm265, %v2296, 0
        %2310 = vmatprep.subr.mxu0 0.0
        %2311 = vmatpush1.msra.mxu0 0.0
        %2312 = vmatprep.subr.mxu0 0.0
        %2313 = vmatpush1.msra.mxu0 0.0
        %2314 = vmatprep.subr.mxu0 0.0
        %2315 = vmatpush1.msra.mxu0 0.0
        %2316 = vmatprep.subr.mxu0 0.0
        %2317 = vmatpush1.msra.mxu0 0.0
        %2318 = vmatprep.subr.mxu0 0.0
        %2319 = vmatpush1.msra.mxu0 0.0
        %2320 = vmatprep.subr.mxu0 0.0
        %2321 = vmatpush1.msra.mxu0 0.0
        %2322 = vmatprep.subr.mxu0 0.0
        %2323 = vmatpush1.msra.mxu0 0.0
        %2324 = vmatprep.subr.mxu0 0.0
        %2325 = vmatpush1.msra.mxu0 0.0
        %2326 = vmatprep.subr.mxu0 0.0
        %2327 = vmatpush1.msra.mxu0 0.0
        %2328 = vmatprep.subr.mxu0 0.0
        %2329 = vmatpush1.msra.mxu0 0.0
        %2330 = vmatprep.subr.mxu0 0.0
        %2331 = vmatpush1.msra.mxu0 0.0
        %2332 = vmatprep.subr.mxu0 0.0
        %2333 = vmatpush1.msra.mxu0 0.0
        %2334 = vmatprep.subr.mxu0 0.0
        %2335 = vmatpush1.msra.mxu0 0.0
        %2336 = vmatprep.subr.mxu0 0.0
        %2337 = vmatpush1.msra.mxu0 0.0
        %2338 = vmatprep.subr.mxu0 0.0
        %2339 = vmatpush1.msra.mxu0 0.0
        %2340 = vmatprep.subr.mxu0 0.0
        %2341 = vmatpush1.msra.mxu0 %v2305
        %2342 = vmatprep.subr.mxu0 0.0
        %2343 = vmatpush2.msra.mxu0 0.0
        %2344 = vmatprep.subr.mxu0 0.0
        %2345 = vmatpush2.msra.mxu0 0.0
        %2346 = vmatprep.subr.mxu0 0.0
        %2347 = vmatpush2.msra.mxu0 0.0
        %2348 = vmatprep.subr.mxu0 0.0
        %2349 = vmatpush2.msra.mxu0 0.0
        %2350 = vmatprep.subr.mxu0 0.0
        %2351 = vmatpush2.msra.mxu0 0.0
        %2352 = vmatprep.subr.mxu0 0.0
        %2353 = vmatpush2.msra.mxu0 0.0
        %2354 = vmatprep.subr.mxu0 0.0
        %2355 = vmatpush2.msra.mxu0 0.0
        %2356 = vmatprep.subr.mxu0 0.0
        %2357 = vmatpush2.msra.mxu0 0.0
        %2358 = vmatprep.subr.mxu0 0.0
        %2359 = vmatpush2.msra.mxu0 0.0
        %2360 = vmatprep.subr.mxu0 0.0
        %2361 = vmatpush2.msra.mxu0 0.0
        %2362 = vmatprep.subr.mxu0 0.0
        %2363 = vmatpush2.msra.mxu0 0.0
        %2364 = vmatprep.subr.mxu0 0.0
        %2365 = vmatpush2.msra.mxu0 0.0
        %2366 = vmatprep.subr.mxu0 0.0
        %2367 = vmatpush2.msra.mxu0 0.0
        %2368 = vmatprep.subr.mxu0 0.0
        %2369 = vmatpush2.msra.mxu0 0.0
        %2370 = vmatprep.subr.mxu0 0.0
        %2371 = vmatpush2.msra.mxu0 0.0
        %2372 = vmatprep.subr.mxu0 0.0
        %2373 = vmatpush2.msra.mxu0 0.0
        %2374 = vmatprep.mubr.f32.mxu0 0.0
        %2375 = vmatmul.mubr.f32.gmra.mxu0 %v2308
        %v2376 = vpop.f32.mrf.mxu0
        %v2377 = vadd.f32 0.0, %v2376
        %v2378 = vpop.f32.mrf.mxu0
        %2379 = vdwg.mxu0
        %2380 = vrot.lane.b32.xlu0 %v254, 88
        %v2381 = vpop.permute.xlu0 %2380
        %v2384 = vsel %vm265, %v2297, 0
        %2386 = vmatprep.subr.mxu0 0.0
        %2387 = vmatpush1.msra.mxu0 0.0
        %2388 = vmatprep.subr.mxu0 0.0
        %2389 = vmatpush1.msra.mxu0 0.0
        %2390 = vmatprep.subr.mxu0 0.0
        %2391 = vmatpush1.msra.mxu0 0.0
        %2392 = vmatprep.subr.mxu0 0.0
        %2393 = vmatpush1.msra.mxu0 0.0
        %2394 = vmatprep.subr.mxu0 0.0
        %2395 = vmatpush1.msra.mxu0 0.0
        %2396 = vmatprep.subr.mxu0 0.0
        %2397 = vmatpush1.msra.mxu0 0.0
        %2398 = vmatprep.subr.mxu0 0.0
        %2399 = vmatpush1.msra.mxu0 0.0
        %2400 = vmatprep.subr.mxu0 0.0
        %2401 = vmatpush1.msra.mxu0 0.0
        %2402 = vmatprep.subr.mxu0 0.0
        %2403 = vmatpush1.msra.mxu0 0.0
        %2404 = vmatprep.subr.mxu0 0.0
        %2405 = vmatpush1.msra.mxu0 0.0
        %2406 = vmatprep.subr.mxu0 0.0
        %2407 = vmatpush1.msra.mxu0 0.0
        %2408 = vmatprep.subr.mxu0 0.0
        %2409 = vmatpush1.msra.mxu0 0.0
        %2410 = vmatprep.subr.mxu0 0.0
        %2411 = vmatpush1.msra.mxu0 0.0
        %2412 = vmatprep.subr.mxu0 0.0
        %2413 = vmatpush1.msra.mxu0 0.0
        %2414 = vmatprep.subr.mxu0 0.0
        %2415 = vmatpush1.msra.mxu0 0.0
        %2416 = vmatprep.subr.mxu0 0.0
        %2417 = vmatpush1.msra.mxu0 %v2381
        %2418 = vmatprep.subr.mxu0 0.0
        %2419 = vmatpush2.msra.mxu0 0.0
        %2420 = vmatprep.subr.mxu0 0.0
        %2421 = vmatpush2.msra.mxu0 0.0
        %2422 = vmatprep.subr.mxu0 0.0
        %2423 = vmatpush2.msra.mxu0 0.0
        %2424 = vmatprep.subr.mxu0 0.0
        %2425 = vmatpush2.msra.mxu0 0.0
        %2426 = vmatprep.subr.mxu0 0.0
        %2427 = vmatpush2.msra.mxu0 0.0
        %2428 = vmatprep.subr.mxu0 0.0
        %2429 = vmatpush2.msra.mxu0 0.0
        %2430 = vmatprep.subr.mxu0 0.0
        %2431 = vmatpush2.msra.mxu0 0.0
        %2432 = vmatprep.subr.mxu0 0.0
        %2433 = vmatpush2.msra.mxu0 0.0
        %2434 = vmatprep.subr.mxu0 0.0
        %2435 = vmatpush2.msra.mxu0 0.0
        %2436 = vmatprep.subr.mxu0 0.0
        %2437 = vmatpush2.msra.mxu0 0.0
        %2438 = vmatprep.subr.mxu0 0.0
        %2439 = vmatpush2.msra.mxu0 0.0
        %2440 = vmatprep.subr.mxu0 0.0
        %2441 = vmatpush2.msra.mxu0 0.0
        %2442 = vmatprep.subr.mxu0 0.0
        %2443 = vmatpush2.msra.mxu0 0.0
        %2444 = vmatprep.subr.mxu0 0.0
        %2445 = vmatpush2.msra.mxu0 0.0
        %2446 = vmatprep.subr.mxu0 0.0
        %2447 = vmatpush2.msra.mxu0 0.0
        %2448 = vmatprep.subr.mxu0 0.0
        %2449 = vmatpush2.msra.mxu0 0.0
        %2450 = vmatprep.mubr.f32.mxu0 0.0
        %2451 = vmatmul.mubr.f32.gmra.mxu0 %v2384
        %v2452 = vpop.f32.mrf.mxu0
        %v2453 = vadd.f32 0.0, %v2452
        %v2454 = vpop.f32.mrf.mxu0
        %2455 = vdwg.mxu0
        %2456 = vrot.lane.b32.xlu0 %v255, 88
        %v2457 = vpop.permute.xlu0 %2456
        %v2460 = vsel %vm265, %v2298, 0
        %2462 = vmatprep.subr.mxu0 0.0
        %2463 = vmatpush1.msra.mxu0 0.0
        %2464 = vmatprep.subr.mxu0 0.0
        %2465 = vmatpush1.msra.mxu0 0.0
        %2466 = vmatprep.subr.mxu0 0.0
        %2467 = vmatpush1.msra.mxu0 0.0
        %2468 = vmatprep.subr.mxu0 0.0
        %2469 = vmatpush1.msra.mxu0 0.0
        %2470 = vmatprep.subr.mxu0 0.0
        %2471 = vmatpush1.msra.mxu0 0.0
        %2472 = vmatprep.subr.mxu0 0.0
        %2473 = vmatpush1.msra.mxu0 0.0
        %2474 = vmatprep.subr.mxu0 0.0
        %2475 = vmatpush1.msra.mxu0 0.0
        %2476 = vmatprep.subr.mxu0 0.0
        %2477 = vmatpush1.msra.mxu0 0.0
        %2478 = vmatprep.subr.mxu0 0.0
        %2479 = vmatpush1.msra.mxu0 0.0
        %2480 = vmatprep.subr.mxu0 0.0
        %2481 = vmatpush1.msra.mxu0 0.0
        %2482 = vmatprep.subr.mxu0 0.0
        %2483 = vmatpush1.msra.mxu0 0.0
        %2484 = vmatprep.subr.mxu0 0.0
        %2485 = vmatpush1.msra.mxu0 0.0
        %2486 = vmatprep.subr.mxu0 0.0
        %2487 = vmatpush1.msra.mxu0 0.0
        %2488 = vmatprep.subr.mxu0 0.0
        %2489 = vmatpush1.msra.mxu0 0.0
        %2490 = vmatprep.subr.mxu0 0.0
        %2491 = vmatpush1.msra.mxu0 0.0
        %2492 = vmatprep.subr.mxu0 0.0
        %2493 = vmatpush1.msra.mxu0 %v2457
        %2494 = vmatprep.subr.mxu0 0.0
        %2495 = vmatpush2.msra.mxu0 0.0
        %2496 = vmatprep.subr.mxu0 0.0
        %2497 = vmatpush2.msra.mxu0 0.0
        %2498 = vmatprep.subr.mxu0 0.0
        %2499 = vmatpush2.msra.mxu0 0.0
        %2500 = vmatprep.subr.mxu0 0.0
        %2501 = vmatpush2.msra.mxu0 0.0
        %2502 = vmatprep.subr.mxu0 0.0
        %2503 = vmatpush2.msra.mxu0 0.0
        %2504 = vmatprep.subr.mxu0 0.0
        %2505 = vmatpush2.msra.mxu0 0.0
        %2506 = vmatprep.subr.mxu0 0.0
        %2507 = vmatpush2.msra.mxu0 0.0
        %2508 = vmatprep.subr.mxu0 0.0
        %2509 = vmatpush2.msra.mxu0 0.0
        %2510 = vmatprep.subr.mxu0 0.0
        %2511 = vmatpush2.msra.mxu0 0.0
        %2512 = vmatprep.subr.mxu0 0.0
        %2513 = vmatpush2.msra.mxu0 0.0
        %2514 = vmatprep.subr.mxu0 0.0
        %2515 = vmatpush2.msra.mxu0 0.0
        %2516 = vmatprep.subr.mxu0 0.0
        %2517 = vmatpush2.msra.mxu0 0.0
        %2518 = vmatprep.subr.mxu0 0.0
        %2519 = vmatpush2.msra.mxu0 0.0
        %2520 = vmatprep.subr.mxu0 0.0
        %2521 = vmatpush2.msra.mxu0 0.0
        %2522 = vmatprep.subr.mxu0 0.0
        %2523 = vmatpush2.msra.mxu0 0.0
        %2524 = vmatprep.subr.mxu0 0.0
        %2525 = vmatpush2.msra.mxu0 0.0
        %2526 = vmatprep.mubr.f32.mxu0 0.0
        %2527 = vmatmul.mubr.f32.gmra.mxu0 %v2460
        %v2528 = vpop.f32.mrf.mxu0
        %v2529 = vadd.f32 0.0, %v2528
        %v2530 = vpop.f32.mrf.mxu0
        %2531 = vdwg.mxu0
        %2532 = vrot.lane.b32.xlu0 %v256, 88
        %v2533 = vpop.permute.xlu0 %2532
        %v2536 = vsel %vm265, %v2299, 0
        %2538 = vmatprep.subr.mxu0 0.0
        %2539 = vmatpush1.msra.mxu0 0.0
        %2540 = vmatprep.subr.mxu0 0.0
        %2541 = vmatpush1.msra.mxu0 0.0
        %2542 = vmatprep.subr.mxu0 0.0
        %2543 = vmatpush1.msra.mxu0 0.0
        %2544 = vmatprep.subr.mxu0 0.0
        %2545 = vmatpush1.msra.mxu0 0.0
        %2546 = vmatprep.subr.mxu0 0.0
        %2547 = vmatpush1.msra.mxu0 0.0
        %2548 = vmatprep.subr.mxu0 0.0
        %2549 = vmatpush1.msra.mxu0 0.0
        %2550 = vmatprep.subr.mxu0 0.0
        %2551 = vmatpush1.msra.mxu0 0.0
        %2552 = vmatprep.subr.mxu0 0.0
        %2553 = vmatpush1.msra.mxu0 0.0
        %2554 = vmatprep.subr.mxu0 0.0
        %2555 = vmatpush1.msra.mxu0 0.0
        %2556 = vmatprep.subr.mxu0 0.0
        %2557 = vmatpush1.msra.mxu0 0.0
        %2558 = vmatprep.subr.mxu0 0.0
        %2559 = vmatpush1.msra.mxu0 0.0
        %2560 = vmatprep.subr.mxu0 0.0
        %2561 = vmatpush1.msra.mxu0 0.0
        %2562 = vmatprep.subr.mxu0 0.0
        %2563 = vmatpush1.msra.mxu0 0.0
        %2564 = vmatprep.subr.mxu0 0.0
        %2565 = vmatpush1.msra.mxu0 0.0
        %2566 = vmatprep.subr.mxu0 0.0
        %2567 = vmatpush1.msra.mxu0 0.0
        %2568 = vmatprep.subr.mxu0 0.0
        %2569 = vmatpush1.msra.mxu0 %v2533
        %2570 = vmatprep.subr.mxu0 0.0
        %2571 = vmatpush2.msra.mxu0 0.0
        %2572 = vmatprep.subr.mxu0 0.0
        %2573 = vmatpush2.msra.mxu0 0.0
        %2574 = vmatprep.subr.mxu0 0.0
        %2575 = vmatpush2.msra.mxu0 0.0
        %2576 = vmatprep.subr.mxu0 0.0
        %2577 = vmatpush2.msra.mxu0 0.0
        %2578 = vmatprep.subr.mxu0 0.0
        %2579 = vmatpush2.msra.mxu0 0.0
        %2580 = vmatprep.subr.mxu0 0.0
        %2581 = vmatpush2.msra.mxu0 0.0
        %2582 = vmatprep.subr.mxu0 0.0
        %2583 = vmatpush2.msra.mxu0 0.0
        %2584 = vmatprep.subr.mxu0 0.0
        %2585 = vmatpush2.msra.mxu0 0.0
        %2586 = vmatprep.subr.mxu0 0.0
        %2587 = vmatpush2.msra.mxu0 0.0
        %2588 = vmatprep.subr.mxu0 0.0
        %2589 = vmatpush2.msra.mxu0 0.0
        %2590 = vmatprep.subr.mxu0 0.0
        %2591 = vmatpush2.msra.mxu0 0.0
        %2592 = vmatprep.subr.mxu0 0.0
        %2593 = vmatpush2.msra.mxu0 0.0
        %2594 = vmatprep.subr.mxu0 0.0
        %2595 = vmatpush2.msra.mxu0 0.0
        %2596 = vmatprep.subr.mxu0 0.0
        %2597 = vmatpush2.msra.mxu0 0.0
        %2598 = vmatprep.subr.mxu0 0.0
        %2599 = vmatpush2.msra.mxu0 0.0
        %2600 = vmatprep.subr.mxu0 0.0
        %2601 = vmatpush2.msra.mxu0 0.0
        %2602 = vmatprep.mubr.f32.mxu0 0.0
        %2603 = vmatmul.mubr.f32.gmra.mxu0 %v2536
        %v2604 = vpop.f32.mrf.mxu0
        %v2605 = vadd.f32 0.0, %v2604
        %v2606 = vpop.f32.mrf.mxu0
        %2607 = vdwg.mxu0
        %2608 = vrot.lane.b32.xlu0 %v257, 88
        %v2609 = vpop.permute.xlu0 %2608
        %v2612 = vsel %vm265, %v2300, 0
        %2614 = vmatprep.subr.mxu0 0.0
        %2615 = vmatpush1.msra.mxu0 0.0
        %2616 = vmatprep.subr.mxu0 0.0
        %2617 = vmatpush1.msra.mxu0 0.0
        %2618 = vmatprep.subr.mxu0 0.0
        %2619 = vmatpush1.msra.mxu0 0.0
        %2620 = vmatprep.subr.mxu0 0.0
        %2621 = vmatpush1.msra.mxu0 0.0
        %2622 = vmatprep.subr.mxu0 0.0
        %2623 = vmatpush1.msra.mxu0 0.0
        %2624 = vmatprep.subr.mxu0 0.0
        %2625 = vmatpush1.msra.mxu0 0.0
        %2626 = vmatprep.subr.mxu0 0.0
        %2627 = vmatpush1.msra.mxu0 0.0
        %2628 = vmatprep.subr.mxu0 0.0
        %2629 = vmatpush1.msra.mxu0 0.0
        %2630 = vmatprep.subr.mxu0 0.0
        %2631 = vmatpush1.msra.mxu0 0.0
        %2632 = vmatprep.subr.mxu0 0.0
        %2633 = vmatpush1.msra.mxu0 0.0
        %2634 = vmatprep.subr.mxu0 0.0
        %2635 = vmatpush1.msra.mxu0 0.0
        %2636 = vmatprep.subr.mxu0 0.0
        %2637 = vmatpush1.msra.mxu0 0.0
        %2638 = vmatprep.subr.mxu0 0.0
        %2639 = vmatpush1.msra.mxu0 0.0
        %2640 = vmatprep.subr.mxu0 0.0
        %2641 = vmatpush1.msra.mxu0 0.0
        %2642 = vmatprep.subr.mxu0 0.0
        %2643 = vmatpush1.msra.mxu0 0.0
        %2644 = vmatprep.subr.mxu0 0.0
        %2645 = vmatpush1.msra.mxu0 %v2609
        %2646 = vmatprep.subr.mxu0 0.0
        %2647 = vmatpush2.msra.mxu0 0.0
        %2648 = vmatprep.subr.mxu0 0.0
        %2649 = vmatpush2.msra.mxu0 0.0
        %2650 = vmatprep.subr.mxu0 0.0
        %2651 = vmatpush2.msra.mxu0 0.0
        %2652 = vmatprep.subr.mxu0 0.0
        %2653 = vmatpush2.msra.mxu0 0.0
        %2654 = vmatprep.subr.mxu0 0.0
        %2655 = vmatpush2.msra.mxu0 0.0
        %2656 = vmatprep.subr.mxu0 0.0
        %2657 = vmatpush2.msra.mxu0 0.0
        %2658 = vmatprep.subr.mxu0 0.0
        %2659 = vmatpush2.msra.mxu0 0.0
        %2660 = vmatprep.subr.mxu0 0.0
        %2661 = vmatpush2.msra.mxu0 0.0
        %2662 = vmatprep.subr.mxu0 0.0
        %2663 = vmatpush2.msra.mxu0 0.0
        %2664 = vmatprep.subr.mxu0 0.0
        %2665 = vmatpush2.msra.mxu0 0.0
        %2666 = vmatprep.subr.mxu0 0.0
        %2667 = vmatpush2.msra.mxu0 0.0
        %2668 = vmatprep.subr.mxu0 0.0
        %2669 = vmatpush2.msra.mxu0 0.0
        %2670 = vmatprep.subr.mxu0 0.0
        %2671 = vmatpush2.msra.mxu0 0.0
        %2672 = vmatprep.subr.mxu0 0.0
        %2673 = vmatpush2.msra.mxu0 0.0
        %2674 = vmatprep.subr.mxu0 0.0
        %2675 = vmatpush2.msra.mxu0 0.0
        %2676 = vmatprep.subr.mxu0 0.0
        %2677 = vmatpush2.msra.mxu0 0.0
        %2678 = vmatprep.mubr.f32.mxu0 0.0
        %2679 = vmatmul.mubr.f32.gmra.mxu0 %v2612
        %v2680 = vpop.f32.mrf.mxu0
        %v2681 = vadd.f32 0.0, %v2680
        %v2682 = vpop.f32.mrf.mxu0
        %2683 = vdwg.mxu0
        %2684 = vrot.lane.b32.xlu0 %v258, 88
        %v2685 = vpop.permute.xlu0 %2684
        %v2688 = vsel %vm265, %v2301, 0
        %2690 = vmatprep.subr.mxu0 0.0
        %2691 = vmatpush1.msra.mxu0 0.0
        %2692 = vmatprep.subr.mxu0 0.0
        %2693 = vmatpush1.msra.mxu0 0.0
        %2694 = vmatprep.subr.mxu0 0.0
        %2695 = vmatpush1.msra.mxu0 0.0
        %2696 = vmatprep.subr.mxu0 0.0
        %2697 = vmatpush1.msra.mxu0 0.0
        %2698 = vmatprep.subr.mxu0 0.0
        %2699 = vmatpush1.msra.mxu0 0.0
        %2700 = vmatprep.subr.mxu0 0.0
        %2701 = vmatpush1.msra.mxu0 0.0
        %2702 = vmatprep.subr.mxu0 0.0
        %2703 = vmatpush1.msra.mxu0 0.0
        %2704 = vmatprep.subr.mxu0 0.0
        %2705 = vmatpush1.msra.mxu0 0.0
        %2706 = vmatprep.subr.mxu0 0.0
        %2707 = vmatpush1.msra.mxu0 0.0
        %2708 = vmatprep.subr.mxu0 0.0
        %2709 = vmatpush1.msra.mxu0 0.0
        %2710 = vmatprep.subr.mxu0 0.0
        %2711 = vmatpush1.msra.mxu0 0.0
        %2712 = vmatprep.subr.mxu0 0.0
        %2713 = vmatpush1.msra.mxu0 0.0
        %2714 = vmatprep.subr.mxu0 0.0
        %2715 = vmatpush1.msra.mxu0 0.0
        %2716 = vmatprep.subr.mxu0 0.0
        %2717 = vmatpush1.msra.mxu0 0.0
        %2718 = vmatprep.subr.mxu0 0.0
        %2719 = vmatpush1.msra.mxu0 0.0
        %2720 = vmatprep.subr.mxu0 0.0
        %2721 = vmatpush1.msra.mxu0 %v2685
        %2722 = vmatprep.subr.mxu0 0.0
        %2723 = vmatpush2.msra.mxu0 0.0
        %2724 = vmatprep.subr.mxu0 0.0
        %2725 = vmatpush2.msra.mxu0 0.0
        %2726 = vmatprep.subr.mxu0 0.0
        %2727 = vmatpush2.msra.mxu0 0.0
        %2728 = vmatprep.subr.mxu0 0.0
        %2729 = vmatpush2.msra.mxu0 0.0
        %2730 = vmatprep.subr.mxu0 0.0
        %2731 = vmatpush2.msra.mxu0 0.0
        %2732 = vmatprep.subr.mxu0 0.0
        %2733 = vmatpush2.msra.mxu0 0.0
        %2734 = vmatprep.subr.mxu0 0.0
        %2735 = vmatpush2.msra.mxu0 0.0
        %2736 = vmatprep.subr.mxu0 0.0
        %2737 = vmatpush2.msra.mxu0 0.0
        %2738 = vmatprep.subr.mxu0 0.0
        %2739 = vmatpush2.msra.mxu0 0.0
        %2740 = vmatprep.subr.mxu0 0.0
        %2741 = vmatpush2.msra.mxu0 0.0
        %2742 = vmatprep.subr.mxu0 0.0
        %2743 = vmatpush2.msra.mxu0 0.0
        %2744 = vmatprep.subr.mxu0 0.0
        %2745 = vmatpush2.msra.mxu0 0.0
        %2746 = vmatprep.subr.mxu0 0.0
        %2747 = vmatpush2.msra.mxu0 0.0
        %2748 = vmatprep.subr.mxu0 0.0
        %2749 = vmatpush2.msra.mxu0 0.0
        %2750 = vmatprep.subr.mxu0 0.0
        %2751 = vmatpush2.msra.mxu0 0.0
        %2752 = vmatprep.subr.mxu0 0.0
        %2753 = vmatpush2.msra.mxu0 0.0
        %2754 = vmatprep.mubr.f32.mxu0 0.0
        %2755 = vmatmul.mubr.f32.gmra.mxu0 %v2688
        %v2756 = vpop.f32.mrf.mxu0
        %v2757 = vadd.f32 0.0, %v2756
        %v2758 = vpop.f32.mrf.mxu0
        %2759 = vdwg.mxu0
        %2760 = vrot.lane.b32.xlu0 %v259, 88
        %v2761 = vpop.permute.xlu0 %2760
        %v2764 = vsel %vm265, %v2302, 0
        %2766 = vmatprep.subr.mxu0 0.0
        %2767 = vmatpush1.msra.mxu0 0.0
        %2768 = vmatprep.subr.mxu0 0.0
        %2769 = vmatpush1.msra.mxu0 0.0
        %2770 = vmatprep.subr.mxu0 0.0
        %2771 = vmatpush1.msra.mxu0 0.0
        %2772 = vmatprep.subr.mxu0 0.0
        %2773 = vmatpush1.msra.mxu0 0.0
        %2774 = vmatprep.subr.mxu0 0.0
        %2775 = vmatpush1.msra.mxu0 0.0
        %2776 = vmatprep.subr.mxu0 0.0
        %2777 = vmatpush1.msra.mxu0 0.0
        %2778 = vmatprep.subr.mxu0 0.0
        %2779 = vmatpush1.msra.mxu0 0.0
        %2780 = vmatprep.subr.mxu0 0.0
        %2781 = vmatpush1.msra.mxu0 0.0
        %2782 = vmatprep.subr.mxu0 0.0
        %2783 = vmatpush1.msra.mxu0 0.0
        %2784 = vmatprep.subr.mxu0 0.0
        %2785 = vmatpush1.msra.mxu0 0.0
        %2786 = vmatprep.subr.mxu0 0.0
        %2787 = vmatpush1.msra.mxu0 0.0
        %2788 = vmatprep.subr.mxu0 0.0
        %2789 = vmatpush1.msra.mxu0 0.0
        %2790 = vmatprep.subr.mxu0 0.0
        %2791 = vmatpush1.msra.mxu0 0.0
        %2792 = vmatprep.subr.mxu0 0.0
        %2793 = vmatpush1.msra.mxu0 0.0
        %2794 = vmatprep.subr.mxu0 0.0
        %2795 = vmatpush1.msra.mxu0 0.0
        %2796 = vmatprep.subr.mxu0 0.0
        %2797 = vmatpush1.msra.mxu0 %v2761
        %2798 = vmatprep.subr.mxu0 0.0
        %2799 = vmatpush2.msra.mxu0 0.0
        %2800 = vmatprep.subr.mxu0 0.0
        %2801 = vmatpush2.msra.mxu0 0.0
        %2802 = vmatprep.subr.mxu0 0.0
        %2803 = vmatpush2.msra.mxu0 0.0
        %2804 = vmatprep.subr.mxu0 0.0
        %2805 = vmatpush2.msra.mxu0 0.0
        %2806 = vmatprep.subr.mxu0 0.0
        %2807 = vmatpush2.msra.mxu0 0.0
        %2808 = vmatprep.subr.mxu0 0.0
        %2809 = vmatpush2.msra.mxu0 0.0
        %2810 = vmatprep.subr.mxu0 0.0
        %2811 = vmatpush2.msra.mxu0 0.0
        %2812 = vmatprep.subr.mxu0 0.0
        %2813 = vmatpush2.msra.mxu0 0.0
        %2814 = vmatprep.subr.mxu0 0.0
        %2815 = vmatpush2.msra.mxu0 0.0
        %2816 = vmatprep.subr.mxu0 0.0
        %2817 = vmatpush2.msra.mxu0 0.0
        %2818 = vmatprep.subr.mxu0 0.0
        %2819 = vmatpush2.msra.mxu0 0.0
        %2820 = vmatprep.subr.mxu0 0.0
        %2821 = vmatpush2.msra.mxu0 0.0
        %2822 = vmatprep.subr.mxu0 0.0
        %2823 = vmatpush2.msra.mxu0 0.0
        %2824 = vmatprep.subr.mxu0 0.0
        %2825 = vmatpush2.msra.mxu0 0.0
        %2826 = vmatprep.subr.mxu0 0.0
        %2827 = vmatpush2.msra.mxu0 0.0
        %2828 = vmatprep.subr.mxu0 0.0
        %2829 = vmatpush2.msra.mxu0 0.0
        %2830 = vmatprep.mubr.f32.mxu0 0.0
        %2831 = vmatmul.mubr.f32.gmra.mxu0 %v2764
        %v2832 = vpop.f32.mrf.mxu0
        %v2833 = vadd.f32 0.0, %v2832
        %v2834 = vpop.f32.mrf.mxu0
        %2835 = vdwg.mxu0
        %2836 = vrot.lane.b32.xlu0 %v260, 88
        %v2837 = vpop.permute.xlu0 %2836
        %v2840 = vsel %vm265, %v2303, 0
        %2842 = vmatprep.subr.mxu0 0.0
        %2843 = vmatpush1.msra.mxu0 0.0
        %2844 = vmatprep.subr.mxu0 0.0
        %2845 = vmatpush1.msra.mxu0 0.0
        %2846 = vmatprep.subr.mxu0 0.0
        %2847 = vmatpush1.msra.mxu0 0.0
        %2848 = vmatprep.subr.mxu0 0.0
        %2849 = vmatpush1.msra.mxu0 0.0
        %2850 = vmatprep.subr.mxu0 0.0
        %2851 = vmatpush1.msra.mxu0 0.0
        %2852 = vmatprep.subr.mxu0 0.0
        %2853 = vmatpush1.msra.mxu0 0.0
        %2854 = vmatprep.subr.mxu0 0.0
        %2855 = vmatpush1.msra.mxu0 0.0
        %2856 = vmatprep.subr.mxu0 0.0
        %2857 = vmatpush1.msra.mxu0 0.0
        %2858 = vmatprep.subr.mxu0 0.0
        %2859 = vmatpush1.msra.mxu0 0.0
        %2860 = vmatprep.subr.mxu0 0.0
        %2861 = vmatpush1.msra.mxu0 0.0
        %2862 = vmatprep.subr.mxu0 0.0
        %2863 = vmatpush1.msra.mxu0 0.0
        %2864 = vmatprep.subr.mxu0 0.0
        %2865 = vmatpush1.msra.mxu0 0.0
        %2866 = vmatprep.subr.mxu0 0.0
        %2867 = vmatpush1.msra.mxu0 0.0
        %2868 = vmatprep.subr.mxu0 0.0
        %2869 = vmatpush1.msra.mxu0 0.0
        %2870 = vmatprep.subr.mxu0 0.0
        %2871 = vmatpush1.msra.mxu0 0.0
        %2872 = vmatprep.subr.mxu0 0.0
        %2873 = vmatpush1.msra.mxu0 %v2837
        %2874 = vmatprep.subr.mxu0 0.0
        %2875 = vmatpush2.msra.mxu0 0.0
        %2876 = vmatprep.subr.mxu0 0.0
        %2877 = vmatpush2.msra.mxu0 0.0
        %2878 = vmatprep.subr.mxu0 0.0
        %2879 = vmatpush2.msra.mxu0 0.0
        %2880 = vmatprep.subr.mxu0 0.0
        %2881 = vmatpush2.msra.mxu0 0.0
        %2882 = vmatprep.subr.mxu0 0.0
        %2883 = vmatpush2.msra.mxu0 0.0
        %2884 = vmatprep.subr.mxu0 0.0
        %2885 = vmatpush2.msra.mxu0 0.0
        %2886 = vmatprep.subr.mxu0 0.0
        %2887 = vmatpush2.msra.mxu0 0.0
        %2888 = vmatprep.subr.mxu0 0.0
        %2889 = vmatpush2.msra.mxu0 0.0
        %2890 = vmatprep.subr.mxu0 0.0
        %2891 = vmatpush2.msra.mxu0 0.0
        %2892 = vmatprep.subr.mxu0 0.0
        %2893 = vmatpush2.msra.mxu0 0.0
        %2894 = vmatprep.subr.mxu0 0.0
        %2895 = vmatpush2.msra.mxu0 0.0
        %2896 = vmatprep.subr.mxu0 0.0
        %2897 = vmatpush2.msra.mxu0 0.0
        %2898 = vmatprep.subr.mxu0 0.0
        %2899 = vmatpush2.msra.mxu0 0.0
        %2900 = vmatprep.subr.mxu0 0.0
        %2901 = vmatpush2.msra.mxu0 0.0
        %2902 = vmatprep.subr.mxu0 0.0
        %2903 = vmatpush2.msra.mxu0 0.0
        %2904 = vmatprep.subr.mxu0 0.0
        %2905 = vmatpush2.msra.mxu0 0.0
        %2906 = vmatprep.mubr.f32.mxu0 0.0
        %2907 = vmatmul.mubr.f32.gmra.mxu0 %v2840
        %v2908 = vpop.f32.mrf.mxu0
        %v2909 = vadd.f32 0.0, %v2908
        %v2910 = vpop.f32.mrf.mxu0
        %2911 = vdwg.mxu0
        %v2912 = vld [vmem:[%s2 + $0x8] sm:$0xff]
        %v2914 = vsel %vm265, %v2377, 0
        %v2917 = vsel %vm265, %v2453, 0
        %v2920 = vsel %vm265, %v2529, 0
        %v2923 = vsel %vm265, %v2605, 0
        %v2926 = vsel %vm265, %v2681, 0
        %v2929 = vsel %vm265, %v2757, 0
        %v2932 = vsel %vm265, %v2833, 0
        %v2935 = vsel %vm265, %v2909, 0
        %2937 = vmatprep.subr.mxu0 0.0
        %2938 = vmatpush1.msra.mxu0 0.0
        %2939 = vmatprep.subr.mxu0 0.0
        %2940 = vmatpush1.msra.mxu0 0.0
        %2941 = vmatprep.subr.mxu0 0.0
        %2942 = vmatpush1.msra.mxu0 0.0
        %2943 = vmatprep.subr.mxu0 0.0
        %2944 = vmatpush1.msra.mxu0 0.0
        %2945 = vmatprep.subr.mxu0 0.0
        %2946 = vmatpush1.msra.mxu0 0.0
        %2947 = vmatprep.subr.mxu0 0.0
        %2948 = vmatpush1.msra.mxu0 0.0
        %2949 = vmatprep.subr.mxu0 0.0
        %2950 = vmatpush1.msra.mxu0 0.0
        %2951 = vmatprep.subr.mxu0 0.0
        %2952 = vmatpush1.msra.mxu0 0.0
        %2953 = vmatprep.subr.mxu0 0.0
        %2954 = vmatpush1.msra.mxu0 0.0
        %2955 = vmatprep.subr.mxu0 0.0
        %2956 = vmatpush1.msra.mxu0 0.0
        %2957 = vmatprep.subr.mxu0 0.0
        %2958 = vmatpush1.msra.mxu0 0.0
        %2959 = vmatprep.subr.mxu0 0.0
        %2960 = vmatpush1.msra.mxu0 0.0
        %2961 = vmatprep.subr.mxu0 0.0
        %2962 = vmatpush1.msra.mxu0 0.0
        %2963 = vmatprep.subr.mxu0 0.0
        %2964 = vmatpush1.msra.mxu0 0.0
        %2965 = vmatprep.subr.mxu0 0.0
        %2966 = vmatpush1.msra.mxu0 0.0
        %2967 = vmatprep.subr.mxu0 0.0
        %2968 = vmatpush1.msra.mxu0 %v2912
        %2969 = vmatprep.subr.mxu0 0.0
        %2970 = vmatpush2.msra.mxu0 0.0
        %2971 = vmatprep.subr.mxu0 0.0
        %2972 = vmatpush2.msra.mxu0 0.0
        %2973 = vmatprep.subr.mxu0 0.0
        %2974 = vmatpush2.msra.mxu0 0.0
        %2975 = vmatprep.subr.mxu0 0.0
        %2976 = vmatpush2.msra.mxu0 0.0
        %2977 = vmatprep.subr.mxu0 0.0
        %2978 = vmatpush2.msra.mxu0 0.0
        %2979 = vmatprep.subr.mxu0 0.0
        %2980 = vmatpush2.msra.mxu0 0.0
        %2981 = vmatprep.subr.mxu0 0.0
        %2982 = vmatpush2.msra.mxu0 0.0
        %2983 = vmatprep.subr.mxu0 0.0
        %2984 = vmatpush2.msra.mxu0 0.0
        %2985 = vmatprep.subr.mxu0 0.0
        %2986 = vmatpush2.msra.mxu0 0.0
        %2987 = vmatprep.subr.mxu0 0.0
        %2988 = vmatpush2.msra.mxu0 0.0
        %2989 = vmatprep.subr.mxu0 0.0
        %2990 = vmatpush2.msra.mxu0 0.0
        %2991 = vmatprep.subr.mxu0 0.0
        %2992 = vmatpush2.msra.mxu0 0.0
        %2993 = vmatprep.subr.mxu0 0.0
        %2994 = vmatpush2.msra.mxu0 0.0
        %2995 = vmatprep.subr.mxu0 0.0
        %2996 = vmatpush2.msra.mxu0 0.0
        %2997 = vmatprep.subr.mxu0 0.0
        %2998 = vmatpush2.msra.mxu0 0.0
        %2999 = vmatprep.subr.mxu0 0.0
        %3000 = vmatpush2.msra.mxu0 0.0
        %3001 = vmatprep.mubr.f32.mxu0 0.0
        %3002 = vmatmul.mubr.f32.gmra.mxu0 %v2914
        %v3003 = vpop.f32.mrf.mxu0
        %v3004 = vadd.f32 0.0, %v3003
        %v3005 = vpop.f32.mrf.mxu0
        %3006 = vmatprep.mubr.f32.mxu0 0.0
        %3007 = vmatmul.mubr.f32.gmra.mxu0 %v2917
        %v3008 = vpop.f32.mrf.mxu0
        %v3009 = vadd.f32 0.0, %v3008
        %v3010 = vpop.f32.mrf.mxu0
        %3011 = vmatprep.mubr.f32.mxu0 0.0
        %3012 = vmatmul.mubr.f32.gmra.mxu0 %v2920
        %v3013 = vpop.f32.mrf.mxu0
        %v3014 = vadd.f32 0.0, %v3013
        %v3015 = vpop.f32.mrf.mxu0
        %3016 = vmatprep.mubr.f32.mxu0 0.0
        %3017 = vmatmul.mubr.f32.gmra.mxu0 %v2923
        %v3018 = vpop.f32.mrf.mxu0
        %v3019 = vadd.f32 0.0, %v3018
        %v3020 = vpop.f32.mrf.mxu0
        %3021 = vmatprep.mubr.f32.mxu0 0.0
        %3022 = vmatmul.mubr.f32.gmra.mxu0 %v2926
        %v3023 = vpop.f32.mrf.mxu0
        %v3024 = vadd.f32 0.0, %v3023
        %v3025 = vpop.f32.mrf.mxu0
        %3026 = vmatprep.mubr.f32.mxu0 0.0
        %3027 = vmatmul.mubr.f32.gmra.mxu0 %v2929
        %v3028 = vpop.f32.mrf.mxu0
        %v3029 = vadd.f32 0.0, %v3028
        %v3030 = vpop.f32.mrf.mxu0
        %3031 = vmatprep.mubr.f32.mxu0 0.0
        %3032 = vmatmul.mubr.f32.gmra.mxu0 %v2932
        %v3033 = vpop.f32.mrf.mxu0
        %v3034 = vadd.f32 0.0, %v3033
        %v3035 = vpop.f32.mrf.mxu0
        %3036 = vmatprep.mubr.f32.mxu0 0.0
        %3037 = vmatmul.mubr.f32.gmra.mxu0 %v2935
        %v3038 = vpop.f32.mrf.mxu0
        %v3039 = vadd.f32 0.0, %v3038
        %v3040 = vpop.f32.mrf.mxu0
        %3041 = vdwg.mxu0
        %v3043 = vsel %vm265, %v1048, 0
        %v3046 = vsel %vm265, %v1124, 0
        %v3049 = vsel %vm265, %v1200, 0
        %v3052 = vsel %vm265, %v1276, 0
        %v3055 = vsel %vm265, %v1352, 0
        %v3058 = vsel %vm265, %v1428, 0
        %v3061 = vsel %vm265, %v1504, 0
        %v3064 = vsel %vm265, %v1580, 0
        %3066 = vmatprep.subr.mxu0 0.0
        %3067 = vmatpush1.msra.mxu0 0.0
        %3068 = vmatprep.subr.mxu0 0.0
        %3069 = vmatpush1.msra.mxu0 0.0
        %3070 = vmatprep.subr.mxu0 0.0
        %3071 = vmatpush1.msra.mxu0 0.0
        %3072 = vmatprep.subr.mxu0 0.0
        %3073 = vmatpush1.msra.mxu0 0.0
        %3074 = vmatprep.subr.mxu0 0.0
        %3075 = vmatpush1.msra.mxu0 0.0
        %3076 = vmatprep.subr.mxu0 0.0
        %3077 = vmatpush1.msra.mxu0 0.0
        %3078 = vmatprep.subr.mxu0 0.0
        %3079 = vmatpush1.msra.mxu0 0.0
        %3080 = vmatprep.subr.mxu0 0.0
        %3081 = vmatpush1.msra.mxu0 0.0
        %3082 = vmatprep.subr.mxu0 0.0
        %3083 = vmatpush1.msra.mxu0 0.0
        %3084 = vmatprep.subr.mxu0 0.0
        %3085 = vmatpush1.msra.mxu0 0.0
        %3086 = vmatprep.subr.mxu0 0.0
        %3087 = vmatpush1.msra.mxu0 0.0
        %3088 = vmatprep.subr.mxu0 0.0
        %3089 = vmatpush1.msra.mxu0 0.0
        %3090 = vmatprep.subr.mxu0 0.0
        %3091 = vmatpush1.msra.mxu0 0.0
        %3092 = vmatprep.subr.mxu0 0.0
        %3093 = vmatpush1.msra.mxu0 0.0
        %3094 = vmatprep.subr.mxu0 0.0
        %3095 = vmatpush1.msra.mxu0 0.0
        %3096 = vmatprep.subr.mxu0 0.0
        %3097 = vmatpush1.msra.mxu0 %v1583
        %3098 = vmatprep.subr.mxu0 0.0
        %3099 = vmatpush2.msra.mxu0 0.0
        %3100 = vmatprep.subr.mxu0 0.0
        %3101 = vmatpush2.msra.mxu0 0.0
        %3102 = vmatprep.subr.mxu0 0.0
        %3103 = vmatpush2.msra.mxu0 0.0
        %3104 = vmatprep.subr.mxu0 0.0
        %3105 = vmatpush2.msra.mxu0 0.0
        %3106 = vmatprep.subr.mxu0 0.0
        %3107 = vmatpush2.msra.mxu0 0.0
        %3108 = vmatprep.subr.mxu0 0.0
        %3109 = vmatpush2.msra.mxu0 0.0
        %3110 = vmatprep.subr.mxu0 0.0
        %3111 = vmatpush2.msra.mxu0 0.0
        %3112 = vmatprep.subr.mxu0 0.0
        %3113 = vmatpush2.msra.mxu0 0.0
        %3114 = vmatprep.subr.mxu0 0.0
        %3115 = vmatpush2.msra.mxu0 0.0
        %3116 = vmatprep.subr.mxu0 0.0
        %3117 = vmatpush2.msra.mxu0 0.0
        %3118 = vmatprep.subr.mxu0 0.0
        %3119 = vmatpush2.msra.mxu0 0.0
        %3120 = vmatprep.subr.mxu0 0.0
        %3121 = vmatpush2.msra.mxu0 0.0
        %3122 = vmatprep.subr.mxu0 0.0
        %3123 = vmatpush2.msra.mxu0 0.0
        %3124 = vmatprep.subr.mxu0 0.0
        %3125 = vmatpush2.msra.mxu0 0.0
        %3126 = vmatprep.subr.mxu0 0.0
        %3127 = vmatpush2.msra.mxu0 0.0
        %3128 = vmatprep.subr.mxu0 0.0
        %3129 = vmatpush2.msra.mxu0 0.0
        %3130 = vmatprep.mubr.f32.mxu0 0.0
        %3131 = vmatmul.mubr.f32.gmra.mxu0 %v3043
        %v3132 = vpop.f32.mrf.mxu0
        %v3133 = vadd.f32 %v3004, %v3132
        %v3134 = vpop.f32.mrf.mxu0
        %3135 = vmatprep.mubr.f32.mxu0 0.0
        %3136 = vmatmul.mubr.f32.gmra.mxu0 %v3046
        %v3137 = vpop.f32.mrf.mxu0
        %v3138 = vadd.f32 %v3009, %v3137
        %v3139 = vpop.f32.mrf.mxu0
        %3140 = vmatprep.mubr.f32.mxu0 0.0
        %3141 = vmatmul.mubr.f32.gmra.mxu0 %v3049
        %v3142 = vpop.f32.mrf.mxu0
        %v3143 = vadd.f32 %v3014, %v3142
        %v3144 = vpop.f32.mrf.mxu0
        %3145 = vmatprep.mubr.f32.mxu0 0.0
        %3146 = vmatmul.mubr.f32.gmra.mxu0 %v3052
        %v3147 = vpop.f32.mrf.mxu0
        %v3148 = vadd.f32 %v3019, %v3147
        %v3149 = vpop.f32.mrf.mxu0
        %3150 = vmatprep.mubr.f32.mxu0 0.0
        %3151 = vmatmul.mubr.f32.gmra.mxu0 %v3055
        %v3152 = vpop.f32.mrf.mxu0
        %v3153 = vadd.f32 %v3024, %v3152
        %v3154 = vpop.f32.mrf.mxu0
        %3155 = vmatprep.mubr.f32.mxu0 0.0
        %3156 = vmatmul.mubr.f32.gmra.mxu0 %v3058
        %v3157 = vpop.f32.mrf.mxu0
        %v3158 = vadd.f32 %v3029, %v3157
        %v3159 = vpop.f32.mrf.mxu0
        %3160 = vmatprep.mubr.f32.mxu0 0.0
        %3161 = vmatmul.mubr.f32.gmra.mxu0 %v3061
        %v3162 = vpop.f32.mrf.mxu0
        %v3163 = vadd.f32 %v3034, %v3162
        %v3164 = vpop.f32.mrf.mxu0
        %3165 = vmatprep.mubr.f32.mxu0 0.0
        %3166 = vmatmul.mubr.f32.gmra.mxu0 %v3064
        %v3167 = vpop.f32.mrf.mxu0
        %v3168 = vadd.f32 %v3039, %v3167
        %v3169 = vpop.f32.mrf.mxu0
        %3170 = vdwg.mxu0
        %v3171 = vld [vmem:[%s3] sm:$0x1]
        %v3173 = vlaneseq
        %v3174 = vshrl.u32 %v3173, 7
        %v3175 = vsub.s32 0, %v3174
        %v3176 = vrot.slane %v3171, %v3175
        %v3178 = vmul.f32 %v3133, %v3176
        %v3179 = vmul.f32 %v3138, %v3176
        %v3180 = vmul.f32 %v3143, %v3176
        %v3181 = vmul.f32 %v3148, %v3176
        %v3182 = vmul.f32 %v3153, %v3176
        %v3183 = vmul.f32 %v3158, %v3176
        %v3184 = vmul.f32 %v3163, %v3176
        %v3185 = vmul.f32 %v3168, %v3176
        %v3186 = vld [vmem:[%s4] sm:$0x1]
        %v3188 = vlaneseq
        %v3189 = vshrl.u32 %v3188, 7
        %v3190 = vsub.s32 0, %v3189
        %v3191 = vrot.slane %v3186, %v3190
        %v3193 = vadd.f32 %v3178, %v3191
        %v3194 = vadd.f32 %v3179, %v3191
        %v3195 = vadd.f32 %v3180, %v3191
        %v3196 = vadd.f32 %v3181, %v3191
        %v3197 = vadd.f32 %v3182, %v3191
        %v3198 = vadd.f32 %v3183, %v3191
        %v3199 = vadd.f32 %v3184, %v3191
        %v3200 = vadd.f32 %v3185, %v3191
        %v3201 = vmax.f32 %v3193, 0.0
        %v3202 = vmax.f32 %v3194, 0.0
        %v3203 = vmax.f32 %v3195, 0.0
        %v3204 = vmax.f32 %v3196, 0.0
        %v3205 = vmax.f32 %v3197, 0.0
        %v3206 = vmax.f32 %v3198, 0.0
        %v3207 = vmax.f32 %v3199, 0.0
        %v3208 = vmax.f32 %v3200, 0.0
        %v3209 = vcombine.low %v3201, %v3203
        %v3210 = vcombine.high %v3201, %v3203
        %v3212 = vunpack.c.l.s4 1983009808
        %v3213 = vunpack.c.0.s8 %v3212
        %v3214 = vlaneseq
        %v3215 = vshrl.u32 %v3214, 7
        %v3216 = vsub.s32 %v3213, %v3215
        %v3217 = vrot.slane %v3209, %v3216
        %v3219 = vunpack.c.l.s4 1983009808
        %v3220 = vunpack.c.0.s8 %v3219
        %v3221 = vlaneseq
        %v3222 = vshrl.u32 %v3221, 7
        %v3223 = vsub.s32 %v3220, %v3222
        %v3224 = vrot.slane %v3210, %v3223
        %v3225 = vcombine.low %v3202, %v3204
        %v3226 = vcombine.high %v3202, %v3204
        %v3228 = vunpack.c.l.s4 1983009808
        %v3229 = vunpack.c.0.s8 %v3228
        %v3230 = vlaneseq
        %v3231 = vshrl.u32 %v3230, 7
        %v3232 = vsub.s32 %v3229, %v3231
        %v3233 = vrot.slane %v3225, %v3232
        %v3235 = vunpack.c.l.s4 1983009808
        %v3236 = vunpack.c.0.s8 %v3235
        %v3237 = vlaneseq
        %v3238 = vshrl.u32 %v3237, 7
        %v3239 = vsub.s32 %v3236, %v3238
        %v3240 = vrot.slane %v3226, %v3239
        %v3241 = vcombine.low %v3205, %v3207
        %v3242 = vcombine.high %v3205, %v3207
        %v3244 = vunpack.c.l.s4 1983009808
        %v3245 = vunpack.c.0.s8 %v3244
        %v3246 = vlaneseq
        %v3247 = vshrl.u32 %v3246, 7
        %v3248 = vsub.s32 %v3245, %v3247
        %v3249 = vrot.slane %v3241, %v3248
        %v3251 = vunpack.c.l.s4 1983009808
        %v3252 = vunpack.c.0.s8 %v3251
        %v3253 = vlaneseq
        %v3254 = vshrl.u32 %v3253, 7
        %v3255 = vsub.s32 %v3252, %v3254
        %v3256 = vrot.slane %v3242, %v3255
        %v3257 = vcombine.low %v3206, %v3208
        %v3258 = vcombine.high %v3206, %v3208
        %v3260 = vunpack.c.l.s4 1983009808
        %v3261 = vunpack.c.0.s8 %v3260
        %v3262 = vlaneseq
        %v3263 = vshrl.u32 %v3262, 7
        %v3264 = vsub.s32 %v3261, %v3263
        %v3265 = vrot.slane %v3257, %v3264
        %v3267 = vunpack.c.l.s4 1983009808
        %v3268 = vunpack.c.0.s8 %v3267
        %v3269 = vlaneseq
        %v3270 = vshrl.u32 %v3269, 7
        %v3271 = vsub.s32 %v3268, %v3270
        %v3272 = vrot.slane %v3258, %v3271
        %v3273 = vcombine.low %v3217, %v3233
        %v3274 = vcombine.high %v3217, %v3233
        %v3276 = vunpack.c.l.s4 1934713408
        %v3277 = vunpack.c.0.s8 %v3276
        %v3278 = vlaneseq
        %v3279 = vshrl.u32 %v3278, 7
        %v3280 = vsub.s32 %v3277, %v3279
        %v3281 = vrot.slane %v3273, %v3280
        %v3283 = vunpack.c.l.s4 1934713408
        %v3284 = vunpack.c.0.s8 %v3283
        %v3285 = vlaneseq
        %v3286 = vshrl.u32 %v3285, 7
        %v3287 = vsub.s32 %v3284, %v3286
        %v3288 = vrot.slane %v3274, %v3287
        %v3289 = vcombine.low %v3224, %v3240
        %v3290 = vcombine.high %v3224, %v3240
        %v3292 = vunpack.c.l.s4 1934713408
        %v3293 = vunpack.c.0.s8 %v3292
        %v3294 = vlaneseq
        %v3295 = vshrl.u32 %v3294, 7
        %v3296 = vsub.s32 %v3293, %v3295
        %v3297 = vrot.slane %v3289, %v3296
        %v3299 = vunpack.c.l.s4 1934713408
        %v3300 = vunpack.c.0.s8 %v3299
        %v3301 = vlaneseq
        %v3302 = vshrl.u32 %v3301, 7
        %v3303 = vsub.s32 %v3300, %v3302
        %v3304 = vrot.slane %v3290, %v3303
        %v3305 = vcombine.low %v3249, %v3265
        %v3306 = vcombine.high %v3249, %v3265
        %v3308 = vunpack.c.l.s4 1934713408
        %v3309 = vunpack.c.0.s8 %v3308
        %v3310 = vlaneseq
        %v3311 = vshrl.u32 %v3310, 7
        %v3312 = vsub.s32 %v3309, %v3311
        %v3313 = vrot.slane %v3305, %v3312
        %v3315 = vunpack.c.l.s4 1934713408
        %v3316 = vunpack.c.0.s8 %v3315
        %v3317 = vlaneseq
        %v3318 = vshrl.u32 %v3317, 7
        %v3319 = vsub.s32 %v3316, %v3318
        %v3320 = vrot.slane %v3306, %v3319
        %v3321 = vcombine.low %v3256, %v3272
        %v3322 = vcombine.high %v3256, %v3272
        %v3324 = vunpack.c.l.s4 1934713408
        %v3325 = vunpack.c.0.s8 %v3324
        %v3326 = vlaneseq
        %v3327 = vshrl.u32 %v3326, 7
        %v3328 = vsub.s32 %v3325, %v3327
        %v3329 = vrot.slane %v3321, %v3328
        %v3331 = vunpack.c.l.s4 1934713408
        %v3332 = vunpack.c.0.s8 %v3331
        %v3333 = vlaneseq
        %v3334 = vshrl.u32 %v3333, 7
        %v3335 = vsub.s32 %v3332, %v3334
        %v3336 = vrot.slane %v3322, %v3335
        %v3337 = vcombine.low %v3281, %v3313
        %v3338 = vcombine.high %v3281, %v3313
        %v3339 = vcombine.low %v3288, %v3320
        %v3340 = vcombine.high %v3288, %v3320
        %v3341 = vcombine.low %v3297, %v3329
        %v3342 = vcombine.high %v3297, %v3329
        %v3343 = vcombine.low %v3304, %v3336
        %v3344 = vcombine.high %v3304, %v3336
        %vm3345 = vcmask 130048
        %3346 = vst.msk [vmem:[%s242] sm:$0xff] %vm3345, %v3337
        %3347 = vst.msk [vmem:[%s242 + $0x8] sm:$0xff] %vm3345, %v3338
        %3348 = vst.msk [vmem:[%s242 + $0x10] sm:$0xff] %vm3345, %v3339
        %3349 = vst.msk [vmem:[%s242 + $0x18] sm:$0xff] %vm3345, %v3340
        %3350 = vst.msk [vmem:[%s242 + $0x20] sm:$0xff] %vm3345, %v3341
        %3351 = vst.msk [vmem:[%s242 + $0x28] sm:$0xff] %vm3345, %v3342
        %3352 = vst.msk [vmem:[%s242 + $0x30] sm:$0xff] %vm3345, %v3343
        %3353 = vst.msk [vmem:[%s242 + $0x38] sm:$0xff] %vm3345, %v3344
        %s3354 = sand.u32 %s153, 1
        %s3355 = scalar_lea.sflag [#allocation3], %s3354
        %s3356 = sand.u32 %s153, 1
        %s3357 = smul.addr %s3356, 64
        %s3358 = scalar_lea.vmem [#allocation2], %s3357
        // Predicated region
        $region41: #{temporal_attention.3} parent=39 // pred_check
          %p3359 = pneg %p163
        $region42: #{temporal_attention.3} parent=39 // pred_check_branch
          %3361 = sbr.rel (%p3359) target = $region44
        $region43: #{temporal_attention.3} parent=39 // pred_region
          %s3363 = ssub.s32 1024, 1024
          %3364 = vsyncadd %s3355, %s3363
          %s3365 = smul.addr %s23, 16
          %s3366 = sadd.s32 %s24, %s3365
          %s3367 = smul.addr %s3366, 128
          %s3368 = scalar_lea.hbm %s5, %s3367
          %s3369 = sshll.u32 %s3358, 4
          %s3370 = int_to_ptr.vmem [resolvable:$true] %s3369
          %3375 = dma.vmem_to_hbm [thread:$0]  %s3370, 1024, %s3368, %s3355, 128, 256, 8
        $region44: #{temporal_attention.3} parent=39 // pred_fallthru
          _
      $region40: #{temporal_attention.3} parent=5 // pred_fallthru
        _
      %p3376 = scmp.le.s32.totalorder 2, %s14
      // Predicated region
      $region45: #{temporal_attention.3} parent=5 // pred_check
        %p3377 = pneg %p3376
      $region46: #{temporal_attention.3} parent=5 // pred_check_branch
        %3379 = sbr.rel (%p3377) target = $region48
      $region47: #{temporal_attention.3} parent=5 // pred_region
        %s3380 = ssub.s32 %s14, 2
        // Predicated region
        $region49: #{temporal_attention.3} parent=47 // pred_check
          %p3381 = pneg %p169
        $region50: #{temporal_attention.3} parent=47 // pred_check_branch
          %3383 = sbr.rel (%p3381) target = $region52
        $region51: #{temporal_attention.3} parent=47 // pred_region
          %s3384 = sand.u32 %s154, 1
          %s3385 = scalar_lea.sflag [#allocation3], %s3384
          %s3386 = sand.u32 %s154, 1
          %s3387 = smul.addr %s3386, 64
          %s3388 = scalar_lea.vmem [#allocation2], %s3387
          %3389 = dma.done %s3385, 1024
        $region52: #{temporal_attention.3} parent=47 // pred_fallthru
          _
      $region48: #{temporal_attention.3} parent=5 // pred_fallthru
        _
    $region6: #{temporal_attention.3} parent=1 // loop_footer
      %s18 = sadd.s32 1, %s14
    $region7: #{temporal_attention.3} parent=1 // loop_footer_branch
      %13 = sbr.rel target = $region3
    $region8: #{temporal_attention.3} parent=1 // loop_exit
      _
    %3390 = vsyncpa [#allocation3], 1
    %s3391 = scalar_lea.sflag [#allocation3], 1
    %3392 = vsyncpa %s3391, 1

</llo_original>
